<compile_context>
chip_gen: v5e
topology: v5e:2x2
jax: 0.10.0
libtpu: 0.0.40
codegen_flags: <defaults>
</compile_context>

<pallas_src>
import functools
import math

import jax
import jax.numpy as jnp
from jax import lax
from jax.experimental import pallas as pl
from jax.experimental.pallas import tpu as pltpu


def _conv_matmul_kernel(x_ref, w_ref, b_ref, o_ref, patch_ref, *, kh, kw,
                        h_out, w_out):
    """One (batch-tile, cout-tile) block of the convolution.

    x_ref:     (TB, H_win, W_win, C_in)  input window tile (compute dtype)
    w_ref:     (K, TN)                   K = kh*kw*C_in weight slab, this C_out tile
    b_ref:     (1, TN)                   f32 bias row for this C_out tile
    o_ref:     (TB*h_out*w_out, TN)      lane-dense output tile
    patch_ref: (TB*h_out*w_out, K)       persistent VMEM im2col slab
    """
    c_in = x_ref.shape[3]
    m = o_ref.shape[0]

    # Build the im2col patch slab only once per batch tile: `co` is the inner
    # ("arbitrary") grid axis, the x block index does not change across it and
    # the scratch persists, so the relayout work is paid once and reused for
    # every C_out tile.
    @pl.when(pl.program_id(1) == 0)
    def _build_patch():
        slabs = []
        for i in range(kh):
            for j in range(kw):
                sub = x_ref[:, i:i + h_out, j:j + w_out, :]
                slabs.append(sub.reshape(m, c_in))
        patch_ref[...] = (slabs[0] if len(slabs) == 1
                          else jnp.concatenate(slabs, axis=-1))

    # One unbroken MXU matmul with K = kh*kw*C_in, f32 accumulation
    # (no per-tap VPU accumulate chain).
    acc = jnp.dot(patch_ref[...], w_ref[...], preferred_element_type=jnp.float32)
    o_ref[...] = (acc + b_ref[...]).astype(o_ref.dtype)


@functools.partial(
    jax.jit,
    static_argnames=("stride", "padding", "add_bias", "compute_dtype",
                     "block_m_target"))
def ntk_conv2d_forward(x, weight, bias=None, *, stride=1, padding=0,
                       add_bias=True, compute_dtype=jnp.bfloat16,
                       block_m_target=1024):
    """Forward of NTKConv2d: conv2d(x, weight, bias, stride, padding). NCHW I/O."""
    n, c_in, h, w = x.shape
    c_out, c_in_w, kh, kw = weight.shape
    assert kh == kw, "square kernels only (matches module's kernel_size)"
    assert c_in_w == c_in, "channel mismatch"

    h_out = (h + 2 * padding - kh) // stride + 1
    w_out = (w + 2 * padding - kw) // stride + 1
    pixels = h_out * w_out
    k_dim = kh * kw * c_in

    # ---- chip heuristics (trace-time only) ----
    kind = ""
    try:
        kind = jax.devices()[0].device_kind.lower()
    except Exception:  # pragma: no cover - defensive
        pass
    is_v5e = ("v5e" in kind) or ("v5 lite" in kind) or ("v5litepod" in kind)
    is_v7 = "v7" in kind
    is_v6 = "v6" in kind

    # ---- layout glue (single HBM pass): NCHW -> NHWC, spatial pad, cast ----
    x_nhwc = jnp.transpose(x, (0, 2, 3, 1))
    x_pad = jnp.pad(x_nhwc,
                    ((0, 0), (padding, padding), (padding, padding), (0, 0)))
    x_pad = x_pad.astype(compute_dtype)

    # ---- stride handling: subsample in the wrapper's layout pass ----
    if stride == 1:
        x_in = x_pad
        eff_kh, eff_kw = kh, kw
    else:
        # Per-tap strided windows packed along channels: channel index of x_in
        # is (i*kw + j)*c_in + c, matching the weight's K ordering below. The
        # kernel then runs its fast stride-1 / "1x1" path with K = kh*kw*c_in.
        taps = []
        for i in range(kh):
            for j in range(kw):
                taps.append(lax.slice(
                    x_pad,
                    (0, i, j, 0),
                    (x_pad.shape[0], i + (h_out - 1) * stride + 1,
                     j + (w_out - 1) * stride + 1, c_in),
                    (1, stride, stride, 1)))
        x_in = jnp.concatenate(taps, axis=-1)   # (N, h_out, w_out, kh*kw*c_in)
        eff_kh, eff_kw = 1, 1

    c_in_eff = x_in.shape[3]
    h_win, w_win = x_in.shape[1], x_in.shape[2]

    # ---- batch (M) tiling: ~target rows / step, (tb*pixels) % 8 == 0 always ----
    m_target = 2 * block_m_target if is_v6 else block_m_target
    g = 8 // math.gcd(pixels, 8)                 # tb multiple of g => M % 8 == 0
    tb = max(1, m_target // max(pixels, 1))
    tb = max(g, (tb // g) * g)                   # round to multiple of g
    tb = min(tb, -(-n // g) * g)                 # don't pad batch past one tile
    n_pad = -(-n // tb) * tb
    if n_pad != n:
        x_in = jnp.pad(x_in, ((0, n_pad - n), (0, 0), (0, 0), (0, 0)))
    m_tile = tb * pixels
    # TODO(synk): no intra-image M tiling; extremely large h_out*w_out per image
    # would need an overlapping-window h grid axis (manual DMA), not done here.

    # ---- lane-dense C_out: pad to a multiple of 128 ----
    c_out_pad = -(-c_out // 128) * 128
    tn = 256 if (c_out_pad % 256 == 0 and not is_v5e) else 128

    # weight (C_out, C_in, KH, KW) -> (K, C_out_pad) with K ordered (i, j, c),
    # matching the kernel's tap-concat / wrapper tap-pack order.
    w_mat = jnp.transpose(weight, (2, 3, 1, 0)).reshape(k_dim, c_out)
    w_mat = jnp.pad(w_mat, ((0, 0), (0, c_out_pad - c_out))).astype(compute_dtype)

    # bias stays f32 and is added to the f32 accumulator.
    if add_bias and bias is not None:
        b_row = jnp.pad(bias.astype(jnp.float32).reshape(1, c_out),
                        ((0, 0), (0, c_out_pad - c_out)))
    else:
        b_row = jnp.zeros((1, c_out_pad), jnp.float32)

    grid = (n_pad // tb, c_out_pad // tn)

    # ---- VMEM budget & cost estimate ----
    itemsize = jnp.dtype(compute_dtype).itemsize
    out_itemsize = jnp.dtype(x.dtype).itemsize
    vmem_est = (2 * tb * h_win * w_win * c_in_eff * itemsize   # x tiles (dbl buf)
                + 2 * k_dim * tn * itemsize                    # weight tiles
                + 2 * m_tile * tn * out_itemsize               # output tiles
                + m_tile * tn * 4                              # f32 accumulator
                + 2 * m_tile * max(k_dim, 128) * itemsize      # patch scratch + temps
                + 4 * tn * 4)                                  # bias
    vmem_cap = (48 << 20) if is_v7 else (96 << 20)
    vmem_limit = int(min(max(2 * vmem_est, 32 << 20), vmem_cap))

    flops = 2 * n_pad * pixels * k_dim * c_out_pad
    bytes_accessed = (x_in.size * itemsize + w_mat.size * itemsize
                      + b_row.size * 4 + n_pad * pixels * c_out_pad * out_itemsize)

    kernel = functools.partial(_conv_matmul_kernel, kh=eff_kh, kw=eff_kw,
                               h_out=h_out, w_out=w_out)

    out_mat = pl.pallas_call(
        kernel,
        out_shape=jax.ShapeDtypeStruct((n_pad * pixels, c_out_pad), x.dtype),
        grid_spec=pltpu.PrefetchScalarGridSpec(
            num_scalar_prefetch=0,
            grid=grid,
            in_specs=[
                # padded NHWC input, full spatial/channel extent per batch tile
                pl.BlockSpec((tb, h_win, w_win, c_in_eff),
                             lambda b, co: (b, 0, 0, 0)),
                # (K, TN) weight slab for this C_out tile
                pl.BlockSpec((k_dim, tn), lambda b, co: (0, co)),
                # f32 bias row for this C_out tile
                pl.BlockSpec((1, tn), lambda b, co: (0, co)),
            ],
            out_specs=pl.BlockSpec((m_tile, tn), lambda b, co: (b, co)),
            scratch_shapes=[pltpu.VMEM((m_tile, k_dim), compute_dtype)],
        ),
        compiler_params=pltpu.CompilerParams(
            # co is "arbitrary": the im2col scratch is carried across it.
            dimension_semantics=("parallel", "arbitrary"),
            vmem_limit_bytes=vmem_limit),
        cost_estimate=pl.CostEstimate(flops=int(flops), transcendentals=0,
                                      bytes_accessed=int(bytes_accessed)),
    )(x_in, w_mat, b_row)

    # (N_pad*H_out*W_out, C_out_pad) -> NCHW, dropping batch/channel padding.
    out = out_mat.reshape(n_pad, h_out, w_out, c_out_pad)[:n, :, :, :c_out]
    # TODO(synk): if the consumer accepts NHWC (and/or bf16), drop this
    # transpose / cast — it is an extra HBM pass over the output.
    return jnp.transpose(out, (0, 3, 1, 2))


if __name__ == "__main__":
    # Module config (small, consistent with the PyTorch module's __init__).
    in_channels, out_channels, kernel_size = 4, 8, 3
    stride, padding = 1, 1
    batch, spatial = 2, 16

    key = jax.random.PRNGKey(0)
    k_x, k_w, k_b = jax.random.split(key, 3)

    # NTK init per module.init(zero_init=False): weight, bias ~ N(0, 1).
    x = jax.random.normal(k_x, (batch, in_channels, spatial, spatial), jnp.float32)
    weight = jax.random.normal(
        k_w, (out_channels, in_channels, kernel_size, kernel_size), jnp.float32)
    bias = jax.random.normal(k_b, (out_channels,), jnp.float32)

    out = ntk_conv2d_forward(x, weight, bias, stride=stride, padding=padding,
                             add_bias=True)
    out = jax.block_until_ready(out)

    # Reference with the same bf16-rounded operands (f32 accumulation) so the
    # comparison matches the kernel's MXU math.
    x_r = x.astype(jnp.bfloat16).astype(jnp.float32)
    w_r = weight.astype(jnp.bfloat16).astype(jnp.float32)
    ref = lax.conv_general_dilated(
        x_r, w_r, window_strides=(stride, stride),
        padding=[(padding, padding), (padding, padding)],
        dimension_numbers=("NCHW", "OIHW", "NCHW"),
    ) + bias.reshape(1, out_channels, 1, 1)

    assert out.shape == (batch, out_channels, spatial, spatial), out.shape
    err = float(jnp.max(jnp.abs(out - ref)))
    assert err < 1e-2, err

    # Also exercise the stride>1 / no-bias path (wrapper-side subsampling).
    out2 = ntk_conv2d_forward(x, weight, bias, stride=2, padding=1, add_bias=False)
    out2 = jax.block_until_ready(out2)
    ref2 = lax.conv_general_dilated(
        x_r, w_r, window_strides=(2, 2), padding=[(1, 1), (1, 1)],
        dimension_numbers=("NCHW", "OIHW", "NCHW"))
    assert out2.shape == ref2.shape, (out2.shape, ref2.shape)
    err2 = float(jnp.max(jnp.abs(out2 - ref2)))
    assert err2 < 1e-2, err2

    print("KERNEL_OK")
</pallas_src>

<mosaic_0001>
module attributes {stable_mosaic.version = 11 : i64} {
  func.func @_conv_matmul_kernel(%arg0: i32, %arg1: i32, %arg2: memref<2x18x18x4xbf16, #tpu.memory_space<vmem>>, %arg3: memref<36x128xbf16, #tpu.memory_space<vmem>>, %arg4: memref<1x128xf32, #tpu.memory_space<vmem>>, %arg5: memref<512x128xf32, #tpu.memory_space<vmem>>, %arg6: memref<512x36xbf16, #tpu.memory_space<vmem>>) attributes {dimension_semantics = [#tpu.dimension_semantics<parallel>, #tpu.dimension_semantics<arbitrary>], iteration_bounds = array<i64: 1, 1>, scalar_prefetch = 0 : i64, scratch_operands = 1 : i64, tpu.core_type = #tpu.core_type<tc>, window_params = [{transform_indices = @transform_0, window_bounds = array<i64: 2, 18, 18, 4>}, {transform_indices = @transform_1, window_bounds = array<i64: 36, 128>}, {transform_indices = @transform_2, window_bounds = array<i64: 1, 128>}, {transform_indices = @transform_3, window_bounds = array<i64: 512, 128>}]} {
    %c0_i32 = arith.constant 0 : i32
    %0 = arith.cmpi eq, %arg1, %c0_i32 : i32
    %1 = arith.extui %0 : i1 to i32
    %c0_i32_0 = arith.constant 0 : i32
    %2 = arith.cmpi ne, %1, %c0_i32_0 : i32
    scf.if %2 {
      %c0_8 = arith.constant 0 : index
      %c0_9 = arith.constant 0 : index
      %c0_10 = arith.constant 0 : index
      %c0_11 = arith.constant 0 : index
      %10 = vector.load %arg2[%c0_8, %c0_9, %c0_10, %c0_11] : memref<2x18x18x4xbf16, #tpu.memory_space<vmem>>, vector<2x16x16x4xbf16>
      %11 = vector.shape_cast %10 : vector<2x16x16x4xbf16> to vector<512x4xbf16>
      %c0_12 = arith.constant 0 : index
      %c0_13 = arith.constant 0 : index
      %c1 = arith.constant 1 : index
      %c0_14 = arith.constant 0 : index
      %12 = vector.load %arg2[%c0_12, %c0_13, %c1, %c0_14] : memref<2x18x18x4xbf16, #tpu.memory_space<vmem>>, vector<2x16x16x4xbf16>
      %13 = vector.shape_cast %12 : vector<2x16x16x4xbf16> to vector<512x4xbf16>
      %c0_15 = arith.constant 0 : index
      %c0_16 = arith.constant 0 : index
      %c2 = arith.constant 2 : index
      %c0_17 = arith.constant 0 : index
      %14 = vector.load %arg2[%c0_15, %c0_16, %c2, %c0_17] : memref<2x18x18x4xbf16, #tpu.memory_space<vmem>>, vector<2x16x16x4xbf16>
      %15 = vector.shape_cast %14 : vector<2x16x16x4xbf16> to vector<512x4xbf16>
      %c0_18 = arith.constant 0 : index
      %c1_19 = arith.constant 1 : index
      %c0_20 = arith.constant 0 : index
      %c0_21 = arith.constant 0 : index
      %16 = vector.load %arg2[%c0_18, %c1_19, %c0_20, %c0_21] : memref<2x18x18x4xbf16, #tpu.memory_space<vmem>>, vector<2x16x16x4xbf16>
      %17 = vector.shape_cast %16 : vector<2x16x16x4xbf16> to vector<512x4xbf16>
      %c0_22 = arith.constant 0 : index
      %c1_23 = arith.constant 1 : index
      %c1_24 = arith.constant 1 : index
      %c0_25 = arith.constant 0 : index
      %18 = vector.load %arg2[%c0_22, %c1_23, %c1_24, %c0_25] : memref<2x18x18x4xbf16, #tpu.memory_space<vmem>>, vector<2x16x16x4xbf16>
      %19 = vector.shape_cast %18 : vector<2x16x16x4xbf16> to vector<512x4xbf16>
      %c0_26 = arith.constant 0 : index
      %c1_27 = arith.constant 1 : index
      %c2_28 = arith.constant 2 : index
      %c0_29 = arith.constant 0 : index
      %20 = vector.load %arg2[%c0_26, %c1_27, %c2_28, %c0_29] : memref<2x18x18x4xbf16, #tpu.memory_space<vmem>>, vector<2x16x16x4xbf16>
      %21 = vector.shape_cast %20 : vector<2x16x16x4xbf16> to vector<512x4xbf16>
      %c0_30 = arith.constant 0 : index
      %c2_31 = arith.constant 2 : index
      %c0_32 = arith.constant 0 : index
      %c0_33 = arith.constant 0 : index
      %22 = vector.load %arg2[%c0_30, %c2_31, %c0_32, %c0_33] : memref<2x18x18x4xbf16, #tpu.memory_space<vmem>>, vector<2x16x16x4xbf16>
      %23 = vector.shape_cast %22 : vector<2x16x16x4xbf16> to vector<512x4xbf16>
      %c0_34 = arith.constant 0 : index
      %c2_35 = arith.constant 2 : index
      %c1_36 = arith.constant 1 : index
      %c0_37 = arith.constant 0 : index
      %24 = vector.load %arg2[%c0_34, %c2_35, %c1_36, %c0_37] : memref<2x18x18x4xbf16, #tpu.memory_space<vmem>>, vector<2x16x16x4xbf16>
      %25 = vector.shape_cast %24 : vector<2x16x16x4xbf16> to vector<512x4xbf16>
      %c0_38 = arith.constant 0 : index
      %c2_39 = arith.constant 2 : index
      %c2_40 = arith.constant 2 : index
      %c0_41 = arith.constant 0 : index
      %26 = vector.load %arg2[%c0_38, %c2_39, %c2_40, %c0_41] : memref<2x18x18x4xbf16, #tpu.memory_space<vmem>>, vector<2x16x16x4xbf16>
      %27 = vector.shape_cast %26 : vector<2x16x16x4xbf16> to vector<512x4xbf16>
      %28 = tpu.concatenate %11, %13, %15, %17, %19, %21, %23, %25, %27 in 1 : vector<512x4xbf16>, vector<512x4xbf16>, vector<512x4xbf16>, vector<512x4xbf16>, vector<512x4xbf16>, vector<512x4xbf16>, vector<512x4xbf16>, vector<512x4xbf16>, vector<512x4xbf16> -> vector<512x36xbf16>
      %c0_42 = arith.constant 0 : index
      %c0_43 = arith.constant 0 : index
      %29 = vector.load %arg6[%c0_42, %c0_43] : memref<512x36xbf16, #tpu.memory_space<vmem>>, vector<512x36xbf16>
      tpu.vector_store %arg6[%c0_42, %c0_43], %28 {strides = array<i32>} : memref<512x36xbf16, #tpu.memory_space<vmem>>, vector<512x36xbf16>,
    } else {
    }
    %c0 = arith.constant 0 : index
    %c0_1 = arith.constant 0 : index
    %3 = vector.load %arg6[%c0, %c0_1] : memref<512x36xbf16, #tpu.memory_space<vmem>>, vector<512x36xbf16>
    %c0_2 = arith.constant 0 : index
    %c0_3 = arith.constant 0 : index
    %4 = vector.load %arg3[%c0_2, %c0_3] : memref<36x128xbf16, #tpu.memory_space<vmem>>, vector<36x128xbf16>
    %cst = arith.constant dense<0.000000e+00> : vector<512x128xf32>
    %5 = tpu.matmul %3, %4, %cst {dimension_numbers = #tpu.dot_dimension_numbers<[1], [0], [0], [1], [0, 0, 1, 1], [], []>} : vector<512x36xbf16>, vector<36x128xbf16>, vector<512x128xf32> -> vector<512x128xf32>
    %c0_4 = arith.constant 0 : index
    %c0_5 = arith.constant 0 : index
    %6 = vector.load %arg4[%c0_4, %c0_5] : memref<1x128xf32, #tpu.memory_space<vmem>>, vector<1x128xf32>
    %7 = vector.broadcast %6 : vector<1x128xf32> to vector<512x128xf32>
    %8 = arith.addf %5, %7 : vector<512x128xf32>
    %c0_6 = arith.constant 0 : index
    %c0_7 = arith.constant 0 : index
    %9 = vector.load %arg5[%c0_6, %c0_7] : memref<512x128xf32, #tpu.memory_space<vmem>>, vector<512x128xf32>
    tpu.vector_store %arg5[%c0_6, %c0_7], %8 {strides = array<i32>} : memref<512x128xf32, #tpu.memory_space<vmem>>, vector<512x128xf32>,
    return
  }
  func.func @transform_0(%arg0: i32, %arg1: i32) -> (i32, i32, i32, i32) {
    %c0_i32 = arith.constant 0 : i32
    %c0_i32_0 = arith.constant 0 : i32
    %c0_i32_1 = arith.constant 0 : i32
    %c0_i32_2 = arith.constant 0 : i32
    return %arg0, %c0_i32, %c0_i32_0, %c0_i32_1 : i32, i32, i32, i32
  }
  func.func @transform_1(%arg0: i32, %arg1: i32) -> (i32, i32) {
    %c0_i32 = arith.constant 0 : i32
    %c0_i32_0 = arith.constant 0 : i32
    return %c0_i32, %arg1 : i32, i32
  }
  func.func @transform_2(%arg0: i32, %arg1: i32) -> (i32, i32) {
    %c0_i32 = arith.constant 0 : i32
    %c0_i32_0 = arith.constant 0 : i32
    return %c0_i32, %arg1 : i32, i32
  }
  func.func @transform_3(%arg0: i32, %arg1: i32) -> (i32, i32) {
    %c0_i32 = arith.constant 0 : i32
    return %arg0, %arg1 : i32, i32
  }
}

</mosaic_0001>

<llo_original>
// kernel: ntk_conv2d_forward.1
$region0: #{ntk_conv2d_forward.1}
  #allocation0 [shape = 'u32[]', space=smem, size = 0x4, offset = 0x4, fixed_abs, tag = 'smem constant byte address 0x4 - core index']
  #allocation1 [shape = 'u32[72,128]{1,0:T(1,128)}', space=vmem, size = 0x9000, scoped, tag = 'internal scratch']
  #allocation2 [shape = 'bf16[512,36]{1,0:T(8,128)(2,1)}', space=vmem, size = 0x20000, scoped, tag = 'scratch operand']
  %s0 = inlined_call_operand.vmem [shape: bf16[2,18,18,4], index: 0, kind: input, shape index: {}]
  %s1 = inlined_call_operand.vmem [shape: bf16[36,128], index: 1, kind: input, shape index: {}]
  %s2 = inlined_call_operand.vmem [shape: f32[1,128], index: 2, kind: input, shape index: {}]
  %s3 = inlined_call_operand.vmem [shape: f32[512,128], index: 3, kind: output, shape index: {}]
  %s4 = sld [smem:[#allocation0]]
  $region26: #{ntk_conv2d_forward.1} parent=0
    _
  %s6 = ssub.s32 1, %s4
  %s7 = scalar_select 0, %s6, %s4
  // Predicated region
  $region2: #{ntk_conv2d_forward.1} parent=0 // pred_check
    _
  $region3: #{ntk_conv2d_forward.1} parent=0 // pred_check_branch
    %9 = sbr.rel (0) target = $region5
  $region4: #{ntk_conv2d_forward.1} parent=0 // pred_region
    _
  $region5: #{ntk_conv2d_forward.1} parent=0 // pred_fallthru
    _
  // Predicated region
  $region6: #{ntk_conv2d_forward.1} parent=0 // pred_check
    _
  $region7: #{ntk_conv2d_forward.1} parent=0 // pred_check_branch
    %11 = sbr.rel (0) target = $region9
  $region8: #{ntk_conv2d_forward.1} parent=0 // pred_region
    _
  $region9: #{ntk_conv2d_forward.1} parent=0 // pred_fallthru
    _
  // Predicated region
  $region10: #{ntk_conv2d_forward.1} parent=0 // pred_check
    _
  $region11: #{ntk_conv2d_forward.1} parent=0 // pred_check_branch
    %13 = sbr.rel (0) target = $region13
  $region12: #{ntk_conv2d_forward.1} parent=0 // pred_region
    _
  $region13: #{ntk_conv2d_forward.1} parent=0 // pred_fallthru
    _
  %p15 = scmp.eq.s32.totalorder 0, 0
  // Predicated region
  $region14: #{ntk_conv2d_forward.1} parent=0 // pred_check
    %p16 = pneg %p15
  $region15: #{ntk_conv2d_forward.1} parent=0 // pred_check_branch
    %18 = sbr.rel (%p16) target = $region17
  $region16: #{ntk_conv2d_forward.1} parent=0 // pred_region
    %v19 = vld [vmem:[%s0] sm:$0xf]
    %v20 = vld [vmem:[%s0 + $0x4] sm:$0xf]
    %v21 = vld [vmem:[%s0 + $0xc] sm:$0xf]
    %v22 = vld [vmem:[%s0 + $0x10] sm:$0xf]
    %v23 = vld [vmem:[%s0 + $0x18] sm:$0xf]
    %v24 = vld [vmem:[%s0 + $0x1c] sm:$0xf]
    %v25 = vld [vmem:[%s0 + $0x24] sm:$0xf]
    %v26 = vld [vmem:[%s0 + $0x28] sm:$0xf]
    %v27 = vld [vmem:[%s0 + $0x30] sm:$0xf]
    %v28 = vld [vmem:[%s0 + $0x34] sm:$0xf]
    %v29 = vld [vmem:[%s0 + $0x3c] sm:$0xf]
    %v30 = vld [vmem:[%s0 + $0x40] sm:$0xf]
    %v31 = vld [vmem:[%s0 + $0x48] sm:$0xf]
    %v32 = vld [vmem:[%s0 + $0x4c] sm:$0xf]
    %v33 = vld [vmem:[%s0 + $0x54] sm:$0xf]
    %v34 = vld [vmem:[%s0 + $0x58] sm:$0xf]
    %v35 = vld [vmem:[%s0 + $0x60] sm:$0xf]
    %v36 = vld [vmem:[%s0 + $0x64] sm:$0xf]
    %v37 = vld [vmem:[%s0 + $0x6c] sm:$0xf]
    %v38 = vld [vmem:[%s0 + $0x70] sm:$0xf]
    %v39 = vld [vmem:[%s0 + $0x78] sm:$0xf]
    %v40 = vld [vmem:[%s0 + $0x7c] sm:$0xf]
    %v41 = vld [vmem:[%s0 + $0x84] sm:$0xf]
    %v42 = vld [vmem:[%s0 + $0x88] sm:$0xf]
    %v43 = vld [vmem:[%s0 + $0x90] sm:$0xf]
    %v44 = vld [vmem:[%s0 + $0x94] sm:$0xf]
    %v45 = vld [vmem:[%s0 + $0x9c] sm:$0xf]
    %v46 = vld [vmem:[%s0 + $0xa0] sm:$0xf]
    %v47 = vld [vmem:[%s0 + $0xa8] sm:$0xf]
    %v48 = vld [vmem:[%s0 + $0xac] sm:$0xf]
    %v49 = vld [vmem:[%s0 + $0xb4] sm:$0xf]
    %v50 = vld [vmem:[%s0 + $0xb8] sm:$0xf]
    %v51 = vld [vmem:[%s0 + $0xd8] sm:$0xf]
    %v52 = vld [vmem:[%s0 + $0xdc] sm:$0xf]
    %v53 = vld [vmem:[%s0 + $0xe4] sm:$0xf]
    %v54 = vld [vmem:[%s0 + $0xe8] sm:$0xf]
    %v55 = vld [vmem:[%s0 + $0xf0] sm:$0xf]
    %v56 = vld [vmem:[%s0 + $0xf4] sm:$0xf]
    %v57 = vld [vmem:[%s0 + $0xfc] sm:$0xf]
    %v58 = vld [vmem:[%s0 + $0x100] sm:$0xf]
    %v59 = vld [vmem:[%s0 + $0x108] sm:$0xf]
    %v60 = vld [vmem:[%s0 + $0x10c] sm:$0xf]
    %v61 = vld [vmem:[%s0 + $0x114] sm:$0xf]
    %v62 = vld [vmem:[%s0 + $0x118] sm:$0xf]
    %v63 = vld [vmem:[%s0 + $0x120] sm:$0xf]
    %v64 = vld [vmem:[%s0 + $0x124] sm:$0xf]
    %v65 = vld [vmem:[%s0 + $0x12c] sm:$0xf]
    %v66 = vld [vmem:[%s0 + $0x130] sm:$0xf]
    %v67 = vld [vmem:[%s0 + $0x138] sm:$0xf]
    %v68 = vld [vmem:[%s0 + $0x13c] sm:$0xf]
    %v69 = vld [vmem:[%s0 + $0x144] sm:$0xf]
    %v70 = vld [vmem:[%s0 + $0x148] sm:$0xf]
    %v71 = vld [vmem:[%s0 + $0x150] sm:$0xf]
    %v72 = vld [vmem:[%s0 + $0x154] sm:$0xf]
    %v73 = vld [vmem:[%s0 + $0x15c] sm:$0xf]
    %v74 = vld [vmem:[%s0 + $0x160] sm:$0xf]
    %v75 = vld [vmem:[%s0 + $0x168] sm:$0xf]
    %v76 = vld [vmem:[%s0 + $0x16c] sm:$0xf]
    %v77 = vld [vmem:[%s0 + $0x174] sm:$0xf]
    %v78 = vld [vmem:[%s0 + $0x178] sm:$0xf]
    %v79 = vld [vmem:[%s0 + $0x180] sm:$0xf]
    %v80 = vld [vmem:[%s0 + $0x184] sm:$0xf]
    %v81 = vld [vmem:[%s0 + $0x18c] sm:$0xf]
    %v82 = vld [vmem:[%s0 + $0x190] sm:$0xf]
    %v83 = vld [vmem:[%s0 + $0x8] sm:$0x1]
    %v84 = vld [vmem:[%s0 + $0x14] sm:$0x1]
    %v85 = vld [vmem:[%s0 + $0x20] sm:$0x1]
    %v86 = vld [vmem:[%s0 + $0x2c] sm:$0x1]
    %v87 = vld [vmem:[%s0 + $0x38] sm:$0x1]
    %v88 = vld [vmem:[%s0 + $0x44] sm:$0x1]
    %v89 = vld [vmem:[%s0 + $0x50] sm:$0x1]
    %v90 = vld [vmem:[%s0 + $0x5c] sm:$0x1]
    %v91 = vld [vmem:[%s0 + $0x68] sm:$0x1]
    %v92 = vld [vmem:[%s0 + $0x74] sm:$0x1]
    %v93 = vld [vmem:[%s0 + $0x80] sm:$0x1]
    %v94 = vld [vmem:[%s0 + $0x8c] sm:$0x1]
    %v95 = vld [vmem:[%s0 + $0x98] sm:$0x1]
    %v96 = vld [vmem:[%s0 + $0xa4] sm:$0x1]
    %v97 = vld [vmem:[%s0 + $0xb0] sm:$0x1]
    %v98 = vld [vmem:[%s0 + $0xbc] sm:$0x1]
    %v99 = vld [vmem:[%s0 + $0xe0] sm:$0x1]
    %v100 = vld [vmem:[%s0 + $0xec] sm:$0x1]
    %v101 = vld [vmem:[%s0 + $0xf8] sm:$0x1]
    %v102 = vld [vmem:[%s0 + $0x104] sm:$0x1]
    %v103 = vld [vmem:[%s0 + $0x110] sm:$0x1]
    %v104 = vld [vmem:[%s0 + $0x11c] sm:$0x1]
    %v105 = vld [vmem:[%s0 + $0x128] sm:$0x1]
    %v106 = vld [vmem:[%s0 + $0x134] sm:$0x1]
    %v107 = vld [vmem:[%s0 + $0x140] sm:$0x1]
    %v108 = vld [vmem:[%s0 + $0x14c] sm:$0x1]
    %v109 = vld [vmem:[%s0 + $0x158] sm:$0x1]
    %v110 = vld [vmem:[%s0 + $0x164] sm:$0x1]
    %v111 = vld [vmem:[%s0 + $0x170] sm:$0x1]
    %v112 = vld [vmem:[%s0 + $0x17c] sm:$0x1]
    %v113 = vld [vmem:[%s0 + $0x188] sm:$0x1]
    %v114 = vld [vmem:[%s0 + $0x194] sm:$0x1]
    %vm115 = vsmask.f32 3328
    %vm116 = vsmask.f32 7440
    %vm117 = vmor %vm115, %vm116
    %v119 = vshrl.u32 %v19, 16
    %v121 = vrot.slane %v119, 4
    %v122 = vshll.u32 %v19, 16
    %v124 = vrot.slane %v122, 5
    %v125 = vor.u32 %v121, %v124
    %v126 = vrot.slane %v125, 4
    %v128 = vshll.u32 %v20, 16
    %v130 = vrot.slane %v128, 5
    %v131 = vsel %vm117, %v126, %v130
    %v132 = vshrl.u32 %v20, 16
    %v134 = vrot.slane %v132, 4
    %v135 = vor.u32 %v134, %v130
    %v136 = vrot.slane %v135, 4
    %v138 = vshll.u32 %v83, 16
    %v140 = vrot.slane %v138, 5
    %v141 = vsel %vm117, %v136, %v140
    %v143 = vshrl.u32 %v21, 16
    %v145 = vrot.slane %v143, 4
    %v146 = vshll.u32 %v21, 16
    %v148 = vrot.slane %v146, 5
    %v149 = vor.u32 %v145, %v148
    %v150 = vrot.slane %v149, 4
    %v152 = vshll.u32 %v22, 16
    %v154 = vrot.slane %v152, 5
    %v155 = vsel %vm117, %v150, %v154
    %v156 = vshrl.u32 %v22, 16
    %v158 = vrot.slane %v156, 4
    %v159 = vor.u32 %v158, %v154
    %v160 = vrot.slane %v159, 4
    %v162 = vshll.u32 %v84, 16
    %v164 = vrot.slane %v162, 5
    %v165 = vsel %vm117, %v160, %v164
    %v167 = vshrl.u32 %v23, 16
    %v169 = vrot.slane %v167, 4
    %v170 = vshll.u32 %v23, 16
    %v172 = vrot.slane %v170, 5
    %v173 = vor.u32 %v169, %v172
    %v174 = vrot.slane %v173, 4
    %v176 = vshll.u32 %v24, 16
    %v178 = vrot.slane %v176, 5
    %v179 = vsel %vm117, %v174, %v178
    %v180 = vshrl.u32 %v24, 16
    %v182 = vrot.slane %v180, 4
    %v183 = vor.u32 %v182, %v178
    %v184 = vrot.slane %v183, 4
    %v186 = vshll.u32 %v85, 16
    %v188 = vrot.slane %v186, 5
    %v189 = vsel %vm117, %v184, %v188
    %v191 = vshrl.u32 %v25, 16
    %v193 = vrot.slane %v191, 4
    %v194 = vshll.u32 %v25, 16
    %v196 = vrot.slane %v194, 5
    %v197 = vor.u32 %v193, %v196
    %v198 = vrot.slane %v197, 4
    %v200 = vshll.u32 %v26, 16
    %v202 = vrot.slane %v200, 5
    %v203 = vsel %vm117, %v198, %v202
    %v204 = vshrl.u32 %v26, 16
    %v206 = vrot.slane %v204, 4
    %v207 = vor.u32 %v206, %v202
    %v208 = vrot.slane %v207, 4
    %v210 = vshll.u32 %v86, 16
    %v212 = vrot.slane %v210, 5
    %v213 = vsel %vm117, %v208, %v212
    %v215 = vshrl.u32 %v27, 16
    %v217 = vrot.slane %v215, 4
    %v218 = vshll.u32 %v27, 16
    %v220 = vrot.slane %v218, 5
    %v221 = vor.u32 %v217, %v220
    %v222 = vrot.slane %v221, 4
    %v224 = vshll.u32 %v28, 16
    %v226 = vrot.slane %v224, 5
    %v227 = vsel %vm117, %v222, %v226
    %v228 = vshrl.u32 %v28, 16
    %v230 = vrot.slane %v228, 4
    %v231 = vor.u32 %v230, %v226
    %v232 = vrot.slane %v231, 4
    %v234 = vshll.u32 %v87, 16
    %v236 = vrot.slane %v234, 5
    %v237 = vsel %vm117, %v232, %v236
    %v239 = vshrl.u32 %v29, 16
    %v241 = vrot.slane %v239, 4
    %v242 = vshll.u32 %v29, 16
    %v244 = vrot.slane %v242, 5
    %v245 = vor.u32 %v241, %v244
    %v246 = vrot.slane %v245, 4
    %v248 = vshll.u32 %v30, 16
    %v250 = vrot.slane %v248, 5
    %v251 = vsel %vm117, %v246, %v250
    %v252 = vshrl.u32 %v30, 16
    %v254 = vrot.slane %v252, 4
    %v255 = vor.u32 %v254, %v250
    %v256 = vrot.slane %v255, 4
    %v258 = vshll.u32 %v88, 16
    %v260 = vrot.slane %v258, 5
    %v261 = vsel %vm117, %v256, %v260
    %v263 = vshrl.u32 %v31, 16
    %v265 = vrot.slane %v263, 4
    %v266 = vshll.u32 %v31, 16
    %v268 = vrot.slane %v266, 5
    %v269 = vor.u32 %v265, %v268
    %v270 = vrot.slane %v269, 4
    %v272 = vshll.u32 %v32, 16
    %v274 = vrot.slane %v272, 5
    %v275 = vsel %vm117, %v270, %v274
    %v276 = vshrl.u32 %v32, 16
    %v278 = vrot.slane %v276, 4
    %v279 = vor.u32 %v278, %v274
    %v280 = vrot.slane %v279, 4
    %v282 = vshll.u32 %v89, 16
    %v284 = vrot.slane %v282, 5
    %v285 = vsel %vm117, %v280, %v284
    %v287 = vshrl.u32 %v33, 16
    %v289 = vrot.slane %v287, 4
    %v290 = vshll.u32 %v33, 16
    %v292 = vrot.slane %v290, 5
    %v293 = vor.u32 %v289, %v292
    %v294 = vrot.slane %v293, 4
    %v296 = vshll.u32 %v34, 16
    %v298 = vrot.slane %v296, 5
    %v299 = vsel %vm117, %v294, %v298
    %v300 = vshrl.u32 %v34, 16
    %v302 = vrot.slane %v300, 4
    %v303 = vor.u32 %v302, %v298
    %v304 = vrot.slane %v303, 4
    %v306 = vshll.u32 %v90, 16
    %v308 = vrot.slane %v306, 5
    %v309 = vsel %vm117, %v304, %v308
    %v311 = vshrl.u32 %v35, 16
    %v313 = vrot.slane %v311, 4
    %v314 = vshll.u32 %v35, 16
    %v316 = vrot.slane %v314, 5
    %v317 = vor.u32 %v313, %v316
    %v318 = vrot.slane %v317, 4
    %v320 = vshll.u32 %v36, 16
    %v322 = vrot.slane %v320, 5
    %v323 = vsel %vm117, %v318, %v322
    %v324 = vshrl.u32 %v36, 16
    %v326 = vrot.slane %v324, 4
    %v327 = vor.u32 %v326, %v322
    %v328 = vrot.slane %v327, 4
    %v330 = vshll.u32 %v91, 16
    %v332 = vrot.slane %v330, 5
    %v333 = vsel %vm117, %v328, %v332
    %v335 = vshrl.u32 %v37, 16
    %v337 = vrot.slane %v335, 4
    %v338 = vshll.u32 %v37, 16
    %v340 = vrot.slane %v338, 5
    %v341 = vor.u32 %v337, %v340
    %v342 = vrot.slane %v341, 4
    %v344 = vshll.u32 %v38, 16
    %v346 = vrot.slane %v344, 5
    %v347 = vsel %vm117, %v342, %v346
    %v348 = vshrl.u32 %v38, 16
    %v350 = vrot.slane %v348, 4
    %v351 = vor.u32 %v350, %v346
    %v352 = vrot.slane %v351, 4
    %v354 = vshll.u32 %v92, 16
    %v356 = vrot.slane %v354, 5
    %v357 = vsel %vm117, %v352, %v356
    %v359 = vshrl.u32 %v39, 16
    %v361 = vrot.slane %v359, 4
    %v362 = vshll.u32 %v39, 16
    %v364 = vrot.slane %v362, 5
    %v365 = vor.u32 %v361, %v364
    %v366 = vrot.slane %v365, 4
    %v368 = vshll.u32 %v40, 16
    %v370 = vrot.slane %v368, 5
    %v371 = vsel %vm117, %v366, %v370
    %v372 = vshrl.u32 %v40, 16
    %v374 = vrot.slane %v372, 4
    %v375 = vor.u32 %v374, %v370
    %v376 = vrot.slane %v375, 4
    %v378 = vshll.u32 %v93, 16
    %v380 = vrot.slane %v378, 5
    %v381 = vsel %vm117, %v376, %v380
    %v383 = vshrl.u32 %v41, 16
    %v385 = vrot.slane %v383, 4
    %v386 = vshll.u32 %v41, 16
    %v388 = vrot.slane %v386, 5
    %v389 = vor.u32 %v385, %v388
    %v390 = vrot.slane %v389, 4
    %v392 = vshll.u32 %v42, 16
    %v394 = vrot.slane %v392, 5
    %v395 = vsel %vm117, %v390, %v394
    %v396 = vshrl.u32 %v42, 16
    %v398 = vrot.slane %v396, 4
    %v399 = vor.u32 %v398, %v394
    %v400 = vrot.slane %v399, 4
    %v402 = vshll.u32 %v94, 16
    %v404 = vrot.slane %v402, 5
    %v405 = vsel %vm117, %v400, %v404
    %v407 = vshrl.u32 %v43, 16
    %v409 = vrot.slane %v407, 4
    %v410 = vshll.u32 %v43, 16
    %v412 = vrot.slane %v410, 5
    %v413 = vor.u32 %v409, %v412
    %v414 = vrot.slane %v413, 4
    %v416 = vshll.u32 %v44, 16
    %v418 = vrot.slane %v416, 5
    %v419 = vsel %vm117, %v414, %v418
    %v420 = vshrl.u32 %v44, 16
    %v422 = vrot.slane %v420, 4
    %v423 = vor.u32 %v422, %v418
    %v424 = vrot.slane %v423, 4
    %v426 = vshll.u32 %v95, 16
    %v428 = vrot.slane %v426, 5
    %v429 = vsel %vm117, %v424, %v428
    %v431 = vshrl.u32 %v45, 16
    %v433 = vrot.slane %v431, 4
    %v434 = vshll.u32 %v45, 16
    %v436 = vrot.slane %v434, 5
    %v437 = vor.u32 %v433, %v436
    %v438 = vrot.slane %v437, 4
    %v440 = vshll.u32 %v46, 16
    %v442 = vrot.slane %v440, 5
    %v443 = vsel %vm117, %v438, %v442
    %v444 = vshrl.u32 %v46, 16
    %v446 = vrot.slane %v444, 4
    %v447 = vor.u32 %v446, %v442
    %v448 = vrot.slane %v447, 4
    %v450 = vshll.u32 %v96, 16
    %v452 = vrot.slane %v450, 5
    %v453 = vsel %vm117, %v448, %v452
    %v455 = vshrl.u32 %v47, 16
    %v457 = vrot.slane %v455, 4
    %v458 = vshll.u32 %v47, 16
    %v460 = vrot.slane %v458, 5
    %v461 = vor.u32 %v457, %v460
    %v462 = vrot.slane %v461, 4
    %v464 = vshll.u32 %v48, 16
    %v466 = vrot.slane %v464, 5
    %v467 = vsel %vm117, %v462, %v466
    %v468 = vshrl.u32 %v48, 16
    %v470 = vrot.slane %v468, 4
    %v471 = vor.u32 %v470, %v466
    %v472 = vrot.slane %v471, 4
    %v474 = vshll.u32 %v97, 16
    %v476 = vrot.slane %v474, 5
    %v477 = vsel %vm117, %v472, %v476
    %v479 = vshrl.u32 %v49, 16
    %v481 = vrot.slane %v479, 4
    %v482 = vshll.u32 %v49, 16
    %v484 = vrot.slane %v482, 5
    %v485 = vor.u32 %v481, %v484
    %v486 = vrot.slane %v485, 4
    %v488 = vshll.u32 %v50, 16
    %v490 = vrot.slane %v488, 5
    %v491 = vsel %vm117, %v486, %v490
    %v492 = vshrl.u32 %v50, 16
    %v494 = vrot.slane %v492, 4
    %v495 = vor.u32 %v494, %v490
    %v496 = vrot.slane %v495, 4
    %v498 = vshll.u32 %v98, 16
    %v500 = vrot.slane %v498, 5
    %v501 = vsel %vm117, %v496, %v500
    %v503 = vshrl.u32 %v51, 16
    %v505 = vrot.slane %v503, 4
    %v506 = vshll.u32 %v51, 16
    %v508 = vrot.slane %v506, 5
    %v509 = vor.u32 %v505, %v508
    %v510 = vrot.slane %v509, 4
    %v512 = vshll.u32 %v52, 16
    %v514 = vrot.slane %v512, 5
    %v515 = vsel %vm117, %v510, %v514
    %v516 = vshrl.u32 %v52, 16
    %v518 = vrot.slane %v516, 4
    %v519 = vor.u32 %v518, %v514
    %v520 = vrot.slane %v519, 4
    %v522 = vshll.u32 %v99, 16
    %v524 = vrot.slane %v522, 5
    %v525 = vsel %vm117, %v520, %v524
    %v527 = vshrl.u32 %v53, 16
    %v529 = vrot.slane %v527, 4
    %v530 = vshll.u32 %v53, 16
    %v532 = vrot.slane %v530, 5
    %v533 = vor.u32 %v529, %v532
    %v534 = vrot.slane %v533, 4
    %v536 = vshll.u32 %v54, 16
    %v538 = vrot.slane %v536, 5
    %v539 = vsel %vm117, %v534, %v538
    %v540 = vshrl.u32 %v54, 16
    %v542 = vrot.slane %v540, 4
    %v543 = vor.u32 %v542, %v538
    %v544 = vrot.slane %v543, 4
    %v546 = vshll.u32 %v100, 16
    %v548 = vrot.slane %v546, 5
    %v549 = vsel %vm117, %v544, %v548
    %v551 = vshrl.u32 %v55, 16
    %v553 = vrot.slane %v551, 4
    %v554 = vshll.u32 %v55, 16
    %v556 = vrot.slane %v554, 5
    %v557 = vor.u32 %v553, %v556
    %v558 = vrot.slane %v557, 4
    %v560 = vshll.u32 %v56, 16
    %v562 = vrot.slane %v560, 5
    %v563 = vsel %vm117, %v558, %v562
    %v564 = vshrl.u32 %v56, 16
    %v566 = vrot.slane %v564, 4
    %v567 = vor.u32 %v566, %v562
    %v568 = vrot.slane %v567, 4
    %v570 = vshll.u32 %v101, 16
    %v572 = vrot.slane %v570, 5
    %v573 = vsel %vm117, %v568, %v572
    %v575 = vshrl.u32 %v57, 16
    %v577 = vrot.slane %v575, 4
    %v578 = vshll.u32 %v57, 16
    %v580 = vrot.slane %v578, 5
    %v581 = vor.u32 %v577, %v580
    %v582 = vrot.slane %v581, 4
    %v584 = vshll.u32 %v58, 16
    %v586 = vrot.slane %v584, 5
    %v587 = vsel %vm117, %v582, %v586
    %v588 = vshrl.u32 %v58, 16
    %v590 = vrot.slane %v588, 4
    %v591 = vor.u32 %v590, %v586
    %v592 = vrot.slane %v591, 4
    %v594 = vshll.u32 %v102, 16
    %v596 = vrot.slane %v594, 5
    %v597 = vsel %vm117, %v592, %v596
    %v599 = vshrl.u32 %v59, 16
    %v601 = vrot.slane %v599, 4
    %v602 = vshll.u32 %v59, 16
    %v604 = vrot.slane %v602, 5
    %v605 = vor.u32 %v601, %v604
    %v606 = vrot.slane %v605, 4
    %v608 = vshll.u32 %v60, 16
    %v610 = vrot.slane %v608, 5
    %v611 = vsel %vm117, %v606, %v610
    %v612 = vshrl.u32 %v60, 16
    %v614 = vrot.slane %v612, 4
    %v615 = vor.u32 %v614, %v610
    %v616 = vrot.slane %v615, 4
    %v618 = vshll.u32 %v103, 16
    %v620 = vrot.slane %v618, 5
    %v621 = vsel %vm117, %v616, %v620
    %v623 = vshrl.u32 %v61, 16
    %v625 = vrot.slane %v623, 4
    %v626 = vshll.u32 %v61, 16
    %v628 = vrot.slane %v626, 5
    %v629 = vor.u32 %v625, %v628
    %v630 = vrot.slane %v629, 4
    %v632 = vshll.u32 %v62, 16
    %v634 = vrot.slane %v632, 5
    %v635 = vsel %vm117, %v630, %v634
    %v636 = vshrl.u32 %v62, 16
    %v638 = vrot.slane %v636, 4
    %v639 = vor.u32 %v638, %v634
    %v640 = vrot.slane %v639, 4
    %v642 = vshll.u32 %v104, 16
    %v644 = vrot.slane %v642, 5
    %v645 = vsel %vm117, %v640, %v644
    %v647 = vshrl.u32 %v63, 16
    %v649 = vrot.slane %v647, 4
    %v650 = vshll.u32 %v63, 16
    %v652 = vrot.slane %v650, 5
    %v653 = vor.u32 %v649, %v652
    %v654 = vrot.slane %v653, 4
    %v656 = vshll.u32 %v64, 16
    %v658 = vrot.slane %v656, 5
    %v659 = vsel %vm117, %v654, %v658
    %v660 = vshrl.u32 %v64, 16
    %v662 = vrot.slane %v660, 4
    %v663 = vor.u32 %v662, %v658
    %v664 = vrot.slane %v663, 4
    %v666 = vshll.u32 %v105, 16
    %v668 = vrot.slane %v666, 5
    %v669 = vsel %vm117, %v664, %v668
    %v671 = vshrl.u32 %v65, 16
    %v673 = vrot.slane %v671, 4
    %v674 = vshll.u32 %v65, 16
    %v676 = vrot.slane %v674, 5
    %v677 = vor.u32 %v673, %v676
    %v678 = vrot.slane %v677, 4
    %v680 = vshll.u32 %v66, 16
    %v682 = vrot.slane %v680, 5
    %v683 = vsel %vm117, %v678, %v682
    %v684 = vshrl.u32 %v66, 16
    %v686 = vrot.slane %v684, 4
    %v687 = vor.u32 %v686, %v682
    %v688 = vrot.slane %v687, 4
    %v690 = vshll.u32 %v106, 16
    %v692 = vrot.slane %v690, 5
    %v693 = vsel %vm117, %v688, %v692
    %v695 = vshrl.u32 %v67, 16
    %v697 = vrot.slane %v695, 4
    %v698 = vshll.u32 %v67, 16
    %v700 = vrot.slane %v698, 5
    %v701 = vor.u32 %v697, %v700
    %v702 = vrot.slane %v701, 4
    %v704 = vshll.u32 %v68, 16
    %v706 = vrot.slane %v704, 5
    %v707 = vsel %vm117, %v702, %v706
    %v708 = vshrl.u32 %v68, 16
    %v710 = vrot.slane %v708, 4
    %v711 = vor.u32 %v710, %v706
    %v712 = vrot.slane %v711, 4
    %v714 = vshll.u32 %v107, 16
    %v716 = vrot.slane %v714, 5
    %v717 = vsel %vm117, %v712, %v716
    %v719 = vshrl.u32 %v69, 16
    %v721 = vrot.slane %v719, 4
    %v722 = vshll.u32 %v69, 16
    %v724 = vrot.slane %v722, 5
    %v725 = vor.u32 %v721, %v724
    %v726 = vrot.slane %v725, 4
    %v728 = vshll.u32 %v70, 16
    %v730 = vrot.slane %v728, 5
    %v731 = vsel %vm117, %v726, %v730
    %v732 = vshrl.u32 %v70, 16
    %v734 = vrot.slane %v732, 4
    %v735 = vor.u32 %v734, %v730
    %v736 = vrot.slane %v735, 4
    %v738 = vshll.u32 %v108, 16
    %v740 = vrot.slane %v738, 5
    %v741 = vsel %vm117, %v736, %v740
    %v743 = vshrl.u32 %v71, 16
    %v745 = vrot.slane %v743, 4
    %v746 = vshll.u32 %v71, 16
    %v748 = vrot.slane %v746, 5
    %v749 = vor.u32 %v745, %v748
    %v750 = vrot.slane %v749, 4
    %v752 = vshll.u32 %v72, 16
    %v754 = vrot.slane %v752, 5
    %v755 = vsel %vm117, %v750, %v754
    %v756 = vshrl.u32 %v72, 16
    %v758 = vrot.slane %v756, 4
    %v759 = vor.u32 %v758, %v754
    %v760 = vrot.slane %v759, 4
    %v762 = vshll.u32 %v109, 16
    %v764 = vrot.slane %v762, 5
    %v765 = vsel %vm117, %v760, %v764
    %v767 = vshrl.u32 %v73, 16
    %v769 = vrot.slane %v767, 4
    %v770 = vshll.u32 %v73, 16
    %v772 = vrot.slane %v770, 5
    %v773 = vor.u32 %v769, %v772
    %v774 = vrot.slane %v773, 4
    %v776 = vshll.u32 %v74, 16
    %v778 = vrot.slane %v776, 5
    %v779 = vsel %vm117, %v774, %v778
    %v780 = vshrl.u32 %v74, 16
    %v782 = vrot.slane %v780, 4
    %v783 = vor.u32 %v782, %v778
    %v784 = vrot.slane %v783, 4
    %v786 = vshll.u32 %v110, 16
    %v788 = vrot.slane %v786, 5
    %v789 = vsel %vm117, %v784, %v788
    %v791 = vshrl.u32 %v75, 16
    %v793 = vrot.slane %v791, 4
    %v794 = vshll.u32 %v75, 16
    %v796 = vrot.slane %v794, 5
    %v797 = vor.u32 %v793, %v796
    %v798 = vrot.slane %v797, 4
    %v800 = vshll.u32 %v76, 16
    %v802 = vrot.slane %v800, 5
    %v803 = vsel %vm117, %v798, %v802
    %v804 = vshrl.u32 %v76, 16
    %v806 = vrot.slane %v804, 4
    %v807 = vor.u32 %v806, %v802
    %v808 = vrot.slane %v807, 4
    %v810 = vshll.u32 %v111, 16
    %v812 = vrot.slane %v810, 5
    %v813 = vsel %vm117, %v808, %v812
    %v815 = vshrl.u32 %v77, 16
    %v817 = vrot.slane %v815, 4
    %v818 = vshll.u32 %v77, 16
    %v820 = vrot.slane %v818, 5
    %v821 = vor.u32 %v817, %v820
    %v822 = vrot.slane %v821, 4
    %v824 = vshll.u32 %v78, 16
    %v826 = vrot.slane %v824, 5
    %v827 = vsel %vm117, %v822, %v826
    %v828 = vshrl.u32 %v78, 16
    %v830 = vrot.slane %v828, 4
    %v831 = vor.u32 %v830, %v826
    %v832 = vrot.slane %v831, 4
    %v834 = vshll.u32 %v112, 16
    %v836 = vrot.slane %v834, 5
    %v837 = vsel %vm117, %v832, %v836
    %v839 = vshrl.u32 %v79, 16
    %v841 = vrot.slane %v839, 4
    %v842 = vshll.u32 %v79, 16
    %v844 = vrot.slane %v842, 5
    %v845 = vor.u32 %v841, %v844
    %v846 = vrot.slane %v845, 4
    %v848 = vshll.u32 %v80, 16
    %v850 = vrot.slane %v848, 5
    %v851 = vsel %vm117, %v846, %v850
    %v852 = vshrl.u32 %v80, 16
    %v854 = vrot.slane %v852, 4
    %v855 = vor.u32 %v854, %v850
    %v856 = vrot.slane %v855, 4
    %v858 = vshll.u32 %v113, 16
    %v860 = vrot.slane %v858, 5
    %v861 = vsel %vm117, %v856, %v860
    %v863 = vshrl.u32 %v81, 16
    %v865 = vrot.slane %v863, 4
    %v866 = vshll.u32 %v81, 16
    %v868 = vrot.slane %v866, 5
    %v869 = vor.u32 %v865, %v868
    %v870 = vrot.slane %v869, 4
    %v872 = vshll.u32 %v82, 16
    %v874 = vrot.slane %v872, 5
    %v875 = vsel %vm117, %v870, %v874
    %v876 = vshrl.u32 %v82, 16
    %v878 = vrot.slane %v876, 4
    %v879 = vor.u32 %v878, %v874
    %v880 = vrot.slane %v879, 4
    %v882 = vshll.u32 %v114, 16
    %v884 = vrot.slane %v882, 5
    %v885 = vsel %vm117, %v880, %v884
    %v886 = vld [vmem:[%s0] sm:$0xe]
    %v887 = vld [vmem:[%s0 + $0xc] sm:$0xe]
    %v888 = vld [vmem:[%s0 + $0x18] sm:$0xe]
    %v889 = vld [vmem:[%s0 + $0x24] sm:$0xe]
    %v890 = vld [vmem:[%s0 + $0x30] sm:$0xe]
    %v891 = vld [vmem:[%s0 + $0x3c] sm:$0xe]
    %v892 = vld [vmem:[%s0 + $0x48] sm:$0xe]
    %v893 = vld [vmem:[%s0 + $0x54] sm:$0xe]
    %v894 = vld [vmem:[%s0 + $0x60] sm:$0xe]
    %v895 = vld [vmem:[%s0 + $0x6c] sm:$0xe]
    %v896 = vld [vmem:[%s0 + $0x78] sm:$0xe]
    %v897 = vld [vmem:[%s0 + $0x84] sm:$0xe]
    %v898 = vld [vmem:[%s0 + $0x90] sm:$0xe]
    %v899 = vld [vmem:[%s0 + $0x9c] sm:$0xe]
    %v900 = vld [vmem:[%s0 + $0xa8] sm:$0xe]
    %v901 = vld [vmem:[%s0 + $0xb4] sm:$0xe]
    %v902 = vld [vmem:[%s0 + $0xd8] sm:$0xe]
    %v903 = vld [vmem:[%s0 + $0xe4] sm:$0xe]
    %v904 = vld [vmem:[%s0 + $0xf0] sm:$0xe]
    %v905 = vld [vmem:[%s0 + $0xfc] sm:$0xe]
    %v906 = vld [vmem:[%s0 + $0x108] sm:$0xe]
    %v907 = vld [vmem:[%s0 + $0x114] sm:$0xe]
    %v908 = vld [vmem:[%s0 + $0x120] sm:$0xe]
    %v909 = vld [vmem:[%s0 + $0x12c] sm:$0xe]
    %v910 = vld [vmem:[%s0 + $0x138] sm:$0xe]
    %v911 = vld [vmem:[%s0 + $0x144] sm:$0xe]
    %v912 = vld [vmem:[%s0 + $0x150] sm:$0xe]
    %v913 = vld [vmem:[%s0 + $0x15c] sm:$0xe]
    %v914 = vld [vmem:[%s0 + $0x168] sm:$0xe]
    %v915 = vld [vmem:[%s0 + $0x174] sm:$0xe]
    %v916 = vld [vmem:[%s0 + $0x180] sm:$0xe]
    %v917 = vld [vmem:[%s0 + $0x18c] sm:$0xe]
    %vm1014 = vcmask 1042432
    %vm1015 = vcmask 1046532
    %vm1016 = vmor %vm1014, %vm1015
    %v1017 = vrot.slane %v886, 5
    %v1018 = vrot.slane %v1017, 4
    %v1019 = vrot.slane %v20, 5
    %v1020 = vsel %vm1016, %v1018, %v1019
    %v1021 = vrot.slane %v1019, 4
    %v1022 = vrot.slane %v83, 5
    %v1023 = vsel %vm1016, %v1021, %v1022
    %v1024 = vrot.slane %v887, 5
    %v1025 = vrot.slane %v1024, 4
    %v1026 = vrot.slane %v22, 5
    %v1027 = vsel %vm1016, %v1025, %v1026
    %v1028 = vrot.slane %v1026, 4
    %v1029 = vrot.slane %v84, 5
    %v1030 = vsel %vm1016, %v1028, %v1029
    %v1031 = vrot.slane %v888, 5
    %v1032 = vrot.slane %v1031, 4
    %v1033 = vrot.slane %v24, 5
    %v1034 = vsel %vm1016, %v1032, %v1033
    %v1035 = vrot.slane %v1033, 4
    %v1036 = vrot.slane %v85, 5
    %v1037 = vsel %vm1016, %v1035, %v1036
    %v1038 = vrot.slane %v889, 5
    %v1039 = vrot.slane %v1038, 4
    %v1040 = vrot.slane %v26, 5
    %v1041 = vsel %vm1016, %v1039, %v1040
    %v1042 = vrot.slane %v1040, 4
    %v1043 = vrot.slane %v86, 5
    %v1044 = vsel %vm1016, %v1042, %v1043
    %v1045 = vrot.slane %v890, 5
    %v1046 = vrot.slane %v1045, 4
    %v1047 = vrot.slane %v28, 5
    %v1048 = vsel %vm1016, %v1046, %v1047
    %v1049 = vrot.slane %v1047, 4
    %v1050 = vrot.slane %v87, 5
    %v1051 = vsel %vm1016, %v1049, %v1050
    %v1052 = vrot.slane %v891, 5
    %v1053 = vrot.slane %v1052, 4
    %v1054 = vrot.slane %v30, 5
    %v1055 = vsel %vm1016, %v1053, %v1054
    %v1056 = vrot.slane %v1054, 4
    %v1057 = vrot.slane %v88, 5
    %v1058 = vsel %vm1016, %v1056, %v1057
    %v1059 = vrot.slane %v892, 5
    %v1060 = vrot.slane %v1059, 4
    %v1061 = vrot.slane %v32, 5
    %v1062 = vsel %vm1016, %v1060, %v1061
    %v1063 = vrot.slane %v1061, 4
    %v1064 = vrot.slane %v89, 5
    %v1065 = vsel %vm1016, %v1063, %v1064
    %v1066 = vrot.slane %v893, 5
    %v1067 = vrot.slane %v1066, 4
    %v1068 = vrot.slane %v34, 5
    %v1069 = vsel %vm1016, %v1067, %v1068
    %v1070 = vrot.slane %v1068, 4
    %v1071 = vrot.slane %v90, 5
    %v1072 = vsel %vm1016, %v1070, %v1071
    %v1073 = vrot.slane %v894, 5
    %v1074 = vrot.slane %v1073, 4
    %v1075 = vrot.slane %v36, 5
    %v1076 = vsel %vm1016, %v1074, %v1075
    %v1077 = vrot.slane %v1075, 4
    %v1078 = vrot.slane %v91, 5
    %v1079 = vsel %vm1016, %v1077, %v1078
    %v1080 = vrot.slane %v895, 5
    %v1081 = vrot.slane %v1080, 4
    %v1082 = vrot.slane %v38, 5
    %v1083 = vsel %vm1016, %v1081, %v1082
    %v1084 = vrot.slane %v1082, 4
    %v1085 = vrot.slane %v92, 5
    %v1086 = vsel %vm1016, %v1084, %v1085
    %v1087 = vrot.slane %v896, 5
    %v1088 = vrot.slane %v1087, 4
    %v1089 = vrot.slane %v40, 5
    %v1090 = vsel %vm1016, %v1088, %v1089
    %v1091 = vrot.slane %v1089, 4
    %v1092 = vrot.slane %v93, 5
    %v1093 = vsel %vm1016, %v1091, %v1092
    %v1094 = vrot.slane %v897, 5
    %v1095 = vrot.slane %v1094, 4
    %v1096 = vrot.slane %v42, 5
    %v1097 = vsel %vm1016, %v1095, %v1096
    %v1098 = vrot.slane %v1096, 4
    %v1099 = vrot.slane %v94, 5
    %v1100 = vsel %vm1016, %v1098, %v1099
    %v1101 = vrot.slane %v898, 5
    %v1102 = vrot.slane %v1101, 4
    %v1103 = vrot.slane %v44, 5
    %v1104 = vsel %vm1016, %v1102, %v1103
    %v1105 = vrot.slane %v1103, 4
    %v1106 = vrot.slane %v95, 5
    %v1107 = vsel %vm1016, %v1105, %v1106
    %v1108 = vrot.slane %v899, 5
    %v1109 = vrot.slane %v1108, 4
    %v1110 = vrot.slane %v46, 5
    %v1111 = vsel %vm1016, %v1109, %v1110
    %v1112 = vrot.slane %v1110, 4
    %v1113 = vrot.slane %v96, 5
    %v1114 = vsel %vm1016, %v1112, %v1113
    %v1115 = vrot.slane %v900, 5
    %v1116 = vrot.slane %v1115, 4
    %v1117 = vrot.slane %v48, 5
    %v1118 = vsel %vm1016, %v1116, %v1117
    %v1119 = vrot.slane %v1117, 4
    %v1120 = vrot.slane %v97, 5
    %v1121 = vsel %vm1016, %v1119, %v1120
    %v1122 = vrot.slane %v901, 5
    %v1123 = vrot.slane %v1122, 4
    %v1124 = vrot.slane %v50, 5
    %v1125 = vsel %vm1016, %v1123, %v1124
    %v1126 = vrot.slane %v1124, 4
    %v1127 = vrot.slane %v98, 5
    %v1128 = vsel %vm1016, %v1126, %v1127
    %v1129 = vrot.slane %v902, 5
    %v1130 = vrot.slane %v1129, 4
    %v1131 = vrot.slane %v52, 5
    %v1132 = vsel %vm1016, %v1130, %v1131
    %v1133 = vrot.slane %v1131, 4
    %v1134 = vrot.slane %v99, 5
    %v1135 = vsel %vm1016, %v1133, %v1134
    %v1136 = vrot.slane %v903, 5
    %v1137 = vrot.slane %v1136, 4
    %v1138 = vrot.slane %v54, 5
    %v1139 = vsel %vm1016, %v1137, %v1138
    %v1140 = vrot.slane %v1138, 4
    %v1141 = vrot.slane %v100, 5
    %v1142 = vsel %vm1016, %v1140, %v1141
    %v1143 = vrot.slane %v904, 5
    %v1144 = vrot.slane %v1143, 4
    %v1145 = vrot.slane %v56, 5
    %v1146 = vsel %vm1016, %v1144, %v1145
    %v1147 = vrot.slane %v1145, 4
    %v1148 = vrot.slane %v101, 5
    %v1149 = vsel %vm1016, %v1147, %v1148
    %v1150 = vrot.slane %v905, 5
    %v1151 = vrot.slane %v1150, 4
    %v1152 = vrot.slane %v58, 5
    %v1153 = vsel %vm1016, %v1151, %v1152
    %v1154 = vrot.slane %v1152, 4
    %v1155 = vrot.slane %v102, 5
    %v1156 = vsel %vm1016, %v1154, %v1155
    %v1157 = vrot.slane %v906, 5
    %v1158 = vrot.slane %v1157, 4
    %v1159 = vrot.slane %v60, 5
    %v1160 = vsel %vm1016, %v1158, %v1159
    %v1161 = vrot.slane %v1159, 4
    %v1162 = vrot.slane %v103, 5
    %v1163 = vsel %vm1016, %v1161, %v1162
    %v1164 = vrot.slane %v907, 5
    %v1165 = vrot.slane %v1164, 4
    %v1166 = vrot.slane %v62, 5
    %v1167 = vsel %vm1016, %v1165, %v1166
    %v1168 = vrot.slane %v1166, 4
    %v1169 = vrot.slane %v104, 5
    %v1170 = vsel %vm1016, %v1168, %v1169
    %v1171 = vrot.slane %v908, 5
    %v1172 = vrot.slane %v1171, 4
    %v1173 = vrot.slane %v64, 5
    %v1174 = vsel %vm1016, %v1172, %v1173
    %v1175 = vrot.slane %v1173, 4
    %v1176 = vrot.slane %v105, 5
    %v1177 = vsel %vm1016, %v1175, %v1176
    %v1178 = vrot.slane %v909, 5
    %v1179 = vrot.slane %v1178, 4
    %v1180 = vrot.slane %v66, 5
    %v1181 = vsel %vm1016, %v1179, %v1180
    %v1182 = vrot.slane %v1180, 4
    %v1183 = vrot.slane %v106, 5
    %v1184 = vsel %vm1016, %v1182, %v1183
    %v1185 = vrot.slane %v910, 5
    %v1186 = vrot.slane %v1185, 4
    %v1187 = vrot.slane %v68, 5
    %v1188 = vsel %vm1016, %v1186, %v1187
    %v1189 = vrot.slane %v1187, 4
    %v1190 = vrot.slane %v107, 5
    %v1191 = vsel %vm1016, %v1189, %v1190
    %v1192 = vrot.slane %v911, 5
    %v1193 = vrot.slane %v1192, 4
    %v1194 = vrot.slane %v70, 5
    %v1195 = vsel %vm1016, %v1193, %v1194
    %v1196 = vrot.slane %v1194, 4
    %v1197 = vrot.slane %v108, 5
    %v1198 = vsel %vm1016, %v1196, %v1197
    %v1199 = vrot.slane %v912, 5
    %v1200 = vrot.slane %v1199, 4
    %v1201 = vrot.slane %v72, 5
    %v1202 = vsel %vm1016, %v1200, %v1201
    %v1203 = vrot.slane %v1201, 4
    %v1204 = vrot.slane %v109, 5
    %v1205 = vsel %vm1016, %v1203, %v1204
    %v1206 = vrot.slane %v913, 5
    %v1207 = vrot.slane %v1206, 4
    %v1208 = vrot.slane %v74, 5
    %v1209 = vsel %vm1016, %v1207, %v1208
    %v1210 = vrot.slane %v1208, 4
    %v1211 = vrot.slane %v110, 5
    %v1212 = vsel %vm1016, %v1210, %v1211
    %v1213 = vrot.slane %v914, 5
    %v1214 = vrot.slane %v1213, 4
    %v1215 = vrot.slane %v76, 5
    %v1216 = vsel %vm1016, %v1214, %v1215
    %v1217 = vrot.slane %v1215, 4
    %v1218 = vrot.slane %v111, 5
    %v1219 = vsel %vm1016, %v1217, %v1218
    %v1220 = vrot.slane %v915, 5
    %v1221 = vrot.slane %v1220, 4
    %v1222 = vrot.slane %v78, 5
    %v1223 = vsel %vm1016, %v1221, %v1222
    %v1224 = vrot.slane %v1222, 4
    %v1225 = vrot.slane %v112, 5
    %v1226 = vsel %vm1016, %v1224, %v1225
    %v1227 = vrot.slane %v916, 5
    %v1228 = vrot.slane %v1227, 4
    %v1229 = vrot.slane %v80, 5
    %v1230 = vsel %vm1016, %v1228, %v1229
    %v1231 = vrot.slane %v1229, 4
    %v1232 = vrot.slane %v113, 5
    %v1233 = vsel %vm1016, %v1231, %v1232
    %v1234 = vrot.slane %v917, 5
    %v1235 = vrot.slane %v1234, 4
    %v1236 = vrot.slane %v82, 5
    %v1237 = vsel %vm1016, %v1235, %v1236
    %v1238 = vrot.slane %v1236, 4
    %v1239 = vrot.slane %v114, 5
    %v1240 = vsel %vm1016, %v1238, %v1239
    %s1241 = scalar_lea.vmem %s0, 12
    %v1242 = vld [vmem:[%s1241] sm:$0xf]
    %v1243 = vld [vmem:[%s1241 + $0x4] sm:$0xf]
    %v1244 = vld [vmem:[%s1241 + $0xc] sm:$0xf]
    %v1245 = vld [vmem:[%s1241 + $0x10] sm:$0xf]
    %v1246 = vld [vmem:[%s1241 + $0x18] sm:$0xf]
    %v1247 = vld [vmem:[%s1241 + $0x1c] sm:$0xf]
    %v1248 = vld [vmem:[%s1241 + $0x24] sm:$0xf]
    %v1249 = vld [vmem:[%s1241 + $0x28] sm:$0xf]
    %v1250 = vld [vmem:[%s1241 + $0x30] sm:$0xf]
    %v1251 = vld [vmem:[%s1241 + $0x34] sm:$0xf]
    %v1252 = vld [vmem:[%s1241 + $0x3c] sm:$0xf]
    %v1253 = vld [vmem:[%s1241 + $0x40] sm:$0xf]
    %v1254 = vld [vmem:[%s1241 + $0x48] sm:$0xf]
    %v1255 = vld [vmem:[%s1241 + $0x4c] sm:$0xf]
    %v1256 = vld [vmem:[%s1241 + $0x54] sm:$0xf]
    %v1257 = vld [vmem:[%s1241 + $0x58] sm:$0xf]
    %v1258 = vld [vmem:[%s1241 + $0x60] sm:$0xf]
    %v1259 = vld [vmem:[%s1241 + $0x64] sm:$0xf]
    %v1260 = vld [vmem:[%s1241 + $0x6c] sm:$0xf]
    %v1261 = vld [vmem:[%s1241 + $0x70] sm:$0xf]
    %v1262 = vld [vmem:[%s1241 + $0x78] sm:$0xf]
    %v1263 = vld [vmem:[%s1241 + $0x7c] sm:$0xf]
    %v1264 = vld [vmem:[%s1241 + $0x84] sm:$0xf]
    %v1265 = vld [vmem:[%s1241 + $0x88] sm:$0xf]
    %v1266 = vld [vmem:[%s1241 + $0x90] sm:$0xf]
    %v1267 = vld [vmem:[%s1241 + $0x94] sm:$0xf]
    %v1268 = vld [vmem:[%s1241 + $0x9c] sm:$0xf]
    %v1269 = vld [vmem:[%s1241 + $0xa0] sm:$0xf]
    %v1270 = vld [vmem:[%s1241 + $0xa8] sm:$0xf]
    %v1271 = vld [vmem:[%s1241 + $0xac] sm:$0xf]
    %v1272 = vld [vmem:[%s1241 + $0xb4] sm:$0xf]
    %v1273 = vld [vmem:[%s1241 + $0xb8] sm:$0xf]
    %v1274 = vld [vmem:[%s1241 + $0xd8] sm:$0xf]
    %v1275 = vld [vmem:[%s1241 + $0xdc] sm:$0xf]
    %v1276 = vld [vmem:[%s1241 + $0xe4] sm:$0xf]
    %v1277 = vld [vmem:[%s1241 + $0xe8] sm:$0xf]
    %v1278 = vld [vmem:[%s1241 + $0xf0] sm:$0xf]
    %v1279 = vld [vmem:[%s1241 + $0xf4] sm:$0xf]
    %v1280 = vld [vmem:[%s1241 + $0xfc] sm:$0xf]
    %v1281 = vld [vmem:[%s1241 + $0x100] sm:$0xf]
    %v1282 = vld [vmem:[%s1241 + $0x108] sm:$0xf]
    %v1283 = vld [vmem:[%s1241 + $0x10c] sm:$0xf]
    %v1284 = vld [vmem:[%s1241 + $0x114] sm:$0xf]
    %v1285 = vld [vmem:[%s1241 + $0x118] sm:$0xf]
    %v1286 = vld [vmem:[%s1241 + $0x120] sm:$0xf]
    %v1287 = vld [vmem:[%s1241 + $0x124] sm:$0xf]
    %v1288 = vld [vmem:[%s1241 + $0x12c] sm:$0xf]
    %v1289 = vld [vmem:[%s1241 + $0x130] sm:$0xf]
    %v1290 = vld [vmem:[%s1241 + $0x138] sm:$0xf]
    %v1291 = vld [vmem:[%s1241 + $0x13c] sm:$0xf]
    %v1292 = vld [vmem:[%s1241 + $0x144] sm:$0xf]
    %v1293 = vld [vmem:[%s1241 + $0x148] sm:$0xf]
    %v1294 = vld [vmem:[%s1241 + $0x150] sm:$0xf]
    %v1295 = vld [vmem:[%s1241 + $0x154] sm:$0xf]
    %v1296 = vld [vmem:[%s1241 + $0x15c] sm:$0xf]
    %v1297 = vld [vmem:[%s1241 + $0x160] sm:$0xf]
    %v1298 = vld [vmem:[%s1241 + $0x168] sm:$0xf]
    %v1299 = vld [vmem:[%s1241 + $0x16c] sm:$0xf]
    %v1300 = vld [vmem:[%s1241 + $0x174] sm:$0xf]
    %v1301 = vld [vmem:[%s1241 + $0x178] sm:$0xf]
    %v1302 = vld [vmem:[%s1241 + $0x180] sm:$0xf]
    %v1303 = vld [vmem:[%s1241 + $0x184] sm:$0xf]
    %v1304 = vld [vmem:[%s1241 + $0x18c] sm:$0xf]
    %v1305 = vld [vmem:[%s1241 + $0x190] sm:$0xf]
    %v1306 = vld [vmem:[%s1241 + $0x8] sm:$0x1]
    %v1307 = vld [vmem:[%s1241 + $0x14] sm:$0x1]
    %v1308 = vld [vmem:[%s1241 + $0x20] sm:$0x1]
    %v1309 = vld [vmem:[%s1241 + $0x2c] sm:$0x1]
    %v1310 = vld [vmem:[%s1241 + $0x38] sm:$0x1]
    %v1311 = vld [vmem:[%s1241 + $0x44] sm:$0x1]
    %v1312 = vld [vmem:[%s1241 + $0x50] sm:$0x1]
    %v1313 = vld [vmem:[%s1241 + $0x5c] sm:$0x1]
    %v1314 = vld [vmem:[%s1241 + $0x68] sm:$0x1]
    %v1315 = vld [vmem:[%s1241 + $0x74] sm:$0x1]
    %v1316 = vld [vmem:[%s1241 + $0x80] sm:$0x1]
    %v1317 = vld [vmem:[%s1241 + $0x8c] sm:$0x1]
    %v1318 = vld [vmem:[%s1241 + $0x98] sm:$0x1]
    %v1319 = vld [vmem:[%s1241 + $0xa4] sm:$0x1]
    %v1320 = vld [vmem:[%s1241 + $0xb0] sm:$0x1]
    %v1321 = vld [vmem:[%s1241 + $0xbc] sm:$0x1]
    %v1322 = vld [vmem:[%s1241 + $0xe0] sm:$0x1]
    %v1323 = vld [vmem:[%s1241 + $0xec] sm:$0x1]
    %v1324 = vld [vmem:[%s1241 + $0xf8] sm:$0x1]
    %v1325 = vld [vmem:[%s1241 + $0x104] sm:$0x1]
    %v1326 = vld [vmem:[%s1241 + $0x110] sm:$0x1]
    %v1327 = vld [vmem:[%s1241 + $0x11c] sm:$0x1]
    %v1328 = vld [vmem:[%s1241 + $0x128] sm:$0x1]
    %v1329 = vld [vmem:[%s1241 + $0x134] sm:$0x1]
    %v1330 = vld [vmem:[%s1241 + $0x140] sm:$0x1]
    %v1331 = vld [vmem:[%s1241 + $0x14c] sm:$0x1]
    %v1332 = vld [vmem:[%s1241 + $0x158] sm:$0x1]
    %v1333 = vld [vmem:[%s1241 + $0x164] sm:$0x1]
    %v1334 = vld [vmem:[%s1241 + $0x170] sm:$0x1]
    %v1335 = vld [vmem:[%s1241 + $0x17c] sm:$0x1]
    %v1336 = vld [vmem:[%s1241 + $0x188] sm:$0x1]
    %v1337 = vld [vmem:[%s1241 + $0x194] sm:$0x1]
    %v1339 = vshrl.u32 %v1242, 16
    %v1341 = vrot.slane %v1339, 4
    %v1342 = vshll.u32 %v1242, 16
    %v1344 = vrot.slane %v1342, 5
    %v1345 = vor.u32 %v1341, %v1344
    %v1346 = vrot.slane %v1345, 4
    %v1348 = vshll.u32 %v1243, 16
    %v1350 = vrot.slane %v1348, 5
    %v1351 = vsel %vm117, %v1346, %v1350
    %v1352 = vshrl.u32 %v1243, 16
    %v1354 = vrot.slane %v1352, 4
    %v1355 = vor.u32 %v1354, %v1350
    %v1356 = vrot.slane %v1355, 4
    %v1358 = vshll.u32 %v1306, 16
    %v1360 = vrot.slane %v1358, 5
    %v1361 = vsel %vm117, %v1356, %v1360
    %v1363 = vshrl.u32 %v1244, 16
    %v1365 = vrot.slane %v1363, 4
    %v1366 = vshll.u32 %v1244, 16
    %v1368 = vrot.slane %v1366, 5
    %v1369 = vor.u32 %v1365, %v1368
    %v1370 = vrot.slane %v1369, 4
    %v1372 = vshll.u32 %v1245, 16
    %v1374 = vrot.slane %v1372, 5
    %v1375 = vsel %vm117, %v1370, %v1374
    %v1376 = vshrl.u32 %v1245, 16
    %v1378 = vrot.slane %v1376, 4
    %v1379 = vor.u32 %v1378, %v1374
    %v1380 = vrot.slane %v1379, 4
    %v1382 = vshll.u32 %v1307, 16
    %v1384 = vrot.slane %v1382, 5
    %v1385 = vsel %vm117, %v1380, %v1384
    %v1387 = vshrl.u32 %v1246, 16
    %v1389 = vrot.slane %v1387, 4
    %v1390 = vshll.u32 %v1246, 16
    %v1392 = vrot.slane %v1390, 5
    %v1393 = vor.u32 %v1389, %v1392
    %v1394 = vrot.slane %v1393, 4
    %v1396 = vshll.u32 %v1247, 16
    %v1398 = vrot.slane %v1396, 5
    %v1399 = vsel %vm117, %v1394, %v1398
    %v1400 = vshrl.u32 %v1247, 16
    %v1402 = vrot.slane %v1400, 4
    %v1403 = vor.u32 %v1402, %v1398
    %v1404 = vrot.slane %v1403, 4
    %v1406 = vshll.u32 %v1308, 16
    %v1408 = vrot.slane %v1406, 5
    %v1409 = vsel %vm117, %v1404, %v1408
    %v1411 = vshrl.u32 %v1248, 16
    %v1413 = vrot.slane %v1411, 4
    %v1414 = vshll.u32 %v1248, 16
    %v1416 = vrot.slane %v1414, 5
    %v1417 = vor.u32 %v1413, %v1416
    %v1418 = vrot.slane %v1417, 4
    %v1420 = vshll.u32 %v1249, 16
    %v1422 = vrot.slane %v1420, 5
    %v1423 = vsel %vm117, %v1418, %v1422
    %v1424 = vshrl.u32 %v1249, 16
    %v1426 = vrot.slane %v1424, 4
    %v1427 = vor.u32 %v1426, %v1422
    %v1428 = vrot.slane %v1427, 4
    %v1430 = vshll.u32 %v1309, 16
    %v1432 = vrot.slane %v1430, 5
    %v1433 = vsel %vm117, %v1428, %v1432
    %v1435 = vshrl.u32 %v1250, 16
    %v1437 = vrot.slane %v1435, 4
    %v1438 = vshll.u32 %v1250, 16
    %v1440 = vrot.slane %v1438, 5
    %v1441 = vor.u32 %v1437, %v1440
    %v1442 = vrot.slane %v1441, 4
    %v1444 = vshll.u32 %v1251, 16
    %v1446 = vrot.slane %v1444, 5
    %v1447 = vsel %vm117, %v1442, %v1446
    %v1448 = vshrl.u32 %v1251, 16
    %v1450 = vrot.slane %v1448, 4
    %v1451 = vor.u32 %v1450, %v1446
    %v1452 = vrot.slane %v1451, 4
    %v1454 = vshll.u32 %v1310, 16
    %v1456 = vrot.slane %v1454, 5
    %v1457 = vsel %vm117, %v1452, %v1456
    %v1459 = vshrl.u32 %v1252, 16
    %v1461 = vrot.slane %v1459, 4
    %v1462 = vshll.u32 %v1252, 16
    %v1464 = vrot.slane %v1462, 5
    %v1465 = vor.u32 %v1461, %v1464
    %v1466 = vrot.slane %v1465, 4
    %v1468 = vshll.u32 %v1253, 16
    %v1470 = vrot.slane %v1468, 5
    %v1471 = vsel %vm117, %v1466, %v1470
    %v1472 = vshrl.u32 %v1253, 16
    %v1474 = vrot.slane %v1472, 4
    %v1475 = vor.u32 %v1474, %v1470
    %v1476 = vrot.slane %v1475, 4
    %v1478 = vshll.u32 %v1311, 16
    %v1480 = vrot.slane %v1478, 5
    %v1481 = vsel %vm117, %v1476, %v1480
    %v1483 = vshrl.u32 %v1254, 16
    %v1485 = vrot.slane %v1483, 4
    %v1486 = vshll.u32 %v1254, 16
    %v1488 = vrot.slane %v1486, 5
    %v1489 = vor.u32 %v1485, %v1488
    %v1490 = vrot.slane %v1489, 4
    %v1492 = vshll.u32 %v1255, 16
    %v1494 = vrot.slane %v1492, 5
    %v1495 = vsel %vm117, %v1490, %v1494
    %v1496 = vshrl.u32 %v1255, 16
    %v1498 = vrot.slane %v1496, 4
    %v1499 = vor.u32 %v1498, %v1494
    %v1500 = vrot.slane %v1499, 4
    %v1502 = vshll.u32 %v1312, 16
    %v1504 = vrot.slane %v1502, 5
    %v1505 = vsel %vm117, %v1500, %v1504
    %v1507 = vshrl.u32 %v1256, 16
    %v1509 = vrot.slane %v1507, 4
    %v1510 = vshll.u32 %v1256, 16
    %v1512 = vrot.slane %v1510, 5
    %v1513 = vor.u32 %v1509, %v1512
    %v1514 = vrot.slane %v1513, 4
    %v1516 = vshll.u32 %v1257, 16
    %v1518 = vrot.slane %v1516, 5
    %v1519 = vsel %vm117, %v1514, %v1518
    %v1520 = vshrl.u32 %v1257, 16
    %v1522 = vrot.slane %v1520, 4
    %v1523 = vor.u32 %v1522, %v1518
    %v1524 = vrot.slane %v1523, 4
    %v1526 = vshll.u32 %v1313, 16
    %v1528 = vrot.slane %v1526, 5
    %v1529 = vsel %vm117, %v1524, %v1528
    %v1531 = vshrl.u32 %v1258, 16
    %v1533 = vrot.slane %v1531, 4
    %v1534 = vshll.u32 %v1258, 16
    %v1536 = vrot.slane %v1534, 5
    %v1537 = vor.u32 %v1533, %v1536
    %v1538 = vrot.slane %v1537, 4
    %v1540 = vshll.u32 %v1259, 16
    %v1542 = vrot.slane %v1540, 5
    %v1543 = vsel %vm117, %v1538, %v1542
    %v1544 = vshrl.u32 %v1259, 16
    %v1546 = vrot.slane %v1544, 4
    %v1547 = vor.u32 %v1546, %v1542
    %v1548 = vrot.slane %v1547, 4
    %v1550 = vshll.u32 %v1314, 16
    %v1552 = vrot.slane %v1550, 5
    %v1553 = vsel %vm117, %v1548, %v1552
    %v1555 = vshrl.u32 %v1260, 16
    %v1557 = vrot.slane %v1555, 4
    %v1558 = vshll.u32 %v1260, 16
    %v1560 = vrot.slane %v1558, 5
    %v1561 = vor.u32 %v1557, %v1560
    %v1562 = vrot.slane %v1561, 4
    %v1564 = vshll.u32 %v1261, 16
    %v1566 = vrot.slane %v1564, 5
    %v1567 = vsel %vm117, %v1562, %v1566
    %v1568 = vshrl.u32 %v1261, 16
    %v1570 = vrot.slane %v1568, 4
    %v1571 = vor.u32 %v1570, %v1566
    %v1572 = vrot.slane %v1571, 4
    %v1574 = vshll.u32 %v1315, 16
    %v1576 = vrot.slane %v1574, 5
    %v1577 = vsel %vm117, %v1572, %v1576
    %v1579 = vshrl.u32 %v1262, 16
    %v1581 = vrot.slane %v1579, 4
    %v1582 = vshll.u32 %v1262, 16
    %v1584 = vrot.slane %v1582, 5
    %v1585 = vor.u32 %v1581, %v1584
    %v1586 = vrot.slane %v1585, 4
    %v1588 = vshll.u32 %v1263, 16
    %v1590 = vrot.slane %v1588, 5
    %v1591 = vsel %vm117, %v1586, %v1590
    %v1592 = vshrl.u32 %v1263, 16
    %v1594 = vrot.slane %v1592, 4
    %v1595 = vor.u32 %v1594, %v1590
    %v1596 = vrot.slane %v1595, 4
    %v1598 = vshll.u32 %v1316, 16
    %v1600 = vrot.slane %v1598, 5
    %v1601 = vsel %vm117, %v1596, %v1600
    %v1603 = vshrl.u32 %v1264, 16
    %v1605 = vrot.slane %v1603, 4
    %v1606 = vshll.u32 %v1264, 16
    %v1608 = vrot.slane %v1606, 5
    %v1609 = vor.u32 %v1605, %v1608
    %v1610 = vrot.slane %v1609, 4
    %v1612 = vshll.u32 %v1265, 16
    %v1614 = vrot.slane %v1612, 5
    %v1615 = vsel %vm117, %v1610, %v1614
    %v1616 = vshrl.u32 %v1265, 16
    %v1618 = vrot.slane %v1616, 4
    %v1619 = vor.u32 %v1618, %v1614
    %v1620 = vrot.slane %v1619, 4
    %v1622 = vshll.u32 %v1317, 16
    %v1624 = vrot.slane %v1622, 5
    %v1625 = vsel %vm117, %v1620, %v1624
    %v1627 = vshrl.u32 %v1266, 16
    %v1629 = vrot.slane %v1627, 4
    %v1630 = vshll.u32 %v1266, 16
    %v1632 = vrot.slane %v1630, 5
    %v1633 = vor.u32 %v1629, %v1632
    %v1634 = vrot.slane %v1633, 4
    %v1636 = vshll.u32 %v1267, 16
    %v1638 = vrot.slane %v1636, 5
    %v1639 = vsel %vm117, %v1634, %v1638
    %v1640 = vshrl.u32 %v1267, 16
    %v1642 = vrot.slane %v1640, 4
    %v1643 = vor.u32 %v1642, %v1638
    %v1644 = vrot.slane %v1643, 4
    %v1646 = vshll.u32 %v1318, 16
    %v1648 = vrot.slane %v1646, 5
    %v1649 = vsel %vm117, %v1644, %v1648
    %v1651 = vshrl.u32 %v1268, 16
    %v1653 = vrot.slane %v1651, 4
    %v1654 = vshll.u32 %v1268, 16
    %v1656 = vrot.slane %v1654, 5
    %v1657 = vor.u32 %v1653, %v1656
    %v1658 = vrot.slane %v1657, 4
    %v1660 = vshll.u32 %v1269, 16
    %v1662 = vrot.slane %v1660, 5
    %v1663 = vsel %vm117, %v1658, %v1662
    %v1664 = vshrl.u32 %v1269, 16
    %v1666 = vrot.slane %v1664, 4
    %v1667 = vor.u32 %v1666, %v1662
    %v1668 = vrot.slane %v1667, 4
    %v1670 = vshll.u32 %v1319, 16
    %v1672 = vrot.slane %v1670, 5
    %v1673 = vsel %vm117, %v1668, %v1672
    %v1675 = vshrl.u32 %v1270, 16
    %v1677 = vrot.slane %v1675, 4
    %v1678 = vshll.u32 %v1270, 16
    %v1680 = vrot.slane %v1678, 5
    %v1681 = vor.u32 %v1677, %v1680
    %v1682 = vrot.slane %v1681, 4
    %v1684 = vshll.u32 %v1271, 16
    %v1686 = vrot.slane %v1684, 5
    %v1687 = vsel %vm117, %v1682, %v1686
    %v1688 = vshrl.u32 %v1271, 16
    %v1690 = vrot.slane %v1688, 4
    %v1691 = vor.u32 %v1690, %v1686
    %v1692 = vrot.slane %v1691, 4
    %v1694 = vshll.u32 %v1320, 16
    %v1696 = vrot.slane %v1694, 5
    %v1697 = vsel %vm117, %v1692, %v1696
    %v1699 = vshrl.u32 %v1272, 16
    %v1701 = vrot.slane %v1699, 4
    %v1702 = vshll.u32 %v1272, 16
    %v1704 = vrot.slane %v1702, 5
    %v1705 = vor.u32 %v1701, %v1704
    %v1706 = vrot.slane %v1705, 4
    %v1708 = vshll.u32 %v1273, 16
    %v1710 = vrot.slane %v1708, 5
    %v1711 = vsel %vm117, %v1706, %v1710
    %v1712 = vshrl.u32 %v1273, 16
    %v1714 = vrot.slane %v1712, 4
    %v1715 = vor.u32 %v1714, %v1710
    %v1716 = vrot.slane %v1715, 4
    %v1718 = vshll.u32 %v1321, 16
    %v1720 = vrot.slane %v1718, 5
    %v1721 = vsel %vm117, %v1716, %v1720
    %v1723 = vshrl.u32 %v1274, 16
    %v1725 = vrot.slane %v1723, 4
    %v1726 = vshll.u32 %v1274, 16
    %v1728 = vrot.slane %v1726, 5
    %v1729 = vor.u32 %v1725, %v1728
    %v1730 = vrot.slane %v1729, 4
    %v1732 = vshll.u32 %v1275, 16
    %v1734 = vrot.slane %v1732, 5
    %v1735 = vsel %vm117, %v1730, %v1734
    %v1736 = vshrl.u32 %v1275, 16
    %v1738 = vrot.slane %v1736, 4
    %v1739 = vor.u32 %v1738, %v1734
    %v1740 = vrot.slane %v1739, 4
    %v1742 = vshll.u32 %v1322, 16
    %v1744 = vrot.slane %v1742, 5
    %v1745 = vsel %vm117, %v1740, %v1744
    %v1747 = vshrl.u32 %v1276, 16
    %v1749 = vrot.slane %v1747, 4
    %v1750 = vshll.u32 %v1276, 16
    %v1752 = vrot.slane %v1750, 5
    %v1753 = vor.u32 %v1749, %v1752
    %v1754 = vrot.slane %v1753, 4
    %v1756 = vshll.u32 %v1277, 16
    %v1758 = vrot.slane %v1756, 5
    %v1759 = vsel %vm117, %v1754, %v1758
    %v1760 = vshrl.u32 %v1277, 16
    %v1762 = vrot.slane %v1760, 4
    %v1763 = vor.u32 %v1762, %v1758
    %v1764 = vrot.slane %v1763, 4
    %v1766 = vshll.u32 %v1323, 16
    %v1768 = vrot.slane %v1766, 5
    %v1769 = vsel %vm117, %v1764, %v1768
    %v1771 = vshrl.u32 %v1278, 16
    %v1773 = vrot.slane %v1771, 4
    %v1774 = vshll.u32 %v1278, 16
    %v1776 = vrot.slane %v1774, 5
    %v1777 = vor.u32 %v1773, %v1776
    %v1778 = vrot.slane %v1777, 4
    %v1780 = vshll.u32 %v1279, 16
    %v1782 = vrot.slane %v1780, 5
    %v1783 = vsel %vm117, %v1778, %v1782
    %v1784 = vshrl.u32 %v1279, 16
    %v1786 = vrot.slane %v1784, 4
    %v1787 = vor.u32 %v1786, %v1782
    %v1788 = vrot.slane %v1787, 4
    %v1790 = vshll.u32 %v1324, 16
    %v1792 = vrot.slane %v1790, 5
    %v1793 = vsel %vm117, %v1788, %v1792
    %v1795 = vshrl.u32 %v1280, 16
    %v1797 = vrot.slane %v1795, 4
    %v1798 = vshll.u32 %v1280, 16
    %v1800 = vrot.slane %v1798, 5
    %v1801 = vor.u32 %v1797, %v1800
    %v1802 = vrot.slane %v1801, 4
    %v1804 = vshll.u32 %v1281, 16
    %v1806 = vrot.slane %v1804, 5
    %v1807 = vsel %vm117, %v1802, %v1806
    %v1808 = vshrl.u32 %v1281, 16
    %v1810 = vrot.slane %v1808, 4
    %v1811 = vor.u32 %v1810, %v1806
    %v1812 = vrot.slane %v1811, 4
    %v1814 = vshll.u32 %v1325, 16
    %v1816 = vrot.slane %v1814, 5
    %v1817 = vsel %vm117, %v1812, %v1816
    %v1819 = vshrl.u32 %v1282, 16
    %v1821 = vrot.slane %v1819, 4
    %v1822 = vshll.u32 %v1282, 16
    %v1824 = vrot.slane %v1822, 5
    %v1825 = vor.u32 %v1821, %v1824
    %v1826 = vrot.slane %v1825, 4
    %v1828 = vshll.u32 %v1283, 16
    %v1830 = vrot.slane %v1828, 5
    %v1831 = vsel %vm117, %v1826, %v1830
    %v1832 = vshrl.u32 %v1283, 16
    %v1834 = vrot.slane %v1832, 4
    %v1835 = vor.u32 %v1834, %v1830
    %v1836 = vrot.slane %v1835, 4
    %v1838 = vshll.u32 %v1326, 16
    %v1840 = vrot.slane %v1838, 5
    %v1841 = vsel %vm117, %v1836, %v1840
    %v1843 = vshrl.u32 %v1284, 16
    %v1845 = vrot.slane %v1843, 4
    %v1846 = vshll.u32 %v1284, 16
    %v1848 = vrot.slane %v1846, 5
    %v1849 = vor.u32 %v1845, %v1848
    %v1850 = vrot.slane %v1849, 4
    %v1852 = vshll.u32 %v1285, 16
    %v1854 = vrot.slane %v1852, 5
    %v1855 = vsel %vm117, %v1850, %v1854
    %v1856 = vshrl.u32 %v1285, 16
    %v1858 = vrot.slane %v1856, 4
    %v1859 = vor.u32 %v1858, %v1854
    %v1860 = vrot.slane %v1859, 4
    %v1862 = vshll.u32 %v1327, 16
    %v1864 = vrot.slane %v1862, 5
    %v1865 = vsel %vm117, %v1860, %v1864
    %v1867 = vshrl.u32 %v1286, 16
    %v1869 = vrot.slane %v1867, 4
    %v1870 = vshll.u32 %v1286, 16
    %v1872 = vrot.slane %v1870, 5
    %v1873 = vor.u32 %v1869, %v1872
    %v1874 = vrot.slane %v1873, 4
    %v1876 = vshll.u32 %v1287, 16
    %v1878 = vrot.slane %v1876, 5
    %v1879 = vsel %vm117, %v1874, %v1878
    %v1880 = vshrl.u32 %v1287, 16
    %v1882 = vrot.slane %v1880, 4
    %v1883 = vor.u32 %v1882, %v1878
    %v1884 = vrot.slane %v1883, 4
    %v1886 = vshll.u32 %v1328, 16
    %v1888 = vrot.slane %v1886, 5
    %v1889 = vsel %vm117, %v1884, %v1888
    %v1891 = vshrl.u32 %v1288, 16
    %v1893 = vrot.slane %v1891, 4
    %v1894 = vshll.u32 %v1288, 16
    %v1896 = vrot.slane %v1894, 5
    %v1897 = vor.u32 %v1893, %v1896
    %v1898 = vrot.slane %v1897, 4
    %v1900 = vshll.u32 %v1289, 16
    %v1902 = vrot.slane %v1900, 5
    %v1903 = vsel %vm117, %v1898, %v1902
    %v1904 = vshrl.u32 %v1289, 16
    %v1906 = vrot.slane %v1904, 4
    %v1907 = vor.u32 %v1906, %v1902
    %v1908 = vrot.slane %v1907, 4
    %v1910 = vshll.u32 %v1329, 16
    %v1912 = vrot.slane %v1910, 5
    %v1913 = vsel %vm117, %v1908, %v1912
    %v1915 = vshrl.u32 %v1290, 16
    %v1917 = vrot.slane %v1915, 4
    %v1918 = vshll.u32 %v1290, 16
    %v1920 = vrot.slane %v1918, 5
    %v1921 = vor.u32 %v1917, %v1920
    %v1922 = vrot.slane %v1921, 4
    %v1924 = vshll.u32 %v1291, 16
    %v1926 = vrot.slane %v1924, 5
    %v1927 = vsel %vm117, %v1922, %v1926
    %v1928 = vshrl.u32 %v1291, 16
    %v1930 = vrot.slane %v1928, 4
    %v1931 = vor.u32 %v1930, %v1926
    %v1932 = vrot.slane %v1931, 4
    %v1934 = vshll.u32 %v1330, 16
    %v1936 = vrot.slane %v1934, 5
    %v1937 = vsel %vm117, %v1932, %v1936
    %v1939 = vshrl.u32 %v1292, 16
    %v1941 = vrot.slane %v1939, 4
    %v1942 = vshll.u32 %v1292, 16
    %v1944 = vrot.slane %v1942, 5
    %v1945 = vor.u32 %v1941, %v1944
    %v1946 = vrot.slane %v1945, 4
    %v1948 = vshll.u32 %v1293, 16
    %v1950 = vrot.slane %v1948, 5
    %v1951 = vsel %vm117, %v1946, %v1950
    %v1952 = vshrl.u32 %v1293, 16
    %v1954 = vrot.slane %v1952, 4
    %v1955 = vor.u32 %v1954, %v1950
    %v1956 = vrot.slane %v1955, 4
    %v1958 = vshll.u32 %v1331, 16
    %v1960 = vrot.slane %v1958, 5
    %v1961 = vsel %vm117, %v1956, %v1960
    %v1963 = vshrl.u32 %v1294, 16
    %v1965 = vrot.slane %v1963, 4
    %v1966 = vshll.u32 %v1294, 16
    %v1968 = vrot.slane %v1966, 5
    %v1969 = vor.u32 %v1965, %v1968
    %v1970 = vrot.slane %v1969, 4
    %v1972 = vshll.u32 %v1295, 16
    %v1974 = vrot.slane %v1972, 5
    %v1975 = vsel %vm117, %v1970, %v1974
    %v1976 = vshrl.u32 %v1295, 16
    %v1978 = vrot.slane %v1976, 4
    %v1979 = vor.u32 %v1978, %v1974
    %v1980 = vrot.slane %v1979, 4
    %v1982 = vshll.u32 %v1332, 16
    %v1984 = vrot.slane %v1982, 5
    %v1985 = vsel %vm117, %v1980, %v1984
    %v1987 = vshrl.u32 %v1296, 16
    %v1989 = vrot.slane %v1987, 4
    %v1990 = vshll.u32 %v1296, 16
    %v1992 = vrot.slane %v1990, 5
    %v1993 = vor.u32 %v1989, %v1992
    %v1994 = vrot.slane %v1993, 4
    %v1996 = vshll.u32 %v1297, 16
    %v1998 = vrot.slane %v1996, 5
    %v1999 = vsel %vm117, %v1994, %v1998
    %v2000 = vshrl.u32 %v1297, 16
    %v2002 = vrot.slane %v2000, 4
    %v2003 = vor.u32 %v2002, %v1998
    %v2004 = vrot.slane %v2003, 4
    %v2006 = vshll.u32 %v1333, 16
    %v2008 = vrot.slane %v2006, 5
    %v2009 = vsel %vm117, %v2004, %v2008
    %v2011 = vshrl.u32 %v1298, 16
    %v2013 = vrot.slane %v2011, 4
    %v2014 = vshll.u32 %v1298, 16
    %v2016 = vrot.slane %v2014, 5
    %v2017 = vor.u32 %v2013, %v2016
    %v2018 = vrot.slane %v2017, 4
    %v2020 = vshll.u32 %v1299, 16
    %v2022 = vrot.slane %v2020, 5
    %v2023 = vsel %vm117, %v2018, %v2022
    %v2024 = vshrl.u32 %v1299, 16
    %v2026 = vrot.slane %v2024, 4
    %v2027 = vor.u32 %v2026, %v2022
    %v2028 = vrot.slane %v2027, 4
    %v2030 = vshll.u32 %v1334, 16
    %v2032 = vrot.slane %v2030, 5
    %v2033 = vsel %vm117, %v2028, %v2032
    %v2035 = vshrl.u32 %v1300, 16
    %v2037 = vrot.slane %v2035, 4
    %v2038 = vshll.u32 %v1300, 16
    %v2040 = vrot.slane %v2038, 5
    %v2041 = vor.u32 %v2037, %v2040
    %v2042 = vrot.slane %v2041, 4
    %v2044 = vshll.u32 %v1301, 16
    %v2046 = vrot.slane %v2044, 5
    %v2047 = vsel %vm117, %v2042, %v2046
    %v2048 = vshrl.u32 %v1301, 16
    %v2050 = vrot.slane %v2048, 4
    %v2051 = vor.u32 %v2050, %v2046
    %v2052 = vrot.slane %v2051, 4
    %v2054 = vshll.u32 %v1335, 16
    %v2056 = vrot.slane %v2054, 5
    %v2057 = vsel %vm117, %v2052, %v2056
    %v2059 = vshrl.u32 %v1302, 16
    %v2061 = vrot.slane %v2059, 4
    %v2062 = vshll.u32 %v1302, 16
    %v2064 = vrot.slane %v2062, 5
    %v2065 = vor.u32 %v2061, %v2064
    %v2066 = vrot.slane %v2065, 4
    %v2068 = vshll.u32 %v1303, 16
    %v2070 = vrot.slane %v2068, 5
    %v2071 = vsel %vm117, %v2066, %v2070
    %v2072 = vshrl.u32 %v1303, 16
    %v2074 = vrot.slane %v2072, 4
    %v2075 = vor.u32 %v2074, %v2070
    %v2076 = vrot.slane %v2075, 4
    %v2078 = vshll.u32 %v1336, 16
    %v2080 = vrot.slane %v2078, 5
    %v2081 = vsel %vm117, %v2076, %v2080
    %v2083 = vshrl.u32 %v1304, 16
    %v2085 = vrot.slane %v2083, 4
    %v2086 = vshll.u32 %v1304, 16
    %v2088 = vrot.slane %v2086, 5
    %v2089 = vor.u32 %v2085, %v2088
    %v2090 = vrot.slane %v2089, 4
    %v2092 = vshll.u32 %v1305, 16
    %v2094 = vrot.slane %v2092, 5
    %v2095 = vsel %vm117, %v2090, %v2094
    %v2096 = vshrl.u32 %v1305, 16
    %v2098 = vrot.slane %v2096, 4
    %v2099 = vor.u32 %v2098, %v2094
    %v2100 = vrot.slane %v2099, 4
    %v2102 = vshll.u32 %v1337, 16
    %v2104 = vrot.slane %v2102, 5
    %v2105 = vsel %vm117, %v2100, %v2104
    %v2106 = vld [vmem:[%s1241] sm:$0xe]
    %v2107 = vld [vmem:[%s1241 + $0xc] sm:$0xe]
    %v2108 = vld [vmem:[%s1241 + $0x18] sm:$0xe]
    %v2109 = vld [vmem:[%s1241 + $0x24] sm:$0xe]
    %v2110 = vld [vmem:[%s1241 + $0x30] sm:$0xe]
    %v2111 = vld [vmem:[%s1241 + $0x3c] sm:$0xe]
    %v2112 = vld [vmem:[%s1241 + $0x48] sm:$0xe]
    %v2113 = vld [vmem:[%s1241 + $0x54] sm:$0xe]
    %v2114 = vld [vmem:[%s1241 + $0x60] sm:$0xe]
    %v2115 = vld [vmem:[%s1241 + $0x6c] sm:$0xe]
    %v2116 = vld [vmem:[%s1241 + $0x78] sm:$0xe]
    %v2117 = vld [vmem:[%s1241 + $0x84] sm:$0xe]
    %v2118 = vld [vmem:[%s1241 + $0x90] sm:$0xe]
    %v2119 = vld [vmem:[%s1241 + $0x9c] sm:$0xe]
    %v2120 = vld [vmem:[%s1241 + $0xa8] sm:$0xe]
    %v2121 = vld [vmem:[%s1241 + $0xb4] sm:$0xe]
    %v2122 = vld [vmem:[%s1241 + $0xd8] sm:$0xe]
    %v2123 = vld [vmem:[%s1241 + $0xe4] sm:$0xe]
    %v2124 = vld [vmem:[%s1241 + $0xf0] sm:$0xe]
    %v2125 = vld [vmem:[%s1241 + $0xfc] sm:$0xe]
    %v2126 = vld [vmem:[%s1241 + $0x108] sm:$0xe]
    %v2127 = vld [vmem:[%s1241 + $0x114] sm:$0xe]
    %v2128 = vld [vmem:[%s1241 + $0x120] sm:$0xe]
    %v2129 = vld [vmem:[%s1241 + $0x12c] sm:$0xe]
    %v2130 = vld [vmem:[%s1241 + $0x138] sm:$0xe]
    %v2131 = vld [vmem:[%s1241 + $0x144] sm:$0xe]
    %v2132 = vld [vmem:[%s1241 + $0x150] sm:$0xe]
    %v2133 = vld [vmem:[%s1241 + $0x15c] sm:$0xe]
    %v2134 = vld [vmem:[%s1241 + $0x168] sm:$0xe]
    %v2135 = vld [vmem:[%s1241 + $0x174] sm:$0xe]
    %v2136 = vld [vmem:[%s1241 + $0x180] sm:$0xe]
    %v2137 = vld [vmem:[%s1241 + $0x18c] sm:$0xe]
    %v2234 = vrot.slane %v2106, 5
    %v2235 = vrot.slane %v2234, 4
    %v2236 = vrot.slane %v1243, 5
    %v2237 = vsel %vm1016, %v2235, %v2236
    %v2238 = vrot.slane %v2236, 4
    %v2239 = vrot.slane %v1306, 5
    %v2240 = vsel %vm1016, %v2238, %v2239
    %v2241 = vrot.slane %v2107, 5
    %v2242 = vrot.slane %v2241, 4
    %v2243 = vrot.slane %v1245, 5
    %v2244 = vsel %vm1016, %v2242, %v2243
    %v2245 = vrot.slane %v2243, 4
    %v2246 = vrot.slane %v1307, 5
    %v2247 = vsel %vm1016, %v2245, %v2246
    %v2248 = vrot.slane %v2108, 5
    %v2249 = vrot.slane %v2248, 4
    %v2250 = vrot.slane %v1247, 5
    %v2251 = vsel %vm1016, %v2249, %v2250
    %v2252 = vrot.slane %v2250, 4
    %v2253 = vrot.slane %v1308, 5
    %v2254 = vsel %vm1016, %v2252, %v2253
    %v2255 = vrot.slane %v2109, 5
    %v2256 = vrot.slane %v2255, 4
    %v2257 = vrot.slane %v1249, 5
    %v2258 = vsel %vm1016, %v2256, %v2257
    %v2259 = vrot.slane %v2257, 4
    %v2260 = vrot.slane %v1309, 5
    %v2261 = vsel %vm1016, %v2259, %v2260
    %v2262 = vrot.slane %v2110, 5
    %v2263 = vrot.slane %v2262, 4
    %v2264 = vrot.slane %v1251, 5
    %v2265 = vsel %vm1016, %v2263, %v2264
    %v2266 = vrot.slane %v2264, 4
    %v2267 = vrot.slane %v1310, 5
    %v2268 = vsel %vm1016, %v2266, %v2267
    %v2269 = vrot.slane %v2111, 5
    %v2270 = vrot.slane %v2269, 4
    %v2271 = vrot.slane %v1253, 5
    %v2272 = vsel %vm1016, %v2270, %v2271
    %v2273 = vrot.slane %v2271, 4
    %v2274 = vrot.slane %v1311, 5
    %v2275 = vsel %vm1016, %v2273, %v2274
    %v2276 = vrot.slane %v2112, 5
    %v2277 = vrot.slane %v2276, 4
    %v2278 = vrot.slane %v1255, 5
    %v2279 = vsel %vm1016, %v2277, %v2278
    %v2280 = vrot.slane %v2278, 4
    %v2281 = vrot.slane %v1312, 5
    %v2282 = vsel %vm1016, %v2280, %v2281
    %v2283 = vrot.slane %v2113, 5
    %v2284 = vrot.slane %v2283, 4
    %v2285 = vrot.slane %v1257, 5
    %v2286 = vsel %vm1016, %v2284, %v2285
    %v2287 = vrot.slane %v2285, 4
    %v2288 = vrot.slane %v1313, 5
    %v2289 = vsel %vm1016, %v2287, %v2288
    %v2290 = vrot.slane %v2114, 5
    %v2291 = vrot.slane %v2290, 4
    %v2292 = vrot.slane %v1259, 5
    %v2293 = vsel %vm1016, %v2291, %v2292
    %v2294 = vrot.slane %v2292, 4
    %v2295 = vrot.slane %v1314, 5
    %v2296 = vsel %vm1016, %v2294, %v2295
    %v2297 = vrot.slane %v2115, 5
    %v2298 = vrot.slane %v2297, 4
    %v2299 = vrot.slane %v1261, 5
    %v2300 = vsel %vm1016, %v2298, %v2299
    %v2301 = vrot.slane %v2299, 4
    %v2302 = vrot.slane %v1315, 5
    %v2303 = vsel %vm1016, %v2301, %v2302
    %v2304 = vrot.slane %v2116, 5
    %v2305 = vrot.slane %v2304, 4
    %v2306 = vrot.slane %v1263, 5
    %v2307 = vsel %vm1016, %v2305, %v2306
    %v2308 = vrot.slane %v2306, 4
    %v2309 = vrot.slane %v1316, 5
    %v2310 = vsel %vm1016, %v2308, %v2309
    %v2311 = vrot.slane %v2117, 5
    %v2312 = vrot.slane %v2311, 4
    %v2313 = vrot.slane %v1265, 5
    %v2314 = vsel %vm1016, %v2312, %v2313
    %v2315 = vrot.slane %v2313, 4
    %v2316 = vrot.slane %v1317, 5
    %v2317 = vsel %vm1016, %v2315, %v2316
    %v2318 = vrot.slane %v2118, 5
    %v2319 = vrot.slane %v2318, 4
    %v2320 = vrot.slane %v1267, 5
    %v2321 = vsel %vm1016, %v2319, %v2320
    %v2322 = vrot.slane %v2320, 4
    %v2323 = vrot.slane %v1318, 5
    %v2324 = vsel %vm1016, %v2322, %v2323
    %v2325 = vrot.slane %v2119, 5
    %v2326 = vrot.slane %v2325, 4
    %v2327 = vrot.slane %v1269, 5
    %v2328 = vsel %vm1016, %v2326, %v2327
    %v2329 = vrot.slane %v2327, 4
    %v2330 = vrot.slane %v1319, 5
    %v2331 = vsel %vm1016, %v2329, %v2330
    %v2332 = vrot.slane %v2120, 5
    %v2333 = vrot.slane %v2332, 4
    %v2334 = vrot.slane %v1271, 5
    %v2335 = vsel %vm1016, %v2333, %v2334
    %v2336 = vrot.slane %v2334, 4
    %v2337 = vrot.slane %v1320, 5
    %v2338 = vsel %vm1016, %v2336, %v2337
    %v2339 = vrot.slane %v2121, 5
    %v2340 = vrot.slane %v2339, 4
    %v2341 = vrot.slane %v1273, 5
    %v2342 = vsel %vm1016, %v2340, %v2341
    %v2343 = vrot.slane %v2341, 4
    %v2344 = vrot.slane %v1321, 5
    %v2345 = vsel %vm1016, %v2343, %v2344
    %v2346 = vrot.slane %v2122, 5
    %v2347 = vrot.slane %v2346, 4
    %v2348 = vrot.slane %v1275, 5
    %v2349 = vsel %vm1016, %v2347, %v2348
    %v2350 = vrot.slane %v2348, 4
    %v2351 = vrot.slane %v1322, 5
    %v2352 = vsel %vm1016, %v2350, %v2351
    %v2353 = vrot.slane %v2123, 5
    %v2354 = vrot.slane %v2353, 4
    %v2355 = vrot.slane %v1277, 5
    %v2356 = vsel %vm1016, %v2354, %v2355
    %v2357 = vrot.slane %v2355, 4
    %v2358 = vrot.slane %v1323, 5
    %v2359 = vsel %vm1016, %v2357, %v2358
    %v2360 = vrot.slane %v2124, 5
    %v2361 = vrot.slane %v2360, 4
    %v2362 = vrot.slane %v1279, 5
    %v2363 = vsel %vm1016, %v2361, %v2362
    %v2364 = vrot.slane %v2362, 4
    %v2365 = vrot.slane %v1324, 5
    %v2366 = vsel %vm1016, %v2364, %v2365
    %v2367 = vrot.slane %v2125, 5
    %v2368 = vrot.slane %v2367, 4
    %v2369 = vrot.slane %v1281, 5
    %v2370 = vsel %vm1016, %v2368, %v2369
    %v2371 = vrot.slane %v2369, 4
    %v2372 = vrot.slane %v1325, 5
    %v2373 = vsel %vm1016, %v2371, %v2372
    %v2374 = vrot.slane %v2126, 5
    %v2375 = vrot.slane %v2374, 4
    %v2376 = vrot.slane %v1283, 5
    %v2377 = vsel %vm1016, %v2375, %v2376
    %v2378 = vrot.slane %v2376, 4
    %v2379 = vrot.slane %v1326, 5
    %v2380 = vsel %vm1016, %v2378, %v2379
    %v2381 = vrot.slane %v2127, 5
    %v2382 = vrot.slane %v2381, 4
    %v2383 = vrot.slane %v1285, 5
    %v2384 = vsel %vm1016, %v2382, %v2383
    %v2385 = vrot.slane %v2383, 4
    %v2386 = vrot.slane %v1327, 5
    %v2387 = vsel %vm1016, %v2385, %v2386
    %v2388 = vrot.slane %v2128, 5
    %v2389 = vrot.slane %v2388, 4
    %v2390 = vrot.slane %v1287, 5
    %v2391 = vsel %vm1016, %v2389, %v2390
    %v2392 = vrot.slane %v2390, 4
    %v2393 = vrot.slane %v1328, 5
    %v2394 = vsel %vm1016, %v2392, %v2393
    %v2395 = vrot.slane %v2129, 5
    %v2396 = vrot.slane %v2395, 4
    %v2397 = vrot.slane %v1289, 5
    %v2398 = vsel %vm1016, %v2396, %v2397
    %v2399 = vrot.slane %v2397, 4
    %v2400 = vrot.slane %v1329, 5
    %v2401 = vsel %vm1016, %v2399, %v2400
    %v2402 = vrot.slane %v2130, 5
    %v2403 = vrot.slane %v2402, 4
    %v2404 = vrot.slane %v1291, 5
    %v2405 = vsel %vm1016, %v2403, %v2404
    %v2406 = vrot.slane %v2404, 4
    %v2407 = vrot.slane %v1330, 5
    %v2408 = vsel %vm1016, %v2406, %v2407
    %v2409 = vrot.slane %v2131, 5
    %v2410 = vrot.slane %v2409, 4
    %v2411 = vrot.slane %v1293, 5
    %v2412 = vsel %vm1016, %v2410, %v2411
    %v2413 = vrot.slane %v2411, 4
    %v2414 = vrot.slane %v1331, 5
    %v2415 = vsel %vm1016, %v2413, %v2414
    %v2416 = vrot.slane %v2132, 5
    %v2417 = vrot.slane %v2416, 4
    %v2418 = vrot.slane %v1295, 5
    %v2419 = vsel %vm1016, %v2417, %v2418
    %v2420 = vrot.slane %v2418, 4
    %v2421 = vrot.slane %v1332, 5
    %v2422 = vsel %vm1016, %v2420, %v2421
    %v2423 = vrot.slane %v2133, 5
    %v2424 = vrot.slane %v2423, 4
    %v2425 = vrot.slane %v1297, 5
    %v2426 = vsel %vm1016, %v2424, %v2425
    %v2427 = vrot.slane %v2425, 4
    %v2428 = vrot.slane %v1333, 5
    %v2429 = vsel %vm1016, %v2427, %v2428
    %v2430 = vrot.slane %v2134, 5
    %v2431 = vrot.slane %v2430, 4
    %v2432 = vrot.slane %v1299, 5
    %v2433 = vsel %vm1016, %v2431, %v2432
    %v2434 = vrot.slane %v2432, 4
    %v2435 = vrot.slane %v1334, 5
    %v2436 = vsel %vm1016, %v2434, %v2435
    %v2437 = vrot.slane %v2135, 5
    %v2438 = vrot.slane %v2437, 4
    %v2439 = vrot.slane %v1301, 5
    %v2440 = vsel %vm1016, %v2438, %v2439
    %v2441 = vrot.slane %v2439, 4
    %v2442 = vrot.slane %v1335, 5
    %v2443 = vsel %vm1016, %v2441, %v2442
    %v2444 = vrot.slane %v2136, 5
    %v2445 = vrot.slane %v2444, 4
    %v2446 = vrot.slane %v1303, 5
    %v2447 = vsel %vm1016, %v2445, %v2446
    %v2448 = vrot.slane %v2446, 4
    %v2449 = vrot.slane %v1336, 5
    %v2450 = vsel %vm1016, %v2448, %v2449
    %v2451 = vrot.slane %v2137, 5
    %v2452 = vrot.slane %v2451, 4
    %v2453 = vrot.slane %v1305, 5
    %v2454 = vsel %vm1016, %v2452, %v2453
    %v2455 = vrot.slane %v2453, 4
    %v2456 = vrot.slane %v1337, 5
    %v2457 = vsel %vm1016, %v2455, %v2456
    %s2458 = scalar_lea.vmem %s0, 24
    %v2459 = vld [vmem:[%s2458] sm:$0xf]
    %v2460 = vld [vmem:[%s2458 + $0x4] sm:$0xf]
    %v2461 = vld [vmem:[%s2458 + $0xc] sm:$0xf]
    %v2462 = vld [vmem:[%s2458 + $0x10] sm:$0xf]
    %v2463 = vld [vmem:[%s2458 + $0x18] sm:$0xf]
    %v2464 = vld [vmem:[%s2458 + $0x1c] sm:$0xf]
    %v2465 = vld [vmem:[%s2458 + $0x24] sm:$0xf]
    %v2466 = vld [vmem:[%s2458 + $0x28] sm:$0xf]
    %v2467 = vld [vmem:[%s2458 + $0x30] sm:$0xf]
    %v2468 = vld [vmem:[%s2458 + $0x34] sm:$0xf]
    %v2469 = vld [vmem:[%s2458 + $0x3c] sm:$0xf]
    %v2470 = vld [vmem:[%s2458 + $0x40] sm:$0xf]
    %v2471 = vld [vmem:[%s2458 + $0x48] sm:$0xf]
    %v2472 = vld [vmem:[%s2458 + $0x4c] sm:$0xf]
    %v2473 = vld [vmem:[%s2458 + $0x54] sm:$0xf]
    %v2474 = vld [vmem:[%s2458 + $0x58] sm:$0xf]
    %v2475 = vld [vmem:[%s2458 + $0x60] sm:$0xf]
    %v2476 = vld [vmem:[%s2458 + $0x64] sm:$0xf]
    %v2477 = vld [vmem:[%s2458 + $0x6c] sm:$0xf]
    %v2478 = vld [vmem:[%s2458 + $0x70] sm:$0xf]
    %v2479 = vld [vmem:[%s2458 + $0x78] sm:$0xf]
    %v2480 = vld [vmem:[%s2458 + $0x7c] sm:$0xf]
    %v2481 = vld [vmem:[%s2458 + $0x84] sm:$0xf]
    %v2482 = vld [vmem:[%s2458 + $0x88] sm:$0xf]
    %v2483 = vld [vmem:[%s2458 + $0x90] sm:$0xf]
    %v2484 = vld [vmem:[%s2458 + $0x94] sm:$0xf]
    %v2485 = vld [vmem:[%s2458 + $0x9c] sm:$0xf]
    %v2486 = vld [vmem:[%s2458 + $0xa0] sm:$0xf]
    %v2487 = vld [vmem:[%s2458 + $0xa8] sm:$0xf]
    %v2488 = vld [vmem:[%s2458 + $0xac] sm:$0xf]
    %v2489 = vld [vmem:[%s2458 + $0xb4] sm:$0xf]
    %v2490 = vld [vmem:[%s2458 + $0xb8] sm:$0xf]
    %v2491 = vld [vmem:[%s2458 + $0xd8] sm:$0xf]
    %v2492 = vld [vmem:[%s2458 + $0xdc] sm:$0xf]
    %v2493 = vld [vmem:[%s2458 + $0xe4] sm:$0xf]
    %v2494 = vld [vmem:[%s2458 + $0xe8] sm:$0xf]
    %v2495 = vld [vmem:[%s2458 + $0xf0] sm:$0xf]
    %v2496 = vld [vmem:[%s2458 + $0xf4] sm:$0xf]
    %v2497 = vld [vmem:[%s2458 + $0xfc] sm:$0xf]
    %v2498 = vld [vmem:[%s2458 + $0x100] sm:$0xf]
    %v2499 = vld [vmem:[%s2458 + $0x108] sm:$0xf]
    %v2500 = vld [vmem:[%s2458 + $0x10c] sm:$0xf]
    %v2501 = vld [vmem:[%s2458 + $0x114] sm:$0xf]
    %v2502 = vld [vmem:[%s2458 + $0x118] sm:$0xf]
    %v2503 = vld [vmem:[%s2458 + $0x120] sm:$0xf]
    %v2504 = vld [vmem:[%s2458 + $0x124] sm:$0xf]
    %v2505 = vld [vmem:[%s2458 + $0x12c] sm:$0xf]
    %v2506 = vld [vmem:[%s2458 + $0x130] sm:$0xf]
    %v2507 = vld [vmem:[%s2458 + $0x138] sm:$0xf]
    %v2508 = vld [vmem:[%s2458 + $0x13c] sm:$0xf]
    %v2509 = vld [vmem:[%s2458 + $0x144] sm:$0xf]
    %v2510 = vld [vmem:[%s2458 + $0x148] sm:$0xf]
    %v2511 = vld [vmem:[%s2458 + $0x150] sm:$0xf]
    %v2512 = vld [vmem:[%s2458 + $0x154] sm:$0xf]
    %v2513 = vld [vmem:[%s2458 + $0x15c] sm:$0xf]
    %v2514 = vld [vmem:[%s2458 + $0x160] sm:$0xf]
    %v2515 = vld [vmem:[%s2458 + $0x168] sm:$0xf]
    %v2516 = vld [vmem:[%s2458 + $0x16c] sm:$0xf]
    %v2517 = vld [vmem:[%s2458 + $0x174] sm:$0xf]
    %v2518 = vld [vmem:[%s2458 + $0x178] sm:$0xf]
    %v2519 = vld [vmem:[%s2458 + $0x180] sm:$0xf]
    %v2520 = vld [vmem:[%s2458 + $0x184] sm:$0xf]
    %v2521 = vld [vmem:[%s2458 + $0x18c] sm:$0xf]
    %v2522 = vld [vmem:[%s2458 + $0x190] sm:$0xf]
    %v2523 = vld [vmem:[%s2458 + $0x8] sm:$0x1]
    %v2524 = vld [vmem:[%s2458 + $0x14] sm:$0x1]
    %v2525 = vld [vmem:[%s2458 + $0x20] sm:$0x1]
    %v2526 = vld [vmem:[%s2458 + $0x2c] sm:$0x1]
    %v2527 = vld [vmem:[%s2458 + $0x38] sm:$0x1]
    %v2528 = vld [vmem:[%s2458 + $0x44] sm:$0x1]
    %v2529 = vld [vmem:[%s2458 + $0x50] sm:$0x1]
    %v2530 = vld [vmem:[%s2458 + $0x5c] sm:$0x1]
    %v2531 = vld [vmem:[%s2458 + $0x68] sm:$0x1]
    %v2532 = vld [vmem:[%s2458 + $0x74] sm:$0x1]
    %v2533 = vld [vmem:[%s2458 + $0x80] sm:$0x1]
    %v2534 = vld [vmem:[%s2458 + $0x8c] sm:$0x1]
    %v2535 = vld [vmem:[%s2458 + $0x98] sm:$0x1]
    %v2536 = vld [vmem:[%s2458 + $0xa4] sm:$0x1]
    %v2537 = vld [vmem:[%s2458 + $0xb0] sm:$0x1]
    %v2538 = vld [vmem:[%s2458 + $0xbc] sm:$0x1]
    %v2539 = vld [vmem:[%s2458 + $0xe0] sm:$0x1]
    %v2540 = vld [vmem:[%s2458 + $0xec] sm:$0x1]
    %v2541 = vld [vmem:[%s2458 + $0xf8] sm:$0x1]
    %v2542 = vld [vmem:[%s2458 + $0x104] sm:$0x1]
    %v2543 = vld [vmem:[%s2458 + $0x110] sm:$0x1]
    %v2544 = vld [vmem:[%s2458 + $0x11c] sm:$0x1]
    %v2545 = vld [vmem:[%s2458 + $0x128] sm:$0x1]
    %v2546 = vld [vmem:[%s2458 + $0x134] sm:$0x1]
    %v2547 = vld [vmem:[%s2458 + $0x140] sm:$0x1]
    %v2548 = vld [vmem:[%s2458 + $0x14c] sm:$0x1]
    %v2549 = vld [vmem:[%s2458 + $0x158] sm:$0x1]
    %v2550 = vld [vmem:[%s2458 + $0x164] sm:$0x1]
    %v2551 = vld [vmem:[%s2458 + $0x170] sm:$0x1]
    %v2552 = vld [vmem:[%s2458 + $0x17c] sm:$0x1]
    %v2553 = vld [vmem:[%s2458 + $0x188] sm:$0x1]
    %v2554 = vld [vmem:[%s2458 + $0x194] sm:$0x1]
    %v2556 = vshrl.u32 %v2459, 16
    %v2558 = vrot.slane %v2556, 4
    %v2559 = vshll.u32 %v2459, 16
    %v2561 = vrot.slane %v2559, 5
    %v2562 = vor.u32 %v2558, %v2561
    %v2563 = vrot.slane %v2562, 4
    %v2565 = vshll.u32 %v2460, 16
    %v2567 = vrot.slane %v2565, 5
    %v2568 = vsel %vm117, %v2563, %v2567
    %v2569 = vshrl.u32 %v2460, 16
    %v2571 = vrot.slane %v2569, 4
    %v2572 = vor.u32 %v2571, %v2567
    %v2573 = vrot.slane %v2572, 4
    %v2575 = vshll.u32 %v2523, 16
    %v2577 = vrot.slane %v2575, 5
    %v2578 = vsel %vm117, %v2573, %v2577
    %v2580 = vshrl.u32 %v2461, 16
    %v2582 = vrot.slane %v2580, 4
    %v2583 = vshll.u32 %v2461, 16
    %v2585 = vrot.slane %v2583, 5
    %v2586 = vor.u32 %v2582, %v2585
    %v2587 = vrot.slane %v2586, 4
    %v2589 = vshll.u32 %v2462, 16
    %v2591 = vrot.slane %v2589, 5
    %v2592 = vsel %vm117, %v2587, %v2591
    %v2593 = vshrl.u32 %v2462, 16
    %v2595 = vrot.slane %v2593, 4
    %v2596 = vor.u32 %v2595, %v2591
    %v2597 = vrot.slane %v2596, 4
    %v2599 = vshll.u32 %v2524, 16
    %v2601 = vrot.slane %v2599, 5
    %v2602 = vsel %vm117, %v2597, %v2601
    %v2604 = vshrl.u32 %v2463, 16
    %v2606 = vrot.slane %v2604, 4
    %v2607 = vshll.u32 %v2463, 16
    %v2609 = vrot.slane %v2607, 5
    %v2610 = vor.u32 %v2606, %v2609
    %v2611 = vrot.slane %v2610, 4
    %v2613 = vshll.u32 %v2464, 16
    %v2615 = vrot.slane %v2613, 5
    %v2616 = vsel %vm117, %v2611, %v2615
    %v2617 = vshrl.u32 %v2464, 16
    %v2619 = vrot.slane %v2617, 4
    %v2620 = vor.u32 %v2619, %v2615
    %v2621 = vrot.slane %v2620, 4
    %v2623 = vshll.u32 %v2525, 16
    %v2625 = vrot.slane %v2623, 5
    %v2626 = vsel %vm117, %v2621, %v2625
    %v2628 = vshrl.u32 %v2465, 16
    %v2630 = vrot.slane %v2628, 4
    %v2631 = vshll.u32 %v2465, 16
    %v2633 = vrot.slane %v2631, 5
    %v2634 = vor.u32 %v2630, %v2633
    %v2635 = vrot.slane %v2634, 4
    %v2637 = vshll.u32 %v2466, 16
    %v2639 = vrot.slane %v2637, 5
    %v2640 = vsel %vm117, %v2635, %v2639
    %v2641 = vshrl.u32 %v2466, 16
    %v2643 = vrot.slane %v2641, 4
    %v2644 = vor.u32 %v2643, %v2639
    %v2645 = vrot.slane %v2644, 4
    %v2647 = vshll.u32 %v2526, 16
    %v2649 = vrot.slane %v2647, 5
    %v2650 = vsel %vm117, %v2645, %v2649
    %v2652 = vshrl.u32 %v2467, 16
    %v2654 = vrot.slane %v2652, 4
    %v2655 = vshll.u32 %v2467, 16
    %v2657 = vrot.slane %v2655, 5
    %v2658 = vor.u32 %v2654, %v2657
    %v2659 = vrot.slane %v2658, 4
    %v2661 = vshll.u32 %v2468, 16
    %v2663 = vrot.slane %v2661, 5
    %v2664 = vsel %vm117, %v2659, %v2663
    %v2665 = vshrl.u32 %v2468, 16
    %v2667 = vrot.slane %v2665, 4
    %v2668 = vor.u32 %v2667, %v2663
    %v2669 = vrot.slane %v2668, 4
    %v2671 = vshll.u32 %v2527, 16
    %v2673 = vrot.slane %v2671, 5
    %v2674 = vsel %vm117, %v2669, %v2673
    %v2676 = vshrl.u32 %v2469, 16
    %v2678 = vrot.slane %v2676, 4
    %v2679 = vshll.u32 %v2469, 16
    %v2681 = vrot.slane %v2679, 5
    %v2682 = vor.u32 %v2678, %v2681
    %v2683 = vrot.slane %v2682, 4
    %v2685 = vshll.u32 %v2470, 16
    %v2687 = vrot.slane %v2685, 5
    %v2688 = vsel %vm117, %v2683, %v2687
    %v2689 = vshrl.u32 %v2470, 16
    %v2691 = vrot.slane %v2689, 4
    %v2692 = vor.u32 %v2691, %v2687
    %v2693 = vrot.slane %v2692, 4
    %v2695 = vshll.u32 %v2528, 16
    %v2697 = vrot.slane %v2695, 5
    %v2698 = vsel %vm117, %v2693, %v2697
    %v2700 = vshrl.u32 %v2471, 16
    %v2702 = vrot.slane %v2700, 4
    %v2703 = vshll.u32 %v2471, 16
    %v2705 = vrot.slane %v2703, 5
    %v2706 = vor.u32 %v2702, %v2705
    %v2707 = vrot.slane %v2706, 4
    %v2709 = vshll.u32 %v2472, 16
    %v2711 = vrot.slane %v2709, 5
    %v2712 = vsel %vm117, %v2707, %v2711
    %v2713 = vshrl.u32 %v2472, 16
    %v2715 = vrot.slane %v2713, 4
    %v2716 = vor.u32 %v2715, %v2711
    %v2717 = vrot.slane %v2716, 4
    %v2719 = vshll.u32 %v2529, 16
    %v2721 = vrot.slane %v2719, 5
    %v2722 = vsel %vm117, %v2717, %v2721
    %v2724 = vshrl.u32 %v2473, 16
    %v2726 = vrot.slane %v2724, 4
    %v2727 = vshll.u32 %v2473, 16
    %v2729 = vrot.slane %v2727, 5
    %v2730 = vor.u32 %v2726, %v2729
    %v2731 = vrot.slane %v2730, 4
    %v2733 = vshll.u32 %v2474, 16
    %v2735 = vrot.slane %v2733, 5
    %v2736 = vsel %vm117, %v2731, %v2735
    %v2737 = vshrl.u32 %v2474, 16
    %v2739 = vrot.slane %v2737, 4
    %v2740 = vor.u32 %v2739, %v2735
    %v2741 = vrot.slane %v2740, 4
    %v2743 = vshll.u32 %v2530, 16
    %v2745 = vrot.slane %v2743, 5
    %v2746 = vsel %vm117, %v2741, %v2745
    %v2748 = vshrl.u32 %v2475, 16
    %v2750 = vrot.slane %v2748, 4
    %v2751 = vshll.u32 %v2475, 16
    %v2753 = vrot.slane %v2751, 5
    %v2754 = vor.u32 %v2750, %v2753
    %v2755 = vrot.slane %v2754, 4
    %v2757 = vshll.u32 %v2476, 16
    %v2759 = vrot.slane %v2757, 5
    %v2760 = vsel %vm117, %v2755, %v2759
    %v2761 = vshrl.u32 %v2476, 16
    %v2763 = vrot.slane %v2761, 4
    %v2764 = vor.u32 %v2763, %v2759
    %v2765 = vrot.slane %v2764, 4
    %v2767 = vshll.u32 %v2531, 16
    %v2769 = vrot.slane %v2767, 5
    %v2770 = vsel %vm117, %v2765, %v2769
    %v2772 = vshrl.u32 %v2477, 16
    %v2774 = vrot.slane %v2772, 4
    %v2775 = vshll.u32 %v2477, 16
    %v2777 = vrot.slane %v2775, 5
    %v2778 = vor.u32 %v2774, %v2777
    %v2779 = vrot.slane %v2778, 4
    %v2781 = vshll.u32 %v2478, 16
    %v2783 = vrot.slane %v2781, 5
    %v2784 = vsel %vm117, %v2779, %v2783
    %v2785 = vshrl.u32 %v2478, 16
    %v2787 = vrot.slane %v2785, 4
    %v2788 = vor.u32 %v2787, %v2783
    %v2789 = vrot.slane %v2788, 4
    %v2791 = vshll.u32 %v2532, 16
    %v2793 = vrot.slane %v2791, 5
    %v2794 = vsel %vm117, %v2789, %v2793
    %v2796 = vshrl.u32 %v2479, 16
    %v2798 = vrot.slane %v2796, 4
    %v2799 = vshll.u32 %v2479, 16
    %v2801 = vrot.slane %v2799, 5
    %v2802 = vor.u32 %v2798, %v2801
    %v2803 = vrot.slane %v2802, 4
    %v2805 = vshll.u32 %v2480, 16
    %v2807 = vrot.slane %v2805, 5
    %v2808 = vsel %vm117, %v2803, %v2807
    %v2809 = vshrl.u32 %v2480, 16
    %v2811 = vrot.slane %v2809, 4
    %v2812 = vor.u32 %v2811, %v2807
    %v2813 = vrot.slane %v2812, 4
    %v2815 = vshll.u32 %v2533, 16
    %v2817 = vrot.slane %v2815, 5
    %v2818 = vsel %vm117, %v2813, %v2817
    %v2820 = vshrl.u32 %v2481, 16
    %v2822 = vrot.slane %v2820, 4
    %v2823 = vshll.u32 %v2481, 16
    %v2825 = vrot.slane %v2823, 5
    %v2826 = vor.u32 %v2822, %v2825
    %v2827 = vrot.slane %v2826, 4
    %v2829 = vshll.u32 %v2482, 16
    %v2831 = vrot.slane %v2829, 5
    %v2832 = vsel %vm117, %v2827, %v2831
    %v2833 = vshrl.u32 %v2482, 16
    %v2835 = vrot.slane %v2833, 4
    %v2836 = vor.u32 %v2835, %v2831
    %v2837 = vrot.slane %v2836, 4
    %v2839 = vshll.u32 %v2534, 16
    %v2841 = vrot.slane %v2839, 5
    %v2842 = vsel %vm117, %v2837, %v2841
    %v2844 = vshrl.u32 %v2483, 16
    %v2846 = vrot.slane %v2844, 4
    %v2847 = vshll.u32 %v2483, 16
    %v2849 = vrot.slane %v2847, 5
    %v2850 = vor.u32 %v2846, %v2849
    %v2851 = vrot.slane %v2850, 4
    %v2853 = vshll.u32 %v2484, 16
    %v2855 = vrot.slane %v2853, 5
    %v2856 = vsel %vm117, %v2851, %v2855
    %v2857 = vshrl.u32 %v2484, 16
    %v2859 = vrot.slane %v2857, 4
    %v2860 = vor.u32 %v2859, %v2855
    %v2861 = vrot.slane %v2860, 4
    %v2863 = vshll.u32 %v2535, 16
    %v2865 = vrot.slane %v2863, 5
    %v2866 = vsel %vm117, %v2861, %v2865
    %v2868 = vshrl.u32 %v2485, 16
    %v2870 = vrot.slane %v2868, 4
    %v2871 = vshll.u32 %v2485, 16
    %v2873 = vrot.slane %v2871, 5
    %v2874 = vor.u32 %v2870, %v2873
    %v2875 = vrot.slane %v2874, 4
    %v2877 = vshll.u32 %v2486, 16
    %v2879 = vrot.slane %v2877, 5
    %v2880 = vsel %vm117, %v2875, %v2879
    %v2881 = vshrl.u32 %v2486, 16
    %v2883 = vrot.slane %v2881, 4
    %v2884 = vor.u32 %v2883, %v2879
    %v2885 = vrot.slane %v2884, 4
    %v2887 = vshll.u32 %v2536, 16
    %v2889 = vrot.slane %v2887, 5
    %v2890 = vsel %vm117, %v2885, %v2889
    %v2892 = vshrl.u32 %v2487, 16
    %v2894 = vrot.slane %v2892, 4
    %v2895 = vshll.u32 %v2487, 16
    %v2897 = vrot.slane %v2895, 5
    %v2898 = vor.u32 %v2894, %v2897
    %v2899 = vrot.slane %v2898, 4
    %v2901 = vshll.u32 %v2488, 16
    %v2903 = vrot.slane %v2901, 5
    %v2904 = vsel %vm117, %v2899, %v2903
    %v2905 = vshrl.u32 %v2488, 16
    %v2907 = vrot.slane %v2905, 4
    %v2908 = vor.u32 %v2907, %v2903
    %v2909 = vrot.slane %v2908, 4
    %v2911 = vshll.u32 %v2537, 16
    %v2913 = vrot.slane %v2911, 5
    %v2914 = vsel %vm117, %v2909, %v2913
    %v2916 = vshrl.u32 %v2489, 16
    %v2918 = vrot.slane %v2916, 4
    %v2919 = vshll.u32 %v2489, 16
    %v2921 = vrot.slane %v2919, 5
    %v2922 = vor.u32 %v2918, %v2921
    %v2923 = vrot.slane %v2922, 4
    %v2925 = vshll.u32 %v2490, 16
    %v2927 = vrot.slane %v2925, 5
    %v2928 = vsel %vm117, %v2923, %v2927
    %v2929 = vshrl.u32 %v2490, 16
    %v2931 = vrot.slane %v2929, 4
    %v2932 = vor.u32 %v2931, %v2927
    %v2933 = vrot.slane %v2932, 4
    %v2935 = vshll.u32 %v2538, 16
    %v2937 = vrot.slane %v2935, 5
    %v2938 = vsel %vm117, %v2933, %v2937
    %v2940 = vshrl.u32 %v2491, 16
    %v2942 = vrot.slane %v2940, 4
    %v2943 = vshll.u32 %v2491, 16
    %v2945 = vrot.slane %v2943, 5
    %v2946 = vor.u32 %v2942, %v2945
    %v2947 = vrot.slane %v2946, 4
    %v2949 = vshll.u32 %v2492, 16
    %v2951 = vrot.slane %v2949, 5
    %v2952 = vsel %vm117, %v2947, %v2951
    %v2953 = vshrl.u32 %v2492, 16
    %v2955 = vrot.slane %v2953, 4
    %v2956 = vor.u32 %v2955, %v2951
    %v2957 = vrot.slane %v2956, 4
    %v2959 = vshll.u32 %v2539, 16
    %v2961 = vrot.slane %v2959, 5
    %v2962 = vsel %vm117, %v2957, %v2961
    %v2964 = vshrl.u32 %v2493, 16
    %v2966 = vrot.slane %v2964, 4
    %v2967 = vshll.u32 %v2493, 16
    %v2969 = vrot.slane %v2967, 5
    %v2970 = vor.u32 %v2966, %v2969
    %v2971 = vrot.slane %v2970, 4
    %v2973 = vshll.u32 %v2494, 16
    %v2975 = vrot.slane %v2973, 5
    %v2976 = vsel %vm117, %v2971, %v2975
    %v2977 = vshrl.u32 %v2494, 16
    %v2979 = vrot.slane %v2977, 4
    %v2980 = vor.u32 %v2979, %v2975
    %v2981 = vrot.slane %v2980, 4
    %v2983 = vshll.u32 %v2540, 16
    %v2985 = vrot.slane %v2983, 5
    %v2986 = vsel %vm117, %v2981, %v2985
    %v2988 = vshrl.u32 %v2495, 16
    %v2990 = vrot.slane %v2988, 4
    %v2991 = vshll.u32 %v2495, 16
    %v2993 = vrot.slane %v2991, 5
    %v2994 = vor.u32 %v2990, %v2993
    %v2995 = vrot.slane %v2994, 4
    %v2997 = vshll.u32 %v2496, 16
    %v2999 = vrot.slane %v2997, 5
    %v3000 = vsel %vm117, %v2995, %v2999
    %v3001 = vshrl.u32 %v2496, 16
    %v3003 = vrot.slane %v3001, 4
    %v3004 = vor.u32 %v3003, %v2999
    %v3005 = vrot.slane %v3004, 4
    %v3007 = vshll.u32 %v2541, 16
    %v3009 = vrot.slane %v3007, 5
    %v3010 = vsel %vm117, %v3005, %v3009
    %v3012 = vshrl.u32 %v2497, 16
    %v3014 = vrot.slane %v3012, 4
    %v3015 = vshll.u32 %v2497, 16
    %v3017 = vrot.slane %v3015, 5
    %v3018 = vor.u32 %v3014, %v3017
    %v3019 = vrot.slane %v3018, 4
    %v3021 = vshll.u32 %v2498, 16
    %v3023 = vrot.slane %v3021, 5
    %v3024 = vsel %vm117, %v3019, %v3023
    %v3025 = vshrl.u32 %v2498, 16
    %v3027 = vrot.slane %v3025, 4
    %v3028 = vor.u32 %v3027, %v3023
    %v3029 = vrot.slane %v3028, 4
    %v3031 = vshll.u32 %v2542, 16
    %v3033 = vrot.slane %v3031, 5
    %v3034 = vsel %vm117, %v3029, %v3033
    %v3036 = vshrl.u32 %v2499, 16
    %v3038 = vrot.slane %v3036, 4
    %v3039 = vshll.u32 %v2499, 16
    %v3041 = vrot.slane %v3039, 5
    %v3042 = vor.u32 %v3038, %v3041
    %v3043 = vrot.slane %v3042, 4
    %v3045 = vshll.u32 %v2500, 16
    %v3047 = vrot.slane %v3045, 5
    %v3048 = vsel %vm117, %v3043, %v3047
    %v3049 = vshrl.u32 %v2500, 16
    %v3051 = vrot.slane %v3049, 4
    %v3052 = vor.u32 %v3051, %v3047
    %v3053 = vrot.slane %v3052, 4
    %v3055 = vshll.u32 %v2543, 16
    %v3057 = vrot.slane %v3055, 5
    %v3058 = vsel %vm117, %v3053, %v3057
    %v3060 = vshrl.u32 %v2501, 16
    %v3062 = vrot.slane %v3060, 4
    %v3063 = vshll.u32 %v2501, 16
    %v3065 = vrot.slane %v3063, 5
    %v3066 = vor.u32 %v3062, %v3065
    %v3067 = vrot.slane %v3066, 4
    %v3069 = vshll.u32 %v2502, 16
    %v3071 = vrot.slane %v3069, 5
    %v3072 = vsel %vm117, %v3067, %v3071
    %v3073 = vshrl.u32 %v2502, 16
    %v3075 = vrot.slane %v3073, 4
    %v3076 = vor.u32 %v3075, %v3071
    %v3077 = vrot.slane %v3076, 4
    %v3079 = vshll.u32 %v2544, 16
    %v3081 = vrot.slane %v3079, 5
    %v3082 = vsel %vm117, %v3077, %v3081
    %v3084 = vshrl.u32 %v2503, 16
    %v3086 = vrot.slane %v3084, 4
    %v3087 = vshll.u32 %v2503, 16
    %v3089 = vrot.slane %v3087, 5
    %v3090 = vor.u32 %v3086, %v3089
    %v3091 = vrot.slane %v3090, 4
    %v3093 = vshll.u32 %v2504, 16
    %v3095 = vrot.slane %v3093, 5
    %v3096 = vsel %vm117, %v3091, %v3095
    %v3097 = vshrl.u32 %v2504, 16
    %v3099 = vrot.slane %v3097, 4
    %v3100 = vor.u32 %v3099, %v3095
    %v3101 = vrot.slane %v3100, 4
    %v3103 = vshll.u32 %v2545, 16
    %v3105 = vrot.slane %v3103, 5
    %v3106 = vsel %vm117, %v3101, %v3105
    %v3108 = vshrl.u32 %v2505, 16
    %v3110 = vrot.slane %v3108, 4
    %v3111 = vshll.u32 %v2505, 16
    %v3113 = vrot.slane %v3111, 5
    %v3114 = vor.u32 %v3110, %v3113
    %v3115 = vrot.slane %v3114, 4
    %v3117 = vshll.u32 %v2506, 16
    %v3119 = vrot.slane %v3117, 5
    %v3120 = vsel %vm117, %v3115, %v3119
    %v3121 = vshrl.u32 %v2506, 16
    %v3123 = vrot.slane %v3121, 4
    %v3124 = vor.u32 %v3123, %v3119
    %v3125 = vrot.slane %v3124, 4
    %v3127 = vshll.u32 %v2546, 16
    %v3129 = vrot.slane %v3127, 5
    %v3130 = vsel %vm117, %v3125, %v3129
    %v3132 = vshrl.u32 %v2507, 16
    %v3134 = vrot.slane %v3132, 4
    %v3135 = vshll.u32 %v2507, 16
    %v3137 = vrot.slane %v3135, 5
    %v3138 = vor.u32 %v3134, %v3137
    %v3139 = vrot.slane %v3138, 4
    %v3141 = vshll.u32 %v2508, 16
    %v3143 = vrot.slane %v3141, 5
    %v3144 = vsel %vm117, %v3139, %v3143
    %v3145 = vshrl.u32 %v2508, 16
    %v3147 = vrot.slane %v3145, 4
    %v3148 = vor.u32 %v3147, %v3143
    %v3149 = vrot.slane %v3148, 4
    %v3151 = vshll.u32 %v2547, 16
    %v3153 = vrot.slane %v3151, 5
    %v3154 = vsel %vm117, %v3149, %v3153
    %v3156 = vshrl.u32 %v2509, 16
    %v3158 = vrot.slane %v3156, 4
    %v3159 = vshll.u32 %v2509, 16
    %v3161 = vrot.slane %v3159, 5
    %v3162 = vor.u32 %v3158, %v3161
    %v3163 = vrot.slane %v3162, 4
    %v3165 = vshll.u32 %v2510, 16
    %v3167 = vrot.slane %v3165, 5
    %v3168 = vsel %vm117, %v3163, %v3167
    %v3169 = vshrl.u32 %v2510, 16
    %v3171 = vrot.slane %v3169, 4
    %v3172 = vor.u32 %v3171, %v3167
    %v3173 = vrot.slane %v3172, 4
    %v3175 = vshll.u32 %v2548, 16
    %v3177 = vrot.slane %v3175, 5
    %v3178 = vsel %vm117, %v3173, %v3177
    %v3180 = vshrl.u32 %v2511, 16
    %v3182 = vrot.slane %v3180, 4
    %v3183 = vshll.u32 %v2511, 16
    %v3185 = vrot.slane %v3183, 5
    %v3186 = vor.u32 %v3182, %v3185
    %v3187 = vrot.slane %v3186, 4
    %v3189 = vshll.u32 %v2512, 16
    %v3191 = vrot.slane %v3189, 5
    %v3192 = vsel %vm117, %v3187, %v3191
    %v3193 = vshrl.u32 %v2512, 16
    %v3195 = vrot.slane %v3193, 4
    %v3196 = vor.u32 %v3195, %v3191
    %v3197 = vrot.slane %v3196, 4
    %v3199 = vshll.u32 %v2549, 16
    %v3201 = vrot.slane %v3199, 5
    %v3202 = vsel %vm117, %v3197, %v3201
    %v3204 = vshrl.u32 %v2513, 16
    %v3206 = vrot.slane %v3204, 4
    %v3207 = vshll.u32 %v2513, 16
    %v3209 = vrot.slane %v3207, 5
    %v3210 = vor.u32 %v3206, %v3209
    %v3211 = vrot.slane %v3210, 4
    %v3213 = vshll.u32 %v2514, 16
    %v3215 = vrot.slane %v3213, 5
    %v3216 = vsel %vm117, %v3211, %v3215
    %v3217 = vshrl.u32 %v2514, 16
    %v3219 = vrot.slane %v3217, 4
    %v3220 = vor.u32 %v3219, %v3215
    %v3221 = vrot.slane %v3220, 4
    %v3223 = vshll.u32 %v2550, 16
    %v3225 = vrot.slane %v3223, 5
    %v3226 = vsel %vm117, %v3221, %v3225
    %v3228 = vshrl.u32 %v2515, 16
    %v3230 = vrot.slane %v3228, 4
    %v3231 = vshll.u32 %v2515, 16
    %v3233 = vrot.slane %v3231, 5
    %v3234 = vor.u32 %v3230, %v3233
    %v3235 = vrot.slane %v3234, 4
    %v3237 = vshll.u32 %v2516, 16
    %v3239 = vrot.slane %v3237, 5
    %v3240 = vsel %vm117, %v3235, %v3239
    %v3241 = vshrl.u32 %v2516, 16
    %v3243 = vrot.slane %v3241, 4
    %v3244 = vor.u32 %v3243, %v3239
    %v3245 = vrot.slane %v3244, 4
    %v3247 = vshll.u32 %v2551, 16
    %v3249 = vrot.slane %v3247, 5
    %v3250 = vsel %vm117, %v3245, %v3249
    %v3252 = vshrl.u32 %v2517, 16
    %v3254 = vrot.slane %v3252, 4
    %v3255 = vshll.u32 %v2517, 16
    %v3257 = vrot.slane %v3255, 5
    %v3258 = vor.u32 %v3254, %v3257
    %v3259 = vrot.slane %v3258, 4
    %v3261 = vshll.u32 %v2518, 16
    %v3263 = vrot.slane %v3261, 5
    %v3264 = vsel %vm117, %v3259, %v3263
    %v3265 = vshrl.u32 %v2518, 16
    %v3267 = vrot.slane %v3265, 4
    %v3268 = vor.u32 %v3267, %v3263
    %v3269 = vrot.slane %v3268, 4
    %v3271 = vshll.u32 %v2552, 16
    %v3273 = vrot.slane %v3271, 5
    %v3274 = vsel %vm117, %v3269, %v3273
    %v3276 = vshrl.u32 %v2519, 16
    %v3278 = vrot.slane %v3276, 4
    %v3279 = vshll.u32 %v2519, 16
    %v3281 = vrot.slane %v3279, 5
    %v3282 = vor.u32 %v3278, %v3281
    %v3283 = vrot.slane %v3282, 4
    %v3285 = vshll.u32 %v2520, 16
    %v3287 = vrot.slane %v3285, 5
    %v3288 = vsel %vm117, %v3283, %v3287
    %v3289 = vshrl.u32 %v2520, 16
    %v3291 = vrot.slane %v3289, 4
    %v3292 = vor.u32 %v3291, %v3287
    %v3293 = vrot.slane %v3292, 4
    %v3295 = vshll.u32 %v2553, 16
    %v3297 = vrot.slane %v3295, 5
    %v3298 = vsel %vm117, %v3293, %v3297
    %v3300 = vshrl.u32 %v2521, 16
    %v3302 = vrot.slane %v3300, 4
    %v3303 = vshll.u32 %v2521, 16
    %v3305 = vrot.slane %v3303, 5
    %v3306 = vor.u32 %v3302, %v3305
    %v3307 = vrot.slane %v3306, 4
    %v3309 = vshll.u32 %v2522, 16
    %v3311 = vrot.slane %v3309, 5
    %v3312 = vsel %vm117, %v3307, %v3311
    %v3313 = vshrl.u32 %v2522, 16
    %v3315 = vrot.slane %v3313, 4
    %v3316 = vor.u32 %v3315, %v3311
    %v3317 = vrot.slane %v3316, 4
    %v3319 = vshll.u32 %v2554, 16
    %v3321 = vrot.slane %v3319, 5
    %v3322 = vsel %vm117, %v3317, %v3321
    %v3323 = vld [vmem:[%s2458] sm:$0xe]
    %v3324 = vld [vmem:[%s2458 + $0xc] sm:$0xe]
    %v3325 = vld [vmem:[%s2458 + $0x18] sm:$0xe]
    %v3326 = vld [vmem:[%s2458 + $0x24] sm:$0xe]
    %v3327 = vld [vmem:[%s2458 + $0x30] sm:$0xe]
    %v3328 = vld [vmem:[%s2458 + $0x3c] sm:$0xe]
    %v3329 = vld [vmem:[%s2458 + $0x48] sm:$0xe]
    %v3330 = vld [vmem:[%s2458 + $0x54] sm:$0xe]
    %v3331 = vld [vmem:[%s2458 + $0x60] sm:$0xe]
    %v3332 = vld [vmem:[%s2458 + $0x6c] sm:$0xe]
    %v3333 = vld [vmem:[%s2458 + $0x78] sm:$0xe]
    %v3334 = vld [vmem:[%s2458 + $0x84] sm:$0xe]
    %v3335 = vld [vmem:[%s2458 + $0x90] sm:$0xe]
    %v3336 = vld [vmem:[%s2458 + $0x9c] sm:$0xe]
    %v3337 = vld [vmem:[%s2458 + $0xa8] sm:$0xe]
    %v3338 = vld [vmem:[%s2458 + $0xb4] sm:$0xe]
    %v3339 = vld [vmem:[%s2458 + $0xd8] sm:$0xe]
    %v3340 = vld [vmem:[%s2458 + $0xe4] sm:$0xe]
    %v3341 = vld [vmem:[%s2458 + $0xf0] sm:$0xe]
    %v3342 = vld [vmem:[%s2458 + $0xfc] sm:$0xe]
    %v3343 = vld [vmem:[%s2458 + $0x108] sm:$0xe]
    %v3344 = vld [vmem:[%s2458 + $0x114] sm:$0xe]
    %v3345 = vld [vmem:[%s2458 + $0x120] sm:$0xe]
    %v3346 = vld [vmem:[%s2458 + $0x12c] sm:$0xe]
    %v3347 = vld [vmem:[%s2458 + $0x138] sm:$0xe]
    %v3348 = vld [vmem:[%s2458 + $0x144] sm:$0xe]
    %v3349 = vld [vmem:[%s2458 + $0x150] sm:$0xe]
    %v3350 = vld [vmem:[%s2458 + $0x15c] sm:$0xe]
    %v3351 = vld [vmem:[%s2458 + $0x168] sm:$0xe]
    %v3352 = vld [vmem:[%s2458 + $0x174] sm:$0xe]
    %v3353 = vld [vmem:[%s2458 + $0x180] sm:$0xe]
    %v3354 = vld [vmem:[%s2458 + $0x18c] sm:$0xe]
    %v3451 = vrot.slane %v3323, 5
    %v3452 = vrot.slane %v3451, 4
    %v3453 = vrot.slane %v2460, 5
    %v3454 = vsel %vm1016, %v3452, %v3453
    %v3455 = vrot.slane %v3453, 4
    %v3456 = vrot.slane %v2523, 5
    %v3457 = vsel %vm1016, %v3455, %v3456
    %v3458 = vrot.slane %v3324, 5
    %v3459 = vrot.slane %v3458, 4
    %v3460 = vrot.slane %v2462, 5
    %v3461 = vsel %vm1016, %v3459, %v3460
    %v3462 = vrot.slane %v3460, 4
    %v3463 = vrot.slane %v2524, 5
    %v3464 = vsel %vm1016, %v3462, %v3463
    %v3465 = vrot.slane %v3325, 5
    %v3466 = vrot.slane %v3465, 4
    %v3467 = vrot.slane %v2464, 5
    %v3468 = vsel %vm1016, %v3466, %v3467
    %v3469 = vrot.slane %v3467, 4
    %v3470 = vrot.slane %v2525, 5
    %v3471 = vsel %vm1016, %v3469, %v3470
    %v3472 = vrot.slane %v3326, 5
    %v3473 = vrot.slane %v3472, 4
    %v3474 = vrot.slane %v2466, 5
    %v3475 = vsel %vm1016, %v3473, %v3474
    %v3476 = vrot.slane %v3474, 4
    %v3477 = vrot.slane %v2526, 5
    %v3478 = vsel %vm1016, %v3476, %v3477
    %v3479 = vrot.slane %v3327, 5
    %v3480 = vrot.slane %v3479, 4
    %v3481 = vrot.slane %v2468, 5
    %v3482 = vsel %vm1016, %v3480, %v3481
    %v3483 = vrot.slane %v3481, 4
    %v3484 = vrot.slane %v2527, 5
    %v3485 = vsel %vm1016, %v3483, %v3484
    %v3486 = vrot.slane %v3328, 5
    %v3487 = vrot.slane %v3486, 4
    %v3488 = vrot.slane %v2470, 5
    %v3489 = vsel %vm1016, %v3487, %v3488
    %v3490 = vrot.slane %v3488, 4
    %v3491 = vrot.slane %v2528, 5
    %v3492 = vsel %vm1016, %v3490, %v3491
    %v3493 = vrot.slane %v3329, 5
    %v3494 = vrot.slane %v3493, 4
    %v3495 = vrot.slane %v2472, 5
    %v3496 = vsel %vm1016, %v3494, %v3495
    %v3497 = vrot.slane %v3495, 4
    %v3498 = vrot.slane %v2529, 5
    %v3499 = vsel %vm1016, %v3497, %v3498
    %v3500 = vrot.slane %v3330, 5
    %v3501 = vrot.slane %v3500, 4
    %v3502 = vrot.slane %v2474, 5
    %v3503 = vsel %vm1016, %v3501, %v3502
    %v3504 = vrot.slane %v3502, 4
    %v3505 = vrot.slane %v2530, 5
    %v3506 = vsel %vm1016, %v3504, %v3505
    %v3507 = vrot.slane %v3331, 5
    %v3508 = vrot.slane %v3507, 4
    %v3509 = vrot.slane %v2476, 5
    %v3510 = vsel %vm1016, %v3508, %v3509
    %v3511 = vrot.slane %v3509, 4
    %v3512 = vrot.slane %v2531, 5
    %v3513 = vsel %vm1016, %v3511, %v3512
    %v3514 = vrot.slane %v3332, 5
    %v3515 = vrot.slane %v3514, 4
    %v3516 = vrot.slane %v2478, 5
    %v3517 = vsel %vm1016, %v3515, %v3516
    %v3518 = vrot.slane %v3516, 4
    %v3519 = vrot.slane %v2532, 5
    %v3520 = vsel %vm1016, %v3518, %v3519
    %v3521 = vrot.slane %v3333, 5
    %v3522 = vrot.slane %v3521, 4
    %v3523 = vrot.slane %v2480, 5
    %v3524 = vsel %vm1016, %v3522, %v3523
    %v3525 = vrot.slane %v3523, 4
    %v3526 = vrot.slane %v2533, 5
    %v3527 = vsel %vm1016, %v3525, %v3526
    %v3528 = vrot.slane %v3334, 5
    %v3529 = vrot.slane %v3528, 4
    %v3530 = vrot.slane %v2482, 5
    %v3531 = vsel %vm1016, %v3529, %v3530
    %v3532 = vrot.slane %v3530, 4
    %v3533 = vrot.slane %v2534, 5
    %v3534 = vsel %vm1016, %v3532, %v3533
    %v3535 = vrot.slane %v3335, 5
    %v3536 = vrot.slane %v3535, 4
    %v3537 = vrot.slane %v2484, 5
    %v3538 = vsel %vm1016, %v3536, %v3537
    %v3539 = vrot.slane %v3537, 4
    %v3540 = vrot.slane %v2535, 5
    %v3541 = vsel %vm1016, %v3539, %v3540
    %v3542 = vrot.slane %v3336, 5
    %v3543 = vrot.slane %v3542, 4
    %v3544 = vrot.slane %v2486, 5
    %v3545 = vsel %vm1016, %v3543, %v3544
    %v3546 = vrot.slane %v3544, 4
    %v3547 = vrot.slane %v2536, 5
    %v3548 = vsel %vm1016, %v3546, %v3547
    %v3549 = vrot.slane %v3337, 5
    %v3550 = vrot.slane %v3549, 4
    %v3551 = vrot.slane %v2488, 5
    %v3552 = vsel %vm1016, %v3550, %v3551
    %v3553 = vrot.slane %v3551, 4
    %v3554 = vrot.slane %v2537, 5
    %v3555 = vsel %vm1016, %v3553, %v3554
    %v3556 = vrot.slane %v3338, 5
    %v3557 = vrot.slane %v3556, 4
    %v3558 = vrot.slane %v2490, 5
    %v3559 = vsel %vm1016, %v3557, %v3558
    %v3560 = vrot.slane %v3558, 4
    %v3561 = vrot.slane %v2538, 5
    %v3562 = vsel %vm1016, %v3560, %v3561
    %v3563 = vrot.slane %v3339, 5
    %v3564 = vrot.slane %v3563, 4
    %v3565 = vrot.slane %v2492, 5
    %v3566 = vsel %vm1016, %v3564, %v3565
    %v3567 = vrot.slane %v3565, 4
    %v3568 = vrot.slane %v2539, 5
    %v3569 = vsel %vm1016, %v3567, %v3568
    %v3570 = vrot.slane %v3340, 5
    %v3571 = vrot.slane %v3570, 4
    %v3572 = vrot.slane %v2494, 5
    %v3573 = vsel %vm1016, %v3571, %v3572
    %v3574 = vrot.slane %v3572, 4
    %v3575 = vrot.slane %v2540, 5
    %v3576 = vsel %vm1016, %v3574, %v3575
    %v3577 = vrot.slane %v3341, 5
    %v3578 = vrot.slane %v3577, 4
    %v3579 = vrot.slane %v2496, 5
    %v3580 = vsel %vm1016, %v3578, %v3579
    %v3581 = vrot.slane %v3579, 4
    %v3582 = vrot.slane %v2541, 5
    %v3583 = vsel %vm1016, %v3581, %v3582
    %v3584 = vrot.slane %v3342, 5
    %v3585 = vrot.slane %v3584, 4
    %v3586 = vrot.slane %v2498, 5
    %v3587 = vsel %vm1016, %v3585, %v3586
    %v3588 = vrot.slane %v3586, 4
    %v3589 = vrot.slane %v2542, 5
    %v3590 = vsel %vm1016, %v3588, %v3589
    %v3591 = vrot.slane %v3343, 5
    %v3592 = vrot.slane %v3591, 4
    %v3593 = vrot.slane %v2500, 5
    %v3594 = vsel %vm1016, %v3592, %v3593
    %v3595 = vrot.slane %v3593, 4
    %v3596 = vrot.slane %v2543, 5
    %v3597 = vsel %vm1016, %v3595, %v3596
    %v3598 = vrot.slane %v3344, 5
    %v3599 = vrot.slane %v3598, 4
    %v3600 = vrot.slane %v2502, 5
    %v3601 = vsel %vm1016, %v3599, %v3600
    %v3602 = vrot.slane %v3600, 4
    %v3603 = vrot.slane %v2544, 5
    %v3604 = vsel %vm1016, %v3602, %v3603
    %v3605 = vrot.slane %v3345, 5
    %v3606 = vrot.slane %v3605, 4
    %v3607 = vrot.slane %v2504, 5
    %v3608 = vsel %vm1016, %v3606, %v3607
    %v3609 = vrot.slane %v3607, 4
    %v3610 = vrot.slane %v2545, 5
    %v3611 = vsel %vm1016, %v3609, %v3610
    %v3612 = vrot.slane %v3346, 5
    %v3613 = vrot.slane %v3612, 4
    %v3614 = vrot.slane %v2506, 5
    %v3615 = vsel %vm1016, %v3613, %v3614
    %v3616 = vrot.slane %v3614, 4
    %v3617 = vrot.slane %v2546, 5
    %v3618 = vsel %vm1016, %v3616, %v3617
    %v3619 = vrot.slane %v3347, 5
    %v3620 = vrot.slane %v3619, 4
    %v3621 = vrot.slane %v2508, 5
    %v3622 = vsel %vm1016, %v3620, %v3621
    %v3623 = vrot.slane %v3621, 4
    %v3624 = vrot.slane %v2547, 5
    %v3625 = vsel %vm1016, %v3623, %v3624
    %v3626 = vrot.slane %v3348, 5
    %v3627 = vrot.slane %v3626, 4
    %v3628 = vrot.slane %v2510, 5
    %v3629 = vsel %vm1016, %v3627, %v3628
    %v3630 = vrot.slane %v3628, 4
    %v3631 = vrot.slane %v2548, 5
    %v3632 = vsel %vm1016, %v3630, %v3631
    %v3633 = vrot.slane %v3349, 5
    %v3634 = vrot.slane %v3633, 4
    %v3635 = vrot.slane %v2512, 5
    %v3636 = vsel %vm1016, %v3634, %v3635
    %v3637 = vrot.slane %v3635, 4
    %v3638 = vrot.slane %v2549, 5
    %v3639 = vsel %vm1016, %v3637, %v3638
    %v3640 = vrot.slane %v3350, 5
    %v3641 = vrot.slane %v3640, 4
    %v3642 = vrot.slane %v2514, 5
    %v3643 = vsel %vm1016, %v3641, %v3642
    %v3644 = vrot.slane %v3642, 4
    %v3645 = vrot.slane %v2550, 5
    %v3646 = vsel %vm1016, %v3644, %v3645
    %v3647 = vrot.slane %v3351, 5
    %v3648 = vrot.slane %v3647, 4
    %v3649 = vrot.slane %v2516, 5
    %v3650 = vsel %vm1016, %v3648, %v3649
    %v3651 = vrot.slane %v3649, 4
    %v3652 = vrot.slane %v2551, 5
    %v3653 = vsel %vm1016, %v3651, %v3652
    %v3654 = vrot.slane %v3352, 5
    %v3655 = vrot.slane %v3654, 4
    %v3656 = vrot.slane %v2518, 5
    %v3657 = vsel %vm1016, %v3655, %v3656
    %v3658 = vrot.slane %v3656, 4
    %v3659 = vrot.slane %v2552, 5
    %v3660 = vsel %vm1016, %v3658, %v3659
    %v3661 = vrot.slane %v3353, 5
    %v3662 = vrot.slane %v3661, 4
    %v3663 = vrot.slane %v2520, 5
    %v3664 = vsel %vm1016, %v3662, %v3663
    %v3665 = vrot.slane %v3663, 4
    %v3666 = vrot.slane %v2553, 5
    %v3667 = vsel %vm1016, %v3665, %v3666
    %v3668 = vrot.slane %v3354, 5
    %v3669 = vrot.slane %v3668, 4
    %v3670 = vrot.slane %v2522, 5
    %v3671 = vsel %vm1016, %v3669, %v3670
    %v3672 = vrot.slane %v3670, 4
    %v3673 = vrot.slane %v2554, 5
    %v3674 = vsel %vm1016, %v3672, %v3673
    %v3707 = vunpack.c.l.b16 %v19
    %v3708 = vunpack.c.l.b16 %v20
    %v3709 = vunpack.c.l.b16 %v21
    %v3710 = vunpack.c.l.b16 %v22
    %v3711 = vunpack.c.l.b16 %v23
    %v3712 = vunpack.c.l.b16 %v24
    %v3713 = vunpack.c.l.b16 %v25
    %v3714 = vunpack.c.l.b16 %v26
    %v3715 = vunpack.c.l.b16 %v27
    %v3716 = vunpack.c.l.b16 %v28
    %v3717 = vunpack.c.l.b16 %v29
    %v3718 = vunpack.c.l.b16 %v30
    %v3719 = vunpack.c.l.b16 %v31
    %v3720 = vunpack.c.l.b16 %v32
    %v3721 = vunpack.c.l.b16 %v33
    %v3722 = vunpack.c.l.b16 %v34
    %v3723 = vunpack.c.l.b16 %v35
    %v3724 = vunpack.c.l.b16 %v36
    %v3725 = vunpack.c.l.b16 %v37
    %v3726 = vunpack.c.l.b16 %v38
    %v3727 = vunpack.c.l.b16 %v39
    %v3728 = vunpack.c.l.b16 %v40
    %v3729 = vunpack.c.l.b16 %v41
    %v3730 = vunpack.c.l.b16 %v42
    %v3731 = vunpack.c.l.b16 %v43
    %v3732 = vunpack.c.l.b16 %v44
    %v3733 = vunpack.c.l.b16 %v45
    %v3734 = vunpack.c.l.b16 %v46
    %v3735 = vunpack.c.l.b16 %v47
    %v3736 = vunpack.c.l.b16 %v48
    %v3737 = vunpack.c.l.b16 %v49
    %v3738 = vunpack.c.l.b16 %v50
    %v3739 = vunpack.c.l.b16 %v51
    %v3740 = vunpack.c.l.b16 %v52
    %v3741 = vunpack.c.l.b16 %v53
    %v3742 = vunpack.c.l.b16 %v54
    %v3743 = vunpack.c.l.b16 %v55
    %v3744 = vunpack.c.l.b16 %v56
    %v3745 = vunpack.c.l.b16 %v57
    %v3746 = vunpack.c.l.b16 %v58
    %v3747 = vunpack.c.l.b16 %v59
    %v3748 = vunpack.c.l.b16 %v60
    %v3749 = vunpack.c.l.b16 %v61
    %v3750 = vunpack.c.l.b16 %v62
    %v3751 = vunpack.c.l.b16 %v63
    %v3752 = vunpack.c.l.b16 %v64
    %v3753 = vunpack.c.l.b16 %v65
    %v3754 = vunpack.c.l.b16 %v66
    %v3755 = vunpack.c.l.b16 %v67
    %v3756 = vunpack.c.l.b16 %v68
    %v3757 = vunpack.c.l.b16 %v69
    %v3758 = vunpack.c.l.b16 %v70
    %v3759 = vunpack.c.l.b16 %v71
    %v3760 = vunpack.c.l.b16 %v72
    %v3761 = vunpack.c.l.b16 %v73
    %v3762 = vunpack.c.l.b16 %v74
    %v3763 = vunpack.c.l.b16 %v75
    %v3764 = vunpack.c.l.b16 %v76
    %v3765 = vunpack.c.l.b16 %v77
    %v3766 = vunpack.c.l.b16 %v78
    %v3767 = vunpack.c.l.b16 %v79
    %v3768 = vunpack.c.l.b16 %v80
    %v3769 = vunpack.c.l.b16 %v81
    %v3770 = vunpack.c.l.b16 %v82
    %v3771 = vpack.c.b16 %v3708, %v3707
    %v3772 = vpack.c.b16 %v3710, %v3709
    %v3773 = vpack.c.b16 %v3712, %v3711
    %v3774 = vpack.c.b16 %v3714, %v3713
    %v3775 = vpack.c.b16 %v3716, %v3715
    %v3776 = vpack.c.b16 %v3718, %v3717
    %v3777 = vpack.c.b16 %v3720, %v3719
    %v3778 = vpack.c.b16 %v3722, %v3721
    %v3779 = vpack.c.b16 %v3724, %v3723
    %v3780 = vpack.c.b16 %v3726, %v3725
    %v3781 = vpack.c.b16 %v3728, %v3727
    %v3782 = vpack.c.b16 %v3730, %v3729
    %v3783 = vpack.c.b16 %v3732, %v3731
    %v3784 = vpack.c.b16 %v3734, %v3733
    %v3785 = vpack.c.b16 %v3736, %v3735
    %v3786 = vpack.c.b16 %v3738, %v3737
    %v3787 = vpack.c.b16 %v3740, %v3739
    %v3788 = vpack.c.b16 %v3742, %v3741
    %v3789 = vpack.c.b16 %v3744, %v3743
    %v3790 = vpack.c.b16 %v3746, %v3745
    %v3791 = vpack.c.b16 %v3748, %v3747
    %v3792 = vpack.c.b16 %v3750, %v3749
    %v3793 = vpack.c.b16 %v3752, %v3751
    %v3794 = vpack.c.b16 %v3754, %v3753
    %v3795 = vpack.c.b16 %v3756, %v3755
    %v3796 = vpack.c.b16 %v3758, %v3757
    %v3797 = vpack.c.b16 %v3760, %v3759
    %v3798 = vpack.c.b16 %v3762, %v3761
    %v3799 = vpack.c.b16 %v3764, %v3763
    %v3800 = vpack.c.b16 %v3766, %v3765
    %v3801 = vpack.c.b16 %v3768, %v3767
    %v3802 = vpack.c.b16 %v3770, %v3769
    %v3803 = vunpack.c.l.b16 %v131
    %v3804 = vunpack.c.l.b16 %v141
    %v3805 = vunpack.c.l.b16 %v155
    %v3806 = vunpack.c.l.b16 %v165
    %v3807 = vunpack.c.l.b16 %v179
    %v3808 = vunpack.c.l.b16 %v189
    %v3809 = vunpack.c.l.b16 %v203
    %v3810 = vunpack.c.l.b16 %v213
    %v3811 = vunpack.c.l.b16 %v227
    %v3812 = vunpack.c.l.b16 %v237
    %v3813 = vunpack.c.l.b16 %v251
    %v3814 = vunpack.c.l.b16 %v261
    %v3815 = vunpack.c.l.b16 %v275
    %v3816 = vunpack.c.l.b16 %v285
    %v3817 = vunpack.c.l.b16 %v299
    %v3818 = vunpack.c.l.b16 %v309
    %v3819 = vunpack.c.l.b16 %v323
    %v3820 = vunpack.c.l.b16 %v333
    %v3821 = vunpack.c.l.b16 %v347
    %v3822 = vunpack.c.l.b16 %v357
    %v3823 = vunpack.c.l.b16 %v371
    %v3824 = vunpack.c.l.b16 %v381
    %v3825 = vunpack.c.l.b16 %v395
    %v3826 = vunpack.c.l.b16 %v405
    %v3827 = vunpack.c.l.b16 %v419
    %v3828 = vunpack.c.l.b16 %v429
    %v3829 = vunpack.c.l.b16 %v443
    %v3830 = vunpack.c.l.b16 %v453
    %v3831 = vunpack.c.l.b16 %v467
    %v3832 = vunpack.c.l.b16 %v477
    %v3833 = vunpack.c.l.b16 %v491
    %v3834 = vunpack.c.l.b16 %v501
    %v3835 = vunpack.c.l.b16 %v515
    %v3836 = vunpack.c.l.b16 %v525
    %v3837 = vunpack.c.l.b16 %v539
    %v3838 = vunpack.c.l.b16 %v549
    %v3839 = vunpack.c.l.b16 %v563
    %v3840 = vunpack.c.l.b16 %v573
    %v3841 = vunpack.c.l.b16 %v587
    %v3842 = vunpack.c.l.b16 %v597
    %v3843 = vunpack.c.l.b16 %v611
    %v3844 = vunpack.c.l.b16 %v621
    %v3845 = vunpack.c.l.b16 %v635
    %v3846 = vunpack.c.l.b16 %v645
    %v3847 = vunpack.c.l.b16 %v659
    %v3848 = vunpack.c.l.b16 %v669
    %v3849 = vunpack.c.l.b16 %v683
    %v3850 = vunpack.c.l.b16 %v693
    %v3851 = vunpack.c.l.b16 %v707
    %v3852 = vunpack.c.l.b16 %v717
    %v3853 = vunpack.c.l.b16 %v731
    %v3854 = vunpack.c.l.b16 %v741
    %v3855 = vunpack.c.l.b16 %v755
    %v3856 = vunpack.c.l.b16 %v765
    %v3857 = vunpack.c.l.b16 %v779
    %v3858 = vunpack.c.l.b16 %v789
    %v3859 = vunpack.c.l.b16 %v803
    %v3860 = vunpack.c.l.b16 %v813
    %v3861 = vunpack.c.l.b16 %v827
    %v3862 = vunpack.c.l.b16 %v837
    %v3863 = vunpack.c.l.b16 %v851
    %v3864 = vunpack.c.l.b16 %v861
    %v3865 = vunpack.c.l.b16 %v875
    %v3866 = vunpack.c.l.b16 %v885
    %v3867 = vpack.c.b16 %v3804, %v3803
    %v3868 = vpack.c.b16 %v3806, %v3805
    %v3869 = vpack.c.b16 %v3808, %v3807
    %v3870 = vpack.c.b16 %v3810, %v3809
    %v3871 = vpack.c.b16 %v3812, %v3811
    %v3872 = vpack.c.b16 %v3814, %v3813
    %v3873 = vpack.c.b16 %v3816, %v3815
    %v3874 = vpack.c.b16 %v3818, %v3817
    %v3875 = vpack.c.b16 %v3820, %v3819
    %v3876 = vpack.c.b16 %v3822, %v3821
    %v3877 = vpack.c.b16 %v3824, %v3823
    %v3878 = vpack.c.b16 %v3826, %v3825
    %v3879 = vpack.c.b16 %v3828, %v3827
    %v3880 = vpack.c.b16 %v3830, %v3829
    %v3881 = vpack.c.b16 %v3832, %v3831
    %v3882 = vpack.c.b16 %v3834, %v3833
    %v3883 = vpack.c.b16 %v3836, %v3835
    %v3884 = vpack.c.b16 %v3838, %v3837
    %v3885 = vpack.c.b16 %v3840, %v3839
    %v3886 = vpack.c.b16 %v3842, %v3841
    %v3887 = vpack.c.b16 %v3844, %v3843
    %v3888 = vpack.c.b16 %v3846, %v3845
    %v3889 = vpack.c.b16 %v3848, %v3847
    %v3890 = vpack.c.b16 %v3850, %v3849
    %v3891 = vpack.c.b16 %v3852, %v3851
    %v3892 = vpack.c.b16 %v3854, %v3853
    %v3893 = vpack.c.b16 %v3856, %v3855
    %v3894 = vpack.c.b16 %v3858, %v3857
    %v3895 = vpack.c.b16 %v3860, %v3859
    %v3896 = vpack.c.b16 %v3862, %v3861
    %v3897 = vpack.c.b16 %v3864, %v3863
    %v3898 = vpack.c.b16 %v3866, %v3865
    %3899 = vrot.lane.b32.xlu0 %v3867, 4
    %v3900 = vpop.permute.xlu0 %3899
    %3901 = vrot.lane.b32.xlu0 %v3868, 4
    %v3902 = vpop.permute.xlu0 %3901
    %3903 = vrot.lane.b32.xlu0 %v3869, 4
    %v3904 = vpop.permute.xlu0 %3903
    %3905 = vrot.lane.b32.xlu0 %v3870, 4
    %v3906 = vpop.permute.xlu0 %3905
    %3907 = vrot.lane.b32.xlu0 %v3871, 4
    %v3908 = vpop.permute.xlu0 %3907
    %3909 = vrot.lane.b32.xlu0 %v3872, 4
    %v3910 = vpop.permute.xlu0 %3909
    %3911 = vrot.lane.b32.xlu0 %v3873, 4
    %v3912 = vpop.permute.xlu0 %3911
    %3913 = vrot.lane.b32.xlu0 %v3874, 4
    %v3914 = vpop.permute.xlu0 %3913
    %3915 = vrot.lane.b32.xlu0 %v3875, 4
    %v3916 = vpop.permute.xlu0 %3915
    %3917 = vrot.lane.b32.xlu0 %v3876, 4
    %v3918 = vpop.permute.xlu0 %3917
    %3919 = vrot.lane.b32.xlu0 %v3877, 4
    %v3920 = vpop.permute.xlu0 %3919
    %3921 = vrot.lane.b32.xlu0 %v3878, 4
    %v3922 = vpop.permute.xlu0 %3921
    %3923 = vrot.lane.b32.xlu0 %v3879, 4
    %v3924 = vpop.permute.xlu0 %3923
    %3925 = vrot.lane.b32.xlu0 %v3880, 4
    %v3926 = vpop.permute.xlu0 %3925
    %3927 = vrot.lane.b32.xlu0 %v3881, 4
    %v3928 = vpop.permute.xlu0 %3927
    %3929 = vrot.lane.b32.xlu0 %v3882, 4
    %v3930 = vpop.permute.xlu0 %3929
    %3931 = vrot.lane.b32.xlu0 %v3883, 4
    %v3932 = vpop.permute.xlu0 %3931
    %3933 = vrot.lane.b32.xlu0 %v3884, 4
    %v3934 = vpop.permute.xlu0 %3933
    %3935 = vrot.lane.b32.xlu0 %v3885, 4
    %v3936 = vpop.permute.xlu0 %3935
    %3937 = vrot.lane.b32.xlu0 %v3886, 4
    %v3938 = vpop.permute.xlu0 %3937
    %3939 = vrot.lane.b32.xlu0 %v3887, 4
    %v3940 = vpop.permute.xlu0 %3939
    %3941 = vrot.lane.b32.xlu0 %v3888, 4
    %v3942 = vpop.permute.xlu0 %3941
    %3943 = vrot.lane.b32.xlu0 %v3889, 4
    %v3944 = vpop.permute.xlu0 %3943
    %3945 = vrot.lane.b32.xlu0 %v3890, 4
    %v3946 = vpop.permute.xlu0 %3945
    %3947 = vrot.lane.b32.xlu0 %v3891, 4
    %v3948 = vpop.permute.xlu0 %3947
    %3949 = vrot.lane.b32.xlu0 %v3892, 4
    %v3950 = vpop.permute.xlu0 %3949
    %3951 = vrot.lane.b32.xlu0 %v3893, 4
    %v3952 = vpop.permute.xlu0 %3951
    %3953 = vrot.lane.b32.xlu0 %v3894, 4
    %v3954 = vpop.permute.xlu0 %3953
    %3955 = vrot.lane.b32.xlu0 %v3895, 4
    %v3956 = vpop.permute.xlu0 %3955
    %3957 = vrot.lane.b32.xlu0 %v3896, 4
    %v3958 = vpop.permute.xlu0 %3957
    %3959 = vrot.lane.b32.xlu0 %v3897, 4
    %v3960 = vpop.permute.xlu0 %3959
    %3961 = vrot.lane.b32.xlu0 %v3898, 4
    %v3962 = vpop.permute.xlu0 %3961
    %v3963 = vunpack.c.l.b16 %v1020
    %v3964 = vunpack.c.l.b16 %v1023
    %v3965 = vunpack.c.l.b16 %v1027
    %v3966 = vunpack.c.l.b16 %v1030
    %v3967 = vunpack.c.l.b16 %v1034
    %v3968 = vunpack.c.l.b16 %v1037
    %v3969 = vunpack.c.l.b16 %v1041
    %v3970 = vunpack.c.l.b16 %v1044
    %v3971 = vunpack.c.l.b16 %v1048
    %v3972 = vunpack.c.l.b16 %v1051
    %v3973 = vunpack.c.l.b16 %v1055
    %v3974 = vunpack.c.l.b16 %v1058
    %v3975 = vunpack.c.l.b16 %v1062
    %v3976 = vunpack.c.l.b16 %v1065
    %v3977 = vunpack.c.l.b16 %v1069
    %v3978 = vunpack.c.l.b16 %v1072
    %v3979 = vunpack.c.l.b16 %v1076
    %v3980 = vunpack.c.l.b16 %v1079
    %v3981 = vunpack.c.l.b16 %v1083
    %v3982 = vunpack.c.l.b16 %v1086
    %v3983 = vunpack.c.l.b16 %v1090
    %v3984 = vunpack.c.l.b16 %v1093
    %v3985 = vunpack.c.l.b16 %v1097
    %v3986 = vunpack.c.l.b16 %v1100
    %v3987 = vunpack.c.l.b16 %v1104
    %v3988 = vunpack.c.l.b16 %v1107
    %v3989 = vunpack.c.l.b16 %v1111
    %v3990 = vunpack.c.l.b16 %v1114
    %v3991 = vunpack.c.l.b16 %v1118
    %v3992 = vunpack.c.l.b16 %v1121
    %v3993 = vunpack.c.l.b16 %v1125
    %v3994 = vunpack.c.l.b16 %v1128
    %v3995 = vunpack.c.l.b16 %v1132
    %v3996 = vunpack.c.l.b16 %v1135
    %v3997 = vunpack.c.l.b16 %v1139
    %v3998 = vunpack.c.l.b16 %v1142
    %v3999 = vunpack.c.l.b16 %v1146
    %v4000 = vunpack.c.l.b16 %v1149
    %v4001 = vunpack.c.l.b16 %v1153
    %v4002 = vunpack.c.l.b16 %v1156
    %v4003 = vunpack.c.l.b16 %v1160
    %v4004 = vunpack.c.l.b16 %v1163
    %v4005 = vunpack.c.l.b16 %v1167
    %v4006 = vunpack.c.l.b16 %v1170
    %v4007 = vunpack.c.l.b16 %v1174
    %v4008 = vunpack.c.l.b16 %v1177
    %v4009 = vunpack.c.l.b16 %v1181
    %v4010 = vunpack.c.l.b16 %v1184
    %v4011 = vunpack.c.l.b16 %v1188
    %v4012 = vunpack.c.l.b16 %v1191
    %v4013 = vunpack.c.l.b16 %v1195
    %v4014 = vunpack.c.l.b16 %v1198
    %v4015 = vunpack.c.l.b16 %v1202
    %v4016 = vunpack.c.l.b16 %v1205
    %v4017 = vunpack.c.l.b16 %v1209
    %v4018 = vunpack.c.l.b16 %v1212
    %v4019 = vunpack.c.l.b16 %v1216
    %v4020 = vunpack.c.l.b16 %v1219
    %v4021 = vunpack.c.l.b16 %v1223
    %v4022 = vunpack.c.l.b16 %v1226
    %v4023 = vunpack.c.l.b16 %v1230
    %v4024 = vunpack.c.l.b16 %v1233
    %v4025 = vunpack.c.l.b16 %v1237
    %v4026 = vunpack.c.l.b16 %v1240
    %v4027 = vpack.c.b16 %v3964, %v3963
    %v4028 = vpack.c.b16 %v3966, %v3965
    %v4029 = vpack.c.b16 %v3968, %v3967
    %v4030 = vpack.c.b16 %v3970, %v3969
    %v4031 = vpack.c.b16 %v3972, %v3971
    %v4032 = vpack.c.b16 %v3974, %v3973
    %v4033 = vpack.c.b16 %v3976, %v3975
    %v4034 = vpack.c.b16 %v3978, %v3977
    %v4035 = vpack.c.b16 %v3980, %v3979
    %v4036 = vpack.c.b16 %v3982, %v3981
    %v4037 = vpack.c.b16 %v3984, %v3983
    %v4038 = vpack.c.b16 %v3986, %v3985
    %v4039 = vpack.c.b16 %v3988, %v3987
    %v4040 = vpack.c.b16 %v3990, %v3989
    %v4041 = vpack.c.b16 %v3992, %v3991
    %v4042 = vpack.c.b16 %v3994, %v3993
    %v4043 = vpack.c.b16 %v3996, %v3995
    %v4044 = vpack.c.b16 %v3998, %v3997
    %v4045 = vpack.c.b16 %v4000, %v3999
    %v4046 = vpack.c.b16 %v4002, %v4001
    %v4047 = vpack.c.b16 %v4004, %v4003
    %v4048 = vpack.c.b16 %v4006, %v4005
    %v4049 = vpack.c.b16 %v4008, %v4007
    %v4050 = vpack.c.b16 %v4010, %v4009
    %v4051 = vpack.c.b16 %v4012, %v4011
    %v4052 = vpack.c.b16 %v4014, %v4013
    %v4053 = vpack.c.b16 %v4016, %v4015
    %v4054 = vpack.c.b16 %v4018, %v4017
    %v4055 = vpack.c.b16 %v4020, %v4019
    %v4056 = vpack.c.b16 %v4022, %v4021
    %v4057 = vpack.c.b16 %v4024, %v4023
    %v4058 = vpack.c.b16 %v4026, %v4025
    %4059 = vrot.lane.b32.xlu0 %v4027, 8
    %v4060 = vpop.permute.xlu0 %4059
    %4061 = vrot.lane.b32.xlu0 %v4028, 8
    %v4062 = vpop.permute.xlu0 %4061
    %4063 = vrot.lane.b32.xlu0 %v4029, 8
    %v4064 = vpop.permute.xlu0 %4063
    %4065 = vrot.lane.b32.xlu0 %v4030, 8
    %v4066 = vpop.permute.xlu0 %4065
    %4067 = vrot.lane.b32.xlu0 %v4031, 8
    %v4068 = vpop.permute.xlu0 %4067
    %4069 = vrot.lane.b32.xlu0 %v4032, 8
    %v4070 = vpop.permute.xlu0 %4069
    %4071 = vrot.lane.b32.xlu0 %v4033, 8
    %v4072 = vpop.permute.xlu0 %4071
    %4073 = vrot.lane.b32.xlu0 %v4034, 8
    %v4074 = vpop.permute.xlu0 %4073
    %4075 = vrot.lane.b32.xlu0 %v4035, 8
    %v4076 = vpop.permute.xlu0 %4075
    %4077 = vrot.lane.b32.xlu0 %v4036, 8
    %v4078 = vpop.permute.xlu0 %4077
    %4079 = vrot.lane.b32.xlu0 %v4037, 8
    %v4080 = vpop.permute.xlu0 %4079
    %4081 = vrot.lane.b32.xlu0 %v4038, 8
    %v4082 = vpop.permute.xlu0 %4081
    %4083 = vrot.lane.b32.xlu0 %v4039, 8
    %v4084 = vpop.permute.xlu0 %4083
    %4085 = vrot.lane.b32.xlu0 %v4040, 8
    %v4086 = vpop.permute.xlu0 %4085
    %4087 = vrot.lane.b32.xlu0 %v4041, 8
    %v4088 = vpop.permute.xlu0 %4087
    %4089 = vrot.lane.b32.xlu0 %v4042, 8
    %v4090 = vpop.permute.xlu0 %4089
    %4091 = vrot.lane.b32.xlu0 %v4043, 8
    %v4092 = vpop.permute.xlu0 %4091
    %4093 = vrot.lane.b32.xlu0 %v4044, 8
    %v4094 = vpop.permute.xlu0 %4093
    %4095 = vrot.lane.b32.xlu0 %v4045, 8
    %v4096 = vpop.permute.xlu0 %4095
    %4097 = vrot.lane.b32.xlu0 %v4046, 8
    %v4098 = vpop.permute.xlu0 %4097
    %4099 = vrot.lane.b32.xlu0 %v4047, 8
    %v4100 = vpop.permute.xlu0 %4099
    %4101 = vrot.lane.b32.xlu0 %v4048, 8
    %v4102 = vpop.permute.xlu0 %4101
    %4103 = vrot.lane.b32.xlu0 %v4049, 8
    %v4104 = vpop.permute.xlu0 %4103
    %4105 = vrot.lane.b32.xlu0 %v4050, 8
    %v4106 = vpop.permute.xlu0 %4105
    %4107 = vrot.lane.b32.xlu0 %v4051, 8
    %v4108 = vpop.permute.xlu0 %4107
    %4109 = vrot.lane.b32.xlu0 %v4052, 8
    %v4110 = vpop.permute.xlu0 %4109
    %4111 = vrot.lane.b32.xlu0 %v4053, 8
    %v4112 = vpop.permute.xlu0 %4111
    %4113 = vrot.lane.b32.xlu0 %v4054, 8
    %v4114 = vpop.permute.xlu0 %4113
    %4115 = vrot.lane.b32.xlu0 %v4055, 8
    %v4116 = vpop.permute.xlu0 %4115
    %4117 = vrot.lane.b32.xlu0 %v4056, 8
    %v4118 = vpop.permute.xlu0 %4117
    %4119 = vrot.lane.b32.xlu0 %v4057, 8
    %v4120 = vpop.permute.xlu0 %4119
    %4121 = vrot.lane.b32.xlu0 %v4058, 8
    %v4122 = vpop.permute.xlu0 %4121
    %v4155 = vunpack.c.l.b16 %v1242
    %v4156 = vunpack.c.l.b16 %v1243
    %v4157 = vunpack.c.l.b16 %v1244
    %v4158 = vunpack.c.l.b16 %v1245
    %v4159 = vunpack.c.l.b16 %v1246
    %v4160 = vunpack.c.l.b16 %v1247
    %v4161 = vunpack.c.l.b16 %v1248
    %v4162 = vunpack.c.l.b16 %v1249
    %v4163 = vunpack.c.l.b16 %v1250
    %v4164 = vunpack.c.l.b16 %v1251
    %v4165 = vunpack.c.l.b16 %v1252
    %v4166 = vunpack.c.l.b16 %v1253
    %v4167 = vunpack.c.l.b16 %v1254
    %v4168 = vunpack.c.l.b16 %v1255
    %v4169 = vunpack.c.l.b16 %v1256
    %v4170 = vunpack.c.l.b16 %v1257
    %v4171 = vunpack.c.l.b16 %v1258
    %v4172 = vunpack.c.l.b16 %v1259
    %v4173 = vunpack.c.l.b16 %v1260
    %v4174 = vunpack.c.l.b16 %v1261
    %v4175 = vunpack.c.l.b16 %v1262
    %v4176 = vunpack.c.l.b16 %v1263
    %v4177 = vunpack.c.l.b16 %v1264
    %v4178 = vunpack.c.l.b16 %v1265
    %v4179 = vunpack.c.l.b16 %v1266
    %v4180 = vunpack.c.l.b16 %v1267
    %v4181 = vunpack.c.l.b16 %v1268
    %v4182 = vunpack.c.l.b16 %v1269
    %v4183 = vunpack.c.l.b16 %v1270
    %v4184 = vunpack.c.l.b16 %v1271
    %v4185 = vunpack.c.l.b16 %v1272
    %v4186 = vunpack.c.l.b16 %v1273
    %v4187 = vunpack.c.l.b16 %v1274
    %v4188 = vunpack.c.l.b16 %v1275
    %v4189 = vunpack.c.l.b16 %v1276
    %v4190 = vunpack.c.l.b16 %v1277
    %v4191 = vunpack.c.l.b16 %v1278
    %v4192 = vunpack.c.l.b16 %v1279
    %v4193 = vunpack.c.l.b16 %v1280
    %v4194 = vunpack.c.l.b16 %v1281
    %v4195 = vunpack.c.l.b16 %v1282
    %v4196 = vunpack.c.l.b16 %v1283
    %v4197 = vunpack.c.l.b16 %v1284
    %v4198 = vunpack.c.l.b16 %v1285
    %v4199 = vunpack.c.l.b16 %v1286
    %v4200 = vunpack.c.l.b16 %v1287
    %v4201 = vunpack.c.l.b16 %v1288
    %v4202 = vunpack.c.l.b16 %v1289
    %v4203 = vunpack.c.l.b16 %v1290
    %v4204 = vunpack.c.l.b16 %v1291
    %v4205 = vunpack.c.l.b16 %v1292
    %v4206 = vunpack.c.l.b16 %v1293
    %v4207 = vunpack.c.l.b16 %v1294
    %v4208 = vunpack.c.l.b16 %v1295
    %v4209 = vunpack.c.l.b16 %v1296
    %v4210 = vunpack.c.l.b16 %v1297
    %v4211 = vunpack.c.l.b16 %v1298
    %v4212 = vunpack.c.l.b16 %v1299
    %v4213 = vunpack.c.l.b16 %v1300
    %v4214 = vunpack.c.l.b16 %v1301
    %v4215 = vunpack.c.l.b16 %v1302
    %v4216 = vunpack.c.l.b16 %v1303
    %v4217 = vunpack.c.l.b16 %v1304
    %v4218 = vunpack.c.l.b16 %v1305
    %v4219 = vpack.c.b16 %v4156, %v4155
    %v4220 = vpack.c.b16 %v4158, %v4157
    %v4221 = vpack.c.b16 %v4160, %v4159
    %v4222 = vpack.c.b16 %v4162, %v4161
    %v4223 = vpack.c.b16 %v4164, %v4163
    %v4224 = vpack.c.b16 %v4166, %v4165
    %v4225 = vpack.c.b16 %v4168, %v4167
    %v4226 = vpack.c.b16 %v4170, %v4169
    %v4227 = vpack.c.b16 %v4172, %v4171
    %v4228 = vpack.c.b16 %v4174, %v4173
    %v4229 = vpack.c.b16 %v4176, %v4175
    %v4230 = vpack.c.b16 %v4178, %v4177
    %v4231 = vpack.c.b16 %v4180, %v4179
    %v4232 = vpack.c.b16 %v4182, %v4181
    %v4233 = vpack.c.b16 %v4184, %v4183
    %v4234 = vpack.c.b16 %v4186, %v4185
    %v4235 = vpack.c.b16 %v4188, %v4187
    %v4236 = vpack.c.b16 %v4190, %v4189
    %v4237 = vpack.c.b16 %v4192, %v4191
    %v4238 = vpack.c.b16 %v4194, %v4193
    %v4239 = vpack.c.b16 %v4196, %v4195
    %v4240 = vpack.c.b16 %v4198, %v4197
    %v4241 = vpack.c.b16 %v4200, %v4199
    %v4242 = vpack.c.b16 %v4202, %v4201
    %v4243 = vpack.c.b16 %v4204, %v4203
    %v4244 = vpack.c.b16 %v4206, %v4205
    %v4245 = vpack.c.b16 %v4208, %v4207
    %v4246 = vpack.c.b16 %v4210, %v4209
    %v4247 = vpack.c.b16 %v4212, %v4211
    %v4248 = vpack.c.b16 %v4214, %v4213
    %v4249 = vpack.c.b16 %v4216, %v4215
    %v4250 = vpack.c.b16 %v4218, %v4217
    %4251 = vrot.lane.b32.xlu0 %v4219, 12
    %v4252 = vpop.permute.xlu0 %4251
    %4253 = vrot.lane.b32.xlu0 %v4220, 12
    %v4254 = vpop.permute.xlu0 %4253
    %4255 = vrot.lane.b32.xlu0 %v4221, 12
    %v4256 = vpop.permute.xlu0 %4255
    %4257 = vrot.lane.b32.xlu0 %v4222, 12
    %v4258 = vpop.permute.xlu0 %4257
    %4259 = vrot.lane.b32.xlu0 %v4223, 12
    %v4260 = vpop.permute.xlu0 %4259
    %4261 = vrot.lane.b32.xlu0 %v4224, 12
    %v4262 = vpop.permute.xlu0 %4261
    %4263 = vrot.lane.b32.xlu0 %v4225, 12
    %v4264 = vpop.permute.xlu0 %4263
    %4265 = vrot.lane.b32.xlu0 %v4226, 12
    %v4266 = vpop.permute.xlu0 %4265
    %4267 = vrot.lane.b32.xlu0 %v4227, 12
    %v4268 = vpop.permute.xlu0 %4267
    %4269 = vrot.lane.b32.xlu0 %v4228, 12
    %v4270 = vpop.permute.xlu0 %4269
    %4271 = vrot.lane.b32.xlu0 %v4229, 12
    %v4272 = vpop.permute.xlu0 %4271
    %4273 = vrot.lane.b32.xlu0 %v4230, 12
    %v4274 = vpop.permute.xlu0 %4273
    %4275 = vrot.lane.b32.xlu0 %v4231, 12
    %v4276 = vpop.permute.xlu0 %4275
    %4277 = vrot.lane.b32.xlu0 %v4232, 12
    %v4278 = vpop.permute.xlu0 %4277
    %4279 = vrot.lane.b32.xlu0 %v4233, 12
    %v4280 = vpop.permute.xlu0 %4279
    %4281 = vrot.lane.b32.xlu0 %v4234, 12
    %v4282 = vpop.permute.xlu0 %4281
    %4283 = vrot.lane.b32.xlu0 %v4235, 12
    %v4284 = vpop.permute.xlu0 %4283
    %4285 = vrot.lane.b32.xlu0 %v4236, 12
    %v4286 = vpop.permute.xlu0 %4285
    %4287 = vrot.lane.b32.xlu0 %v4237, 12
    %v4288 = vpop.permute.xlu0 %4287
    %4289 = vrot.lane.b32.xlu0 %v4238, 12
    %v4290 = vpop.permute.xlu0 %4289
    %4291 = vrot.lane.b32.xlu0 %v4239, 12
    %v4292 = vpop.permute.xlu0 %4291
    %4293 = vrot.lane.b32.xlu0 %v4240, 12
    %v4294 = vpop.permute.xlu0 %4293
    %4295 = vrot.lane.b32.xlu0 %v4241, 12
    %v4296 = vpop.permute.xlu0 %4295
    %4297 = vrot.lane.b32.xlu0 %v4242, 12
    %v4298 = vpop.permute.xlu0 %4297
    %4299 = vrot.lane.b32.xlu0 %v4243, 12
    %v4300 = vpop.permute.xlu0 %4299
    %4301 = vrot.lane.b32.xlu0 %v4244, 12
    %v4302 = vpop.permute.xlu0 %4301
    %4303 = vrot.lane.b32.xlu0 %v4245, 12
    %v4304 = vpop.permute.xlu0 %4303
    %4305 = vrot.lane.b32.xlu0 %v4246, 12
    %v4306 = vpop.permute.xlu0 %4305
    %4307 = vrot.lane.b32.xlu0 %v4247, 12
    %v4308 = vpop.permute.xlu0 %4307
    %4309 = vrot.lane.b32.xlu0 %v4248, 12
    %v4310 = vpop.permute.xlu0 %4309
    %4311 = vrot.lane.b32.xlu0 %v4249, 12
    %v4312 = vpop.permute.xlu0 %4311
    %4313 = vrot.lane.b32.xlu0 %v4250, 12
    %v4314 = vpop.permute.xlu0 %4313
    %v4315 = vunpack.c.l.b16 %v1351
    %v4316 = vunpack.c.l.b16 %v1361
    %v4317 = vunpack.c.l.b16 %v1375
    %v4318 = vunpack.c.l.b16 %v1385
    %v4319 = vunpack.c.l.b16 %v1399
    %v4320 = vunpack.c.l.b16 %v1409
    %v4321 = vunpack.c.l.b16 %v1423
    %v4322 = vunpack.c.l.b16 %v1433
    %v4323 = vunpack.c.l.b16 %v1447
    %v4324 = vunpack.c.l.b16 %v1457
    %v4325 = vunpack.c.l.b16 %v1471
    %v4326 = vunpack.c.l.b16 %v1481
    %v4327 = vunpack.c.l.b16 %v1495
    %v4328 = vunpack.c.l.b16 %v1505
    %v4329 = vunpack.c.l.b16 %v1519
    %v4330 = vunpack.c.l.b16 %v1529
    %v4331 = vunpack.c.l.b16 %v1543
    %v4332 = vunpack.c.l.b16 %v1553
    %v4333 = vunpack.c.l.b16 %v1567
    %v4334 = vunpack.c.l.b16 %v1577
    %v4335 = vunpack.c.l.b16 %v1591
    %v4336 = vunpack.c.l.b16 %v1601
    %v4337 = vunpack.c.l.b16 %v1615
    %v4338 = vunpack.c.l.b16 %v1625
    %v4339 = vunpack.c.l.b16 %v1639
    %v4340 = vunpack.c.l.b16 %v1649
    %v4341 = vunpack.c.l.b16 %v1663
    %v4342 = vunpack.c.l.b16 %v1673
    %v4343 = vunpack.c.l.b16 %v1687
    %v4344 = vunpack.c.l.b16 %v1697
    %v4345 = vunpack.c.l.b16 %v1711
    %v4346 = vunpack.c.l.b16 %v1721
    %v4347 = vunpack.c.l.b16 %v1735
    %v4348 = vunpack.c.l.b16 %v1745
    %v4349 = vunpack.c.l.b16 %v1759
    %v4350 = vunpack.c.l.b16 %v1769
    %v4351 = vunpack.c.l.b16 %v1783
    %v4352 = vunpack.c.l.b16 %v1793
    %v4353 = vunpack.c.l.b16 %v1807
    %v4354 = vunpack.c.l.b16 %v1817
    %v4355 = vunpack.c.l.b16 %v1831
    %v4356 = vunpack.c.l.b16 %v1841
    %v4357 = vunpack.c.l.b16 %v1855
    %v4358 = vunpack.c.l.b16 %v1865
    %v4359 = vunpack.c.l.b16 %v1879
    %v4360 = vunpack.c.l.b16 %v1889
    %v4361 = vunpack.c.l.b16 %v1903
    %v4362 = vunpack.c.l.b16 %v1913
    %v4363 = vunpack.c.l.b16 %v1927
    %v4364 = vunpack.c.l.b16 %v1937
    %v4365 = vunpack.c.l.b16 %v1951
    %v4366 = vunpack.c.l.b16 %v1961
    %v4367 = vunpack.c.l.b16 %v1975
    %v4368 = vunpack.c.l.b16 %v1985
    %v4369 = vunpack.c.l.b16 %v1999
    %v4370 = vunpack.c.l.b16 %v2009
    %v4371 = vunpack.c.l.b16 %v2023
    %v4372 = vunpack.c.l.b16 %v2033
    %v4373 = vunpack.c.l.b16 %v2047
    %v4374 = vunpack.c.l.b16 %v2057
    %v4375 = vunpack.c.l.b16 %v2071
    %v4376 = vunpack.c.l.b16 %v2081
    %v4377 = vunpack.c.l.b16 %v2095
    %v4378 = vunpack.c.l.b16 %v2105
    %v4379 = vpack.c.b16 %v4316, %v4315
    %v4380 = vpack.c.b16 %v4318, %v4317
    %v4381 = vpack.c.b16 %v4320, %v4319
    %v4382 = vpack.c.b16 %v4322, %v4321
    %v4383 = vpack.c.b16 %v4324, %v4323
    %v4384 = vpack.c.b16 %v4326, %v4325
    %v4385 = vpack.c.b16 %v4328, %v4327
    %v4386 = vpack.c.b16 %v4330, %v4329
    %v4387 = vpack.c.b16 %v4332, %v4331
    %v4388 = vpack.c.b16 %v4334, %v4333
    %v4389 = vpack.c.b16 %v4336, %v4335
    %v4390 = vpack.c.b16 %v4338, %v4337
    %v4391 = vpack.c.b16 %v4340, %v4339
    %v4392 = vpack.c.b16 %v4342, %v4341
    %v4393 = vpack.c.b16 %v4344, %v4343
    %v4394 = vpack.c.b16 %v4346, %v4345
    %v4395 = vpack.c.b16 %v4348, %v4347
    %v4396 = vpack.c.b16 %v4350, %v4349
    %v4397 = vpack.c.b16 %v4352, %v4351
    %v4398 = vpack.c.b16 %v4354, %v4353
    %v4399 = vpack.c.b16 %v4356, %v4355
    %v4400 = vpack.c.b16 %v4358, %v4357
    %v4401 = vpack.c.b16 %v4360, %v4359
    %v4402 = vpack.c.b16 %v4362, %v4361
    %v4403 = vpack.c.b16 %v4364, %v4363
    %v4404 = vpack.c.b16 %v4366, %v4365
    %v4405 = vpack.c.b16 %v4368, %v4367
    %v4406 = vpack.c.b16 %v4370, %v4369
    %v4407 = vpack.c.b16 %v4372, %v4371
    %v4408 = vpack.c.b16 %v4374, %v4373
    %v4409 = vpack.c.b16 %v4376, %v4375
    %v4410 = vpack.c.b16 %v4378, %v4377
    %4411 = vrot.lane.b32.xlu0 %v4379, 16
    %v4412 = vpop.permute.xlu0 %4411
    %4413 = vrot.lane.b32.xlu0 %v4380, 16
    %v4414 = vpop.permute.xlu0 %4413
    %4415 = vrot.lane.b32.xlu0 %v4381, 16
    %v4416 = vpop.permute.xlu0 %4415
    %4417 = vrot.lane.b32.xlu0 %v4382, 16
    %v4418 = vpop.permute.xlu0 %4417
    %4419 = vrot.lane.b32.xlu0 %v4383, 16
    %v4420 = vpop.permute.xlu0 %4419
    %4421 = vrot.lane.b32.xlu0 %v4384, 16
    %v4422 = vpop.permute.xlu0 %4421
    %4423 = vrot.lane.b32.xlu0 %v4385, 16
    %v4424 = vpop.permute.xlu0 %4423
    %4425 = vrot.lane.b32.xlu0 %v4386, 16
    %v4426 = vpop.permute.xlu0 %4425
    %4427 = vrot.lane.b32.xlu0 %v4387, 16
    %v4428 = vpop.permute.xlu0 %4427
    %4429 = vrot.lane.b32.xlu0 %v4388, 16
    %v4430 = vpop.permute.xlu0 %4429
    %4431 = vrot.lane.b32.xlu0 %v4389, 16
    %v4432 = vpop.permute.xlu0 %4431
    %4433 = vrot.lane.b32.xlu0 %v4390, 16
    %v4434 = vpop.permute.xlu0 %4433
    %4435 = vrot.lane.b32.xlu0 %v4391, 16
    %v4436 = vpop.permute.xlu0 %4435
    %4437 = vrot.lane.b32.xlu0 %v4392, 16
    %v4438 = vpop.permute.xlu0 %4437
    %4439 = vrot.lane.b32.xlu0 %v4393, 16
    %v4440 = vpop.permute.xlu0 %4439
    %4441 = vrot.lane.b32.xlu0 %v4394, 16
    %v4442 = vpop.permute.xlu0 %4441
    %4443 = vrot.lane.b32.xlu0 %v4395, 16
    %v4444 = vpop.permute.xlu0 %4443
    %4445 = vrot.lane.b32.xlu0 %v4396, 16
    %v4446 = vpop.permute.xlu0 %4445
    %4447 = vrot.lane.b32.xlu0 %v4397, 16
    %v4448 = vpop.permute.xlu0 %4447
    %4449 = vrot.lane.b32.xlu0 %v4398, 16
    %v4450 = vpop.permute.xlu0 %4449
    %4451 = vrot.lane.b32.xlu0 %v4399, 16
    %v4452 = vpop.permute.xlu0 %4451
    %4453 = vrot.lane.b32.xlu0 %v4400, 16
    %v4454 = vpop.permute.xlu0 %4453
    %4455 = vrot.lane.b32.xlu0 %v4401, 16
    %v4456 = vpop.permute.xlu0 %4455
    %4457 = vrot.lane.b32.xlu0 %v4402, 16
    %v4458 = vpop.permute.xlu0 %4457
    %4459 = vrot.lane.b32.xlu0 %v4403, 16
    %v4460 = vpop.permute.xlu0 %4459
    %4461 = vrot.lane.b32.xlu0 %v4404, 16
    %v4462 = vpop.permute.xlu0 %4461
    %4463 = vrot.lane.b32.xlu0 %v4405, 16
    %v4464 = vpop.permute.xlu0 %4463
    %4465 = vrot.lane.b32.xlu0 %v4406, 16
    %v4466 = vpop.permute.xlu0 %4465
    %4467 = vrot.lane.b32.xlu0 %v4407, 16
    %v4468 = vpop.permute.xlu0 %4467
    %4469 = vrot.lane.b32.xlu0 %v4408, 16
    %v4470 = vpop.permute.xlu0 %4469
    %4471 = vrot.lane.b32.xlu0 %v4409, 16
    %v4472 = vpop.permute.xlu0 %4471
    %4473 = vrot.lane.b32.xlu0 %v4410, 16
    %v4474 = vpop.permute.xlu0 %4473
    %v4475 = vunpack.c.l.b16 %v2237
    %v4476 = vunpack.c.l.b16 %v2240
    %v4477 = vunpack.c.l.b16 %v2244
    %v4478 = vunpack.c.l.b16 %v2247
    %v4479 = vunpack.c.l.b16 %v2251
    %v4480 = vunpack.c.l.b16 %v2254
    %v4481 = vunpack.c.l.b16 %v2258
    %v4482 = vunpack.c.l.b16 %v2261
    %v4483 = vunpack.c.l.b16 %v2265
    %v4484 = vunpack.c.l.b16 %v2268
    %v4485 = vunpack.c.l.b16 %v2272
    %v4486 = vunpack.c.l.b16 %v2275
    %v4487 = vunpack.c.l.b16 %v2279
    %v4488 = vunpack.c.l.b16 %v2282
    %v4489 = vunpack.c.l.b16 %v2286
    %v4490 = vunpack.c.l.b16 %v2289
    %v4491 = vunpack.c.l.b16 %v2293
    %v4492 = vunpack.c.l.b16 %v2296
    %v4493 = vunpack.c.l.b16 %v2300
    %v4494 = vunpack.c.l.b16 %v2303
    %v4495 = vunpack.c.l.b16 %v2307
    %v4496 = vunpack.c.l.b16 %v2310
    %v4497 = vunpack.c.l.b16 %v2314
    %v4498 = vunpack.c.l.b16 %v2317
    %v4499 = vunpack.c.l.b16 %v2321
    %v4500 = vunpack.c.l.b16 %v2324
    %v4501 = vunpack.c.l.b16 %v2328
    %v4502 = vunpack.c.l.b16 %v2331
    %v4503 = vunpack.c.l.b16 %v2335
    %v4504 = vunpack.c.l.b16 %v2338
    %v4505 = vunpack.c.l.b16 %v2342
    %v4506 = vunpack.c.l.b16 %v2345
    %v4507 = vunpack.c.l.b16 %v2349
    %v4508 = vunpack.c.l.b16 %v2352
    %v4509 = vunpack.c.l.b16 %v2356
    %v4510 = vunpack.c.l.b16 %v2359
    %v4511 = vunpack.c.l.b16 %v2363
    %v4512 = vunpack.c.l.b16 %v2366
    %v4513 = vunpack.c.l.b16 %v2370
    %v4514 = vunpack.c.l.b16 %v2373
    %v4515 = vunpack.c.l.b16 %v2377
    %v4516 = vunpack.c.l.b16 %v2380
    %v4517 = vunpack.c.l.b16 %v2384
    %v4518 = vunpack.c.l.b16 %v2387
    %v4519 = vunpack.c.l.b16 %v2391
    %v4520 = vunpack.c.l.b16 %v2394
    %v4521 = vunpack.c.l.b16 %v2398
    %v4522 = vunpack.c.l.b16 %v2401
    %v4523 = vunpack.c.l.b16 %v2405
    %v4524 = vunpack.c.l.b16 %v2408
    %v4525 = vunpack.c.l.b16 %v2412
    %v4526 = vunpack.c.l.b16 %v2415
    %v4527 = vunpack.c.l.b16 %v2419
    %v4528 = vunpack.c.l.b16 %v2422
    %v4529 = vunpack.c.l.b16 %v2426
    %v4530 = vunpack.c.l.b16 %v2429
    %v4531 = vunpack.c.l.b16 %v2433
    %v4532 = vunpack.c.l.b16 %v2436
    %v4533 = vunpack.c.l.b16 %v2440
    %v4534 = vunpack.c.l.b16 %v2443
    %v4535 = vunpack.c.l.b16 %v2447
    %v4536 = vunpack.c.l.b16 %v2450
    %v4537 = vunpack.c.l.b16 %v2454
    %v4538 = vunpack.c.l.b16 %v2457
    %v4539 = vpack.c.b16 %v4476, %v4475
    %v4540 = vpack.c.b16 %v4478, %v4477
    %v4541 = vpack.c.b16 %v4480, %v4479
    %v4542 = vpack.c.b16 %v4482, %v4481
    %v4543 = vpack.c.b16 %v4484, %v4483
    %v4544 = vpack.c.b16 %v4486, %v4485
    %v4545 = vpack.c.b16 %v4488, %v4487
    %v4546 = vpack.c.b16 %v4490, %v4489
    %v4547 = vpack.c.b16 %v4492, %v4491
    %v4548 = vpack.c.b16 %v4494, %v4493
    %v4549 = vpack.c.b16 %v4496, %v4495
    %v4550 = vpack.c.b16 %v4498, %v4497
    %v4551 = vpack.c.b16 %v4500, %v4499
    %v4552 = vpack.c.b16 %v4502, %v4501
    %v4553 = vpack.c.b16 %v4504, %v4503
    %v4554 = vpack.c.b16 %v4506, %v4505
    %v4555 = vpack.c.b16 %v4508, %v4507
    %v4556 = vpack.c.b16 %v4510, %v4509
    %v4557 = vpack.c.b16 %v4512, %v4511
    %v4558 = vpack.c.b16 %v4514, %v4513
    %v4559 = vpack.c.b16 %v4516, %v4515
    %v4560 = vpack.c.b16 %v4518, %v4517
    %v4561 = vpack.c.b16 %v4520, %v4519
    %v4562 = vpack.c.b16 %v4522, %v4521
    %v4563 = vpack.c.b16 %v4524, %v4523
    %v4564 = vpack.c.b16 %v4526, %v4525
    %v4565 = vpack.c.b16 %v4528, %v4527
    %v4566 = vpack.c.b16 %v4530, %v4529
    %v4567 = vpack.c.b16 %v4532, %v4531
    %v4568 = vpack.c.b16 %v4534, %v4533
    %v4569 = vpack.c.b16 %v4536, %v4535
    %v4570 = vpack.c.b16 %v4538, %v4537
    %4571 = vrot.lane.b32.xlu0 %v4539, 20
    %v4572 = vpop.permute.xlu0 %4571
    %4573 = vrot.lane.b32.xlu0 %v4540, 20
    %v4574 = vpop.permute.xlu0 %4573
    %4575 = vrot.lane.b32.xlu0 %v4541, 20
    %v4576 = vpop.permute.xlu0 %4575
    %4577 = vrot.lane.b32.xlu0 %v4542, 20
    %v4578 = vpop.permute.xlu0 %4577
    %4579 = vrot.lane.b32.xlu0 %v4543, 20
    %v4580 = vpop.permute.xlu0 %4579
    %4581 = vrot.lane.b32.xlu0 %v4544, 20
    %v4582 = vpop.permute.xlu0 %4581
    %4583 = vrot.lane.b32.xlu0 %v4545, 20
    %v4584 = vpop.permute.xlu0 %4583
    %4585 = vrot.lane.b32.xlu0 %v4546, 20
    %v4586 = vpop.permute.xlu0 %4585
    %4587 = vrot.lane.b32.xlu0 %v4547, 20
    %v4588 = vpop.permute.xlu0 %4587
    %4589 = vrot.lane.b32.xlu0 %v4548, 20
    %v4590 = vpop.permute.xlu0 %4589
    %4591 = vrot.lane.b32.xlu0 %v4549, 20
    %v4592 = vpop.permute.xlu0 %4591
    %4593 = vrot.lane.b32.xlu0 %v4550, 20
    %v4594 = vpop.permute.xlu0 %4593
    %4595 = vrot.lane.b32.xlu0 %v4551, 20
    %v4596 = vpop.permute.xlu0 %4595
    %4597 = vrot.lane.b32.xlu0 %v4552, 20
    %v4598 = vpop.permute.xlu0 %4597
    %4599 = vrot.lane.b32.xlu0 %v4553, 20
    %v4600 = vpop.permute.xlu0 %4599
    %4601 = vrot.lane.b32.xlu0 %v4554, 20
    %v4602 = vpop.permute.xlu0 %4601
    %4603 = vrot.lane.b32.xlu0 %v4555, 20
    %v4604 = vpop.permute.xlu0 %4603
    %4605 = vrot.lane.b32.xlu0 %v4556, 20
    %v4606 = vpop.permute.xlu0 %4605
    %4607 = vrot.lane.b32.xlu0 %v4557, 20
    %v4608 = vpop.permute.xlu0 %4607
    %4609 = vrot.lane.b32.xlu0 %v4558, 20
    %v4610 = vpop.permute.xlu0 %4609
    %4611 = vrot.lane.b32.xlu0 %v4559, 20
    %v4612 = vpop.permute.xlu0 %4611
    %4613 = vrot.lane.b32.xlu0 %v4560, 20
    %v4614 = vpop.permute.xlu0 %4613
    %4615 = vrot.lane.b32.xlu0 %v4561, 20
    %v4616 = vpop.permute.xlu0 %4615
    %4617 = vrot.lane.b32.xlu0 %v4562, 20
    %v4618 = vpop.permute.xlu0 %4617
    %4619 = vrot.lane.b32.xlu0 %v4563, 20
    %v4620 = vpop.permute.xlu0 %4619
    %4621 = vrot.lane.b32.xlu0 %v4564, 20
    %v4622 = vpop.permute.xlu0 %4621
    %4623 = vrot.lane.b32.xlu0 %v4565, 20
    %v4624 = vpop.permute.xlu0 %4623
    %4625 = vrot.lane.b32.xlu0 %v4566, 20
    %v4626 = vpop.permute.xlu0 %4625
    %4627 = vrot.lane.b32.xlu0 %v4567, 20
    %v4628 = vpop.permute.xlu0 %4627
    %4629 = vrot.lane.b32.xlu0 %v4568, 20
    %v4630 = vpop.permute.xlu0 %4629
    %4631 = vrot.lane.b32.xlu0 %v4569, 20
    %v4632 = vpop.permute.xlu0 %4631
    %4633 = vrot.lane.b32.xlu0 %v4570, 20
    %v4634 = vpop.permute.xlu0 %4633
    %v4667 = vunpack.c.l.b16 %v2459
    %v4668 = vunpack.c.l.b16 %v2460
    %v4669 = vunpack.c.l.b16 %v2461
    %v4670 = vunpack.c.l.b16 %v2462
    %v4671 = vunpack.c.l.b16 %v2463
    %v4672 = vunpack.c.l.b16 %v2464
    %v4673 = vunpack.c.l.b16 %v2465
    %v4674 = vunpack.c.l.b16 %v2466
    %v4675 = vunpack.c.l.b16 %v2467
    %v4676 = vunpack.c.l.b16 %v2468
    %v4677 = vunpack.c.l.b16 %v2469
    %v4678 = vunpack.c.l.b16 %v2470
    %v4679 = vunpack.c.l.b16 %v2471
    %v4680 = vunpack.c.l.b16 %v2472
    %v4681 = vunpack.c.l.b16 %v2473
    %v4682 = vunpack.c.l.b16 %v2474
    %v4683 = vunpack.c.l.b16 %v2475
    %v4684 = vunpack.c.l.b16 %v2476
    %v4685 = vunpack.c.l.b16 %v2477
    %v4686 = vunpack.c.l.b16 %v2478
    %v4687 = vunpack.c.l.b16 %v2479
    %v4688 = vunpack.c.l.b16 %v2480
    %v4689 = vunpack.c.l.b16 %v2481
    %v4690 = vunpack.c.l.b16 %v2482
    %v4691 = vunpack.c.l.b16 %v2483
    %v4692 = vunpack.c.l.b16 %v2484
    %v4693 = vunpack.c.l.b16 %v2485
    %v4694 = vunpack.c.l.b16 %v2486
    %v4695 = vunpack.c.l.b16 %v2487
    %v4696 = vunpack.c.l.b16 %v2488
    %v4697 = vunpack.c.l.b16 %v2489
    %v4698 = vunpack.c.l.b16 %v2490
    %v4699 = vunpack.c.l.b16 %v2491
    %v4700 = vunpack.c.l.b16 %v2492
    %v4701 = vunpack.c.l.b16 %v2493
    %v4702 = vunpack.c.l.b16 %v2494
    %v4703 = vunpack.c.l.b16 %v2495
    %v4704 = vunpack.c.l.b16 %v2496
    %v4705 = vunpack.c.l.b16 %v2497
    %v4706 = vunpack.c.l.b16 %v2498
    %v4707 = vunpack.c.l.b16 %v2499
    %v4708 = vunpack.c.l.b16 %v2500
    %v4709 = vunpack.c.l.b16 %v2501
    %v4710 = vunpack.c.l.b16 %v2502
    %v4711 = vunpack.c.l.b16 %v2503
    %v4712 = vunpack.c.l.b16 %v2504
    %v4713 = vunpack.c.l.b16 %v2505
    %v4714 = vunpack.c.l.b16 %v2506
    %v4715 = vunpack.c.l.b16 %v2507
    %v4716 = vunpack.c.l.b16 %v2508
    %v4717 = vunpack.c.l.b16 %v2509
    %v4718 = vunpack.c.l.b16 %v2510
    %v4719 = vunpack.c.l.b16 %v2511
    %v4720 = vunpack.c.l.b16 %v2512
    %v4721 = vunpack.c.l.b16 %v2513
    %v4722 = vunpack.c.l.b16 %v2514
    %v4723 = vunpack.c.l.b16 %v2515
    %v4724 = vunpack.c.l.b16 %v2516
    %v4725 = vunpack.c.l.b16 %v2517
    %v4726 = vunpack.c.l.b16 %v2518
    %v4727 = vunpack.c.l.b16 %v2519
    %v4728 = vunpack.c.l.b16 %v2520
    %v4729 = vunpack.c.l.b16 %v2521
    %v4730 = vunpack.c.l.b16 %v2522
    %v4731 = vpack.c.b16 %v4668, %v4667
    %v4732 = vpack.c.b16 %v4670, %v4669
    %v4733 = vpack.c.b16 %v4672, %v4671
    %v4734 = vpack.c.b16 %v4674, %v4673
    %v4735 = vpack.c.b16 %v4676, %v4675
    %v4736 = vpack.c.b16 %v4678, %v4677
    %v4737 = vpack.c.b16 %v4680, %v4679
    %v4738 = vpack.c.b16 %v4682, %v4681
    %v4739 = vpack.c.b16 %v4684, %v4683
    %v4740 = vpack.c.b16 %v4686, %v4685
    %v4741 = vpack.c.b16 %v4688, %v4687
    %v4742 = vpack.c.b16 %v4690, %v4689
    %v4743 = vpack.c.b16 %v4692, %v4691
    %v4744 = vpack.c.b16 %v4694, %v4693
    %v4745 = vpack.c.b16 %v4696, %v4695
    %v4746 = vpack.c.b16 %v4698, %v4697
    %v4747 = vpack.c.b16 %v4700, %v4699
    %v4748 = vpack.c.b16 %v4702, %v4701
    %v4749 = vpack.c.b16 %v4704, %v4703
    %v4750 = vpack.c.b16 %v4706, %v4705
    %v4751 = vpack.c.b16 %v4708, %v4707
    %v4752 = vpack.c.b16 %v4710, %v4709
    %v4753 = vpack.c.b16 %v4712, %v4711
    %v4754 = vpack.c.b16 %v4714, %v4713
    %v4755 = vpack.c.b16 %v4716, %v4715
    %v4756 = vpack.c.b16 %v4718, %v4717
    %v4757 = vpack.c.b16 %v4720, %v4719
    %v4758 = vpack.c.b16 %v4722, %v4721
    %v4759 = vpack.c.b16 %v4724, %v4723
    %v4760 = vpack.c.b16 %v4726, %v4725
    %v4761 = vpack.c.b16 %v4728, %v4727
    %v4762 = vpack.c.b16 %v4730, %v4729
    %4763 = vrot.lane.b32.xlu0 %v4731, 24
    %v4764 = vpop.permute.xlu0 %4763
    %4765 = vrot.lane.b32.xlu0 %v4732, 24
    %v4766 = vpop.permute.xlu0 %4765
    %4767 = vrot.lane.b32.xlu0 %v4733, 24
    %v4768 = vpop.permute.xlu0 %4767
    %4769 = vrot.lane.b32.xlu0 %v4734, 24
    %v4770 = vpop.permute.xlu0 %4769
    %4771 = vrot.lane.b32.xlu0 %v4735, 24
    %v4772 = vpop.permute.xlu0 %4771
    %4773 = vrot.lane.b32.xlu0 %v4736, 24
    %v4774 = vpop.permute.xlu0 %4773
    %4775 = vrot.lane.b32.xlu0 %v4737, 24
    %v4776 = vpop.permute.xlu0 %4775
    %4777 = vrot.lane.b32.xlu0 %v4738, 24
    %v4778 = vpop.permute.xlu0 %4777
    %4779 = vrot.lane.b32.xlu0 %v4739, 24
    %v4780 = vpop.permute.xlu0 %4779
    %4781 = vrot.lane.b32.xlu0 %v4740, 24
    %v4782 = vpop.permute.xlu0 %4781
    %4783 = vrot.lane.b32.xlu0 %v4741, 24
    %v4784 = vpop.permute.xlu0 %4783
    %4785 = vrot.lane.b32.xlu0 %v4742, 24
    %v4786 = vpop.permute.xlu0 %4785
    %4787 = vrot.lane.b32.xlu0 %v4743, 24
    %v4788 = vpop.permute.xlu0 %4787
    %4789 = vrot.lane.b32.xlu0 %v4744, 24
    %v4790 = vpop.permute.xlu0 %4789
    %4791 = vrot.lane.b32.xlu0 %v4745, 24
    %v4792 = vpop.permute.xlu0 %4791
    %4793 = vrot.lane.b32.xlu0 %v4746, 24
    %v4794 = vpop.permute.xlu0 %4793
    %4795 = vrot.lane.b32.xlu0 %v4747, 24
    %v4796 = vpop.permute.xlu0 %4795
    %4797 = vrot.lane.b32.xlu0 %v4748, 24
    %v4798 = vpop.permute.xlu0 %4797
    %4799 = vrot.lane.b32.xlu0 %v4749, 24
    %v4800 = vpop.permute.xlu0 %4799
    %4801 = vrot.lane.b32.xlu0 %v4750, 24
    %v4802 = vpop.permute.xlu0 %4801
    %4803 = vrot.lane.b32.xlu0 %v4751, 24
    %v4804 = vpop.permute.xlu0 %4803
    %4805 = vrot.lane.b32.xlu0 %v4752, 24
    %v4806 = vpop.permute.xlu0 %4805
    %4807 = vrot.lane.b32.xlu0 %v4753, 24
    %v4808 = vpop.permute.xlu0 %4807
    %4809 = vrot.lane.b32.xlu0 %v4754, 24
    %v4810 = vpop.permute.xlu0 %4809
    %4811 = vrot.lane.b32.xlu0 %v4755, 24
    %v4812 = vpop.permute.xlu0 %4811
    %4813 = vrot.lane.b32.xlu0 %v4756, 24
    %v4814 = vpop.permute.xlu0 %4813
    %4815 = vrot.lane.b32.xlu0 %v4757, 24
    %v4816 = vpop.permute.xlu0 %4815
    %4817 = vrot.lane.b32.xlu0 %v4758, 24
    %v4818 = vpop.permute.xlu0 %4817
    %4819 = vrot.lane.b32.xlu0 %v4759, 24
    %v4820 = vpop.permute.xlu0 %4819
    %4821 = vrot.lane.b32.xlu0 %v4760, 24
    %v4822 = vpop.permute.xlu0 %4821
    %4823 = vrot.lane.b32.xlu0 %v4761, 24
    %v4824 = vpop.permute.xlu0 %4823
    %4825 = vrot.lane.b32.xlu0 %v4762, 24
    %v4826 = vpop.permute.xlu0 %4825
    %v4827 = vunpack.c.l.b16 %v2568
    %v4828 = vunpack.c.l.b16 %v2578
    %v4829 = vunpack.c.l.b16 %v2592
    %v4830 = vunpack.c.l.b16 %v2602
    %v4831 = vunpack.c.l.b16 %v2616
    %v4832 = vunpack.c.l.b16 %v2626
    %v4833 = vunpack.c.l.b16 %v2640
    %v4834 = vunpack.c.l.b16 %v2650
    %v4835 = vunpack.c.l.b16 %v2664
    %v4836 = vunpack.c.l.b16 %v2674
    %v4837 = vunpack.c.l.b16 %v2688
    %v4838 = vunpack.c.l.b16 %v2698
    %v4839 = vunpack.c.l.b16 %v2712
    %v4840 = vunpack.c.l.b16 %v2722
    %v4841 = vunpack.c.l.b16 %v2736
    %v4842 = vunpack.c.l.b16 %v2746
    %v4843 = vunpack.c.l.b16 %v2760
    %v4844 = vunpack.c.l.b16 %v2770
    %v4845 = vunpack.c.l.b16 %v2784
    %v4846 = vunpack.c.l.b16 %v2794
    %v4847 = vunpack.c.l.b16 %v2808
    %v4848 = vunpack.c.l.b16 %v2818
    %v4849 = vunpack.c.l.b16 %v2832
    %v4850 = vunpack.c.l.b16 %v2842
    %v4851 = vunpack.c.l.b16 %v2856
    %v4852 = vunpack.c.l.b16 %v2866
    %v4853 = vunpack.c.l.b16 %v2880
    %v4854 = vunpack.c.l.b16 %v2890
    %v4855 = vunpack.c.l.b16 %v2904
    %v4856 = vunpack.c.l.b16 %v2914
    %v4857 = vunpack.c.l.b16 %v2928
    %v4858 = vunpack.c.l.b16 %v2938
    %v4859 = vunpack.c.l.b16 %v2952
    %v4860 = vunpack.c.l.b16 %v2962
    %v4861 = vunpack.c.l.b16 %v2976
    %v4862 = vunpack.c.l.b16 %v2986
    %v4863 = vunpack.c.l.b16 %v3000
    %v4864 = vunpack.c.l.b16 %v3010
    %v4865 = vunpack.c.l.b16 %v3024
    %v4866 = vunpack.c.l.b16 %v3034
    %v4867 = vunpack.c.l.b16 %v3048
    %v4868 = vunpack.c.l.b16 %v3058
    %v4869 = vunpack.c.l.b16 %v3072
    %v4870 = vunpack.c.l.b16 %v3082
    %v4871 = vunpack.c.l.b16 %v3096
    %v4872 = vunpack.c.l.b16 %v3106
    %v4873 = vunpack.c.l.b16 %v3120
    %v4874 = vunpack.c.l.b16 %v3130
    %v4875 = vunpack.c.l.b16 %v3144
    %v4876 = vunpack.c.l.b16 %v3154
    %v4877 = vunpack.c.l.b16 %v3168
    %v4878 = vunpack.c.l.b16 %v3178
    %v4879 = vunpack.c.l.b16 %v3192
    %v4880 = vunpack.c.l.b16 %v3202
    %v4881 = vunpack.c.l.b16 %v3216
    %v4882 = vunpack.c.l.b16 %v3226
    %v4883 = vunpack.c.l.b16 %v3240
    %v4884 = vunpack.c.l.b16 %v3250
    %v4885 = vunpack.c.l.b16 %v3264
    %v4886 = vunpack.c.l.b16 %v3274
    %v4887 = vunpack.c.l.b16 %v3288
    %v4888 = vunpack.c.l.b16 %v3298
    %v4889 = vunpack.c.l.b16 %v3312
    %v4890 = vunpack.c.l.b16 %v3322
    %v4891 = vpack.c.b16 %v4828, %v4827
    %v4892 = vpack.c.b16 %v4830, %v4829
    %v4893 = vpack.c.b16 %v4832, %v4831
    %v4894 = vpack.c.b16 %v4834, %v4833
    %v4895 = vpack.c.b16 %v4836, %v4835
    %v4896 = vpack.c.b16 %v4838, %v4837
    %v4897 = vpack.c.b16 %v4840, %v4839
    %v4898 = vpack.c.b16 %v4842, %v4841
    %v4899 = vpack.c.b16 %v4844, %v4843
    %v4900 = vpack.c.b16 %v4846, %v4845
    %v4901 = vpack.c.b16 %v4848, %v4847
    %v4902 = vpack.c.b16 %v4850, %v4849
    %v4903 = vpack.c.b16 %v4852, %v4851
    %v4904 = vpack.c.b16 %v4854, %v4853
    %v4905 = vpack.c.b16 %v4856, %v4855
    %v4906 = vpack.c.b16 %v4858, %v4857
    %v4907 = vpack.c.b16 %v4860, %v4859
    %v4908 = vpack.c.b16 %v4862, %v4861
    %v4909 = vpack.c.b16 %v4864, %v4863
    %v4910 = vpack.c.b16 %v4866, %v4865
    %v4911 = vpack.c.b16 %v4868, %v4867
    %v4912 = vpack.c.b16 %v4870, %v4869
    %v4913 = vpack.c.b16 %v4872, %v4871
    %v4914 = vpack.c.b16 %v4874, %v4873
    %v4915 = vpack.c.b16 %v4876, %v4875
    %v4916 = vpack.c.b16 %v4878, %v4877
    %v4917 = vpack.c.b16 %v4880, %v4879
    %v4918 = vpack.c.b16 %v4882, %v4881
    %v4919 = vpack.c.b16 %v4884, %v4883
    %v4920 = vpack.c.b16 %v4886, %v4885
    %v4921 = vpack.c.b16 %v4888, %v4887
    %v4922 = vpack.c.b16 %v4890, %v4889
    %4923 = vrot.lane.b32.xlu0 %v4891, 28
    %v4924 = vpop.permute.xlu0 %4923
    %4925 = vrot.lane.b32.xlu0 %v4892, 28
    %v4926 = vpop.permute.xlu0 %4925
    %4927 = vrot.lane.b32.xlu0 %v4893, 28
    %v4928 = vpop.permute.xlu0 %4927
    %4929 = vrot.lane.b32.xlu0 %v4894, 28
    %v4930 = vpop.permute.xlu0 %4929
    %4931 = vrot.lane.b32.xlu0 %v4895, 28
    %v4932 = vpop.permute.xlu0 %4931
    %4933 = vrot.lane.b32.xlu0 %v4896, 28
    %v4934 = vpop.permute.xlu0 %4933
    %4935 = vrot.lane.b32.xlu0 %v4897, 28
    %v4936 = vpop.permute.xlu0 %4935
    %4937 = vrot.lane.b32.xlu0 %v4898, 28
    %v4938 = vpop.permute.xlu0 %4937
    %4939 = vrot.lane.b32.xlu0 %v4899, 28
    %v4940 = vpop.permute.xlu0 %4939
    %4941 = vrot.lane.b32.xlu0 %v4900, 28
    %v4942 = vpop.permute.xlu0 %4941
    %4943 = vrot.lane.b32.xlu0 %v4901, 28
    %v4944 = vpop.permute.xlu0 %4943
    %4945 = vrot.lane.b32.xlu0 %v4902, 28
    %v4946 = vpop.permute.xlu0 %4945
    %4947 = vrot.lane.b32.xlu0 %v4903, 28
    %v4948 = vpop.permute.xlu0 %4947
    %4949 = vrot.lane.b32.xlu0 %v4904, 28
    %v4950 = vpop.permute.xlu0 %4949
    %4951 = vrot.lane.b32.xlu0 %v4905, 28
    %v4952 = vpop.permute.xlu0 %4951
    %4953 = vrot.lane.b32.xlu0 %v4906, 28
    %v4954 = vpop.permute.xlu0 %4953
    %4955 = vrot.lane.b32.xlu0 %v4907, 28
    %v4956 = vpop.permute.xlu0 %4955
    %4957 = vrot.lane.b32.xlu0 %v4908, 28
    %v4958 = vpop.permute.xlu0 %4957
    %4959 = vrot.lane.b32.xlu0 %v4909, 28
    %v4960 = vpop.permute.xlu0 %4959
    %4961 = vrot.lane.b32.xlu0 %v4910, 28
    %v4962 = vpop.permute.xlu0 %4961
    %4963 = vrot.lane.b32.xlu0 %v4911, 28
    %v4964 = vpop.permute.xlu0 %4963
    %4965 = vrot.lane.b32.xlu0 %v4912, 28
    %v4966 = vpop.permute.xlu0 %4965
    %4967 = vrot.lane.b32.xlu0 %v4913, 28
    %v4968 = vpop.permute.xlu0 %4967
    %4969 = vrot.lane.b32.xlu0 %v4914, 28
    %v4970 = vpop.permute.xlu0 %4969
    %4971 = vrot.lane.b32.xlu0 %v4915, 28
    %v4972 = vpop.permute.xlu0 %4971
    %4973 = vrot.lane.b32.xlu0 %v4916, 28
    %v4974 = vpop.permute.xlu0 %4973
    %4975 = vrot.lane.b32.xlu0 %v4917, 28
    %v4976 = vpop.permute.xlu0 %4975
    %4977 = vrot.lane.b32.xlu0 %v4918, 28
    %v4978 = vpop.permute.xlu0 %4977
    %4979 = vrot.lane.b32.xlu0 %v4919, 28
    %v4980 = vpop.permute.xlu0 %4979
    %4981 = vrot.lane.b32.xlu0 %v4920, 28
    %v4982 = vpop.permute.xlu0 %4981
    %4983 = vrot.lane.b32.xlu0 %v4921, 28
    %v4984 = vpop.permute.xlu0 %4983
    %4985 = vrot.lane.b32.xlu0 %v4922, 28
    %v4986 = vpop.permute.xlu0 %4985
    %v4987 = vunpack.c.l.b16 %v3454
    %v4988 = vunpack.c.l.b16 %v3457
    %v4989 = vunpack.c.l.b16 %v3461
    %v4990 = vunpack.c.l.b16 %v3464
    %v4991 = vunpack.c.l.b16 %v3468
    %v4992 = vunpack.c.l.b16 %v3471
    %v4993 = vunpack.c.l.b16 %v3475
    %v4994 = vunpack.c.l.b16 %v3478
    %v4995 = vunpack.c.l.b16 %v3482
    %v4996 = vunpack.c.l.b16 %v3485
    %v4997 = vunpack.c.l.b16 %v3489
    %v4998 = vunpack.c.l.b16 %v3492
    %v4999 = vunpack.c.l.b16 %v3496
    %v5000 = vunpack.c.l.b16 %v3499
    %v5001 = vunpack.c.l.b16 %v3503
    %v5002 = vunpack.c.l.b16 %v3506
    %v5003 = vunpack.c.l.b16 %v3510
    %v5004 = vunpack.c.l.b16 %v3513
    %v5005 = vunpack.c.l.b16 %v3517
    %v5006 = vunpack.c.l.b16 %v3520
    %v5007 = vunpack.c.l.b16 %v3524
    %v5008 = vunpack.c.l.b16 %v3527
    %v5009 = vunpack.c.l.b16 %v3531
    %v5010 = vunpack.c.l.b16 %v3534
    %v5011 = vunpack.c.l.b16 %v3538
    %v5012 = vunpack.c.l.b16 %v3541
    %v5013 = vunpack.c.l.b16 %v3545
    %v5014 = vunpack.c.l.b16 %v3548
    %v5015 = vunpack.c.l.b16 %v3552
    %v5016 = vunpack.c.l.b16 %v3555
    %v5017 = vunpack.c.l.b16 %v3559
    %v5018 = vunpack.c.l.b16 %v3562
    %v5019 = vunpack.c.l.b16 %v3566
    %v5020 = vunpack.c.l.b16 %v3569
    %v5021 = vunpack.c.l.b16 %v3573
    %v5022 = vunpack.c.l.b16 %v3576
    %v5023 = vunpack.c.l.b16 %v3580
    %v5024 = vunpack.c.l.b16 %v3583
    %v5025 = vunpack.c.l.b16 %v3587
    %v5026 = vunpack.c.l.b16 %v3590
    %v5027 = vunpack.c.l.b16 %v3594
    %v5028 = vunpack.c.l.b16 %v3597
    %v5029 = vunpack.c.l.b16 %v3601
    %v5030 = vunpack.c.l.b16 %v3604
    %v5031 = vunpack.c.l.b16 %v3608
    %v5032 = vunpack.c.l.b16 %v3611
    %v5033 = vunpack.c.l.b16 %v3615
    %v5034 = vunpack.c.l.b16 %v3618
    %v5035 = vunpack.c.l.b16 %v3622
    %v5036 = vunpack.c.l.b16 %v3625
    %v5037 = vunpack.c.l.b16 %v3629
    %v5038 = vunpack.c.l.b16 %v3632
    %v5039 = vunpack.c.l.b16 %v3636
    %v5040 = vunpack.c.l.b16 %v3639
    %v5041 = vunpack.c.l.b16 %v3643
    %v5042 = vunpack.c.l.b16 %v3646
    %v5043 = vunpack.c.l.b16 %v3650
    %v5044 = vunpack.c.l.b16 %v3653
    %v5045 = vunpack.c.l.b16 %v3657
    %v5046 = vunpack.c.l.b16 %v3660
    %v5047 = vunpack.c.l.b16 %v3664
    %v5048 = vunpack.c.l.b16 %v3667
    %v5049 = vunpack.c.l.b16 %v3671
    %v5050 = vunpack.c.l.b16 %v3674
    %v5051 = vpack.c.b16 %v4988, %v4987
    %v5052 = vpack.c.b16 %v4990, %v4989
    %v5053 = vpack.c.b16 %v4992, %v4991
    %v5054 = vpack.c.b16 %v4994, %v4993
    %v5055 = vpack.c.b16 %v4996, %v4995
    %v5056 = vpack.c.b16 %v4998, %v4997
    %v5057 = vpack.c.b16 %v5000, %v4999
    %v5058 = vpack.c.b16 %v5002, %v5001
    %v5059 = vpack.c.b16 %v5004, %v5003
    %v5060 = vpack.c.b16 %v5006, %v5005
    %v5061 = vpack.c.b16 %v5008, %v5007
    %v5062 = vpack.c.b16 %v5010, %v5009
    %v5063 = vpack.c.b16 %v5012, %v5011
    %v5064 = vpack.c.b16 %v5014, %v5013
    %v5065 = vpack.c.b16 %v5016, %v5015
    %v5066 = vpack.c.b16 %v5018, %v5017
    %v5067 = vpack.c.b16 %v5020, %v5019
    %v5068 = vpack.c.b16 %v5022, %v5021
    %v5069 = vpack.c.b16 %v5024, %v5023
    %v5070 = vpack.c.b16 %v5026, %v5025
    %v5071 = vpack.c.b16 %v5028, %v5027
    %v5072 = vpack.c.b16 %v5030, %v5029
    %v5073 = vpack.c.b16 %v5032, %v5031
    %v5074 = vpack.c.b16 %v5034, %v5033
    %v5075 = vpack.c.b16 %v5036, %v5035
    %v5076 = vpack.c.b16 %v5038, %v5037
    %v5077 = vpack.c.b16 %v5040, %v5039
    %v5078 = vpack.c.b16 %v5042, %v5041
    %v5079 = vpack.c.b16 %v5044, %v5043
    %v5080 = vpack.c.b16 %v5046, %v5045
    %v5081 = vpack.c.b16 %v5048, %v5047
    %v5082 = vpack.c.b16 %v5050, %v5049
    %5083 = vrot.lane.b32.xlu0 %v5051, 32
    %v5084 = vpop.permute.xlu0 %5083
    %5085 = vrot.lane.b32.xlu0 %v5052, 32
    %v5086 = vpop.permute.xlu0 %5085
    %5087 = vrot.lane.b32.xlu0 %v5053, 32
    %v5088 = vpop.permute.xlu0 %5087
    %5089 = vrot.lane.b32.xlu0 %v5054, 32
    %v5090 = vpop.permute.xlu0 %5089
    %5091 = vrot.lane.b32.xlu0 %v5055, 32
    %v5092 = vpop.permute.xlu0 %5091
    %5093 = vrot.lane.b32.xlu0 %v5056, 32
    %v5094 = vpop.permute.xlu0 %5093
    %5095 = vrot.lane.b32.xlu0 %v5057, 32
    %v5096 = vpop.permute.xlu0 %5095
    %5097 = vrot.lane.b32.xlu0 %v5058, 32
    %v5098 = vpop.permute.xlu0 %5097
    %5099 = vrot.lane.b32.xlu0 %v5059, 32
    %v5100 = vpop.permute.xlu0 %5099
    %5101 = vrot.lane.b32.xlu0 %v5060, 32
    %v5102 = vpop.permute.xlu0 %5101
    %5103 = vrot.lane.b32.xlu0 %v5061, 32
    %v5104 = vpop.permute.xlu0 %5103
    %5105 = vrot.lane.b32.xlu0 %v5062, 32
    %v5106 = vpop.permute.xlu0 %5105
    %5107 = vrot.lane.b32.xlu0 %v5063, 32
    %v5108 = vpop.permute.xlu0 %5107
    %5109 = vrot.lane.b32.xlu0 %v5064, 32
    %v5110 = vpop.permute.xlu0 %5109
    %5111 = vrot.lane.b32.xlu0 %v5065, 32
    %v5112 = vpop.permute.xlu0 %5111
    %5113 = vrot.lane.b32.xlu0 %v5066, 32
    %v5114 = vpop.permute.xlu0 %5113
    %5115 = vrot.lane.b32.xlu0 %v5067, 32
    %v5116 = vpop.permute.xlu0 %5115
    %5117 = vrot.lane.b32.xlu0 %v5068, 32
    %v5118 = vpop.permute.xlu0 %5117
    %5119 = vrot.lane.b32.xlu0 %v5069, 32
    %v5120 = vpop.permute.xlu0 %5119
    %5121 = vrot.lane.b32.xlu0 %v5070, 32
    %v5122 = vpop.permute.xlu0 %5121
    %5123 = vrot.lane.b32.xlu0 %v5071, 32
    %v5124 = vpop.permute.xlu0 %5123
    %5125 = vrot.lane.b32.xlu0 %v5072, 32
    %v5126 = vpop.permute.xlu0 %5125
    %5127 = vrot.lane.b32.xlu0 %v5073, 32
    %v5128 = vpop.permute.xlu0 %5127
    %5129 = vrot.lane.b32.xlu0 %v5074, 32
    %v5130 = vpop.permute.xlu0 %5129
    %5131 = vrot.lane.b32.xlu0 %v5075, 32
    %v5132 = vpop.permute.xlu0 %5131
    %5133 = vrot.lane.b32.xlu0 %v5076, 32
    %v5134 = vpop.permute.xlu0 %5133
    %5135 = vrot.lane.b32.xlu0 %v5077, 32
    %v5136 = vpop.permute.xlu0 %5135
    %5137 = vrot.lane.b32.xlu0 %v5078, 32
    %v5138 = vpop.permute.xlu0 %5137
    %5139 = vrot.lane.b32.xlu0 %v5079, 32
    %v5140 = vpop.permute.xlu0 %5139
    %5141 = vrot.lane.b32.xlu0 %v5080, 32
    %v5142 = vpop.permute.xlu0 %5141
    %5143 = vrot.lane.b32.xlu0 %v5081, 32
    %v5144 = vpop.permute.xlu0 %5143
    %5145 = vrot.lane.b32.xlu0 %v5082, 32
    %v5146 = vpop.permute.xlu0 %5145
    %vm5147 = vcmask 31744
    %v5150 = vsel %vm5147, %v3771, %v3900
    %v5153 = vsel %vm5147, %v3772, %v3902
    %v5156 = vsel %vm5147, %v3773, %v3904
    %v5159 = vsel %vm5147, %v3774, %v3906
    %v5162 = vsel %vm5147, %v3775, %v3908
    %v5165 = vsel %vm5147, %v3776, %v3910
    %v5168 = vsel %vm5147, %v3777, %v3912
    %v5171 = vsel %vm5147, %v3778, %v3914
    %v5174 = vsel %vm5147, %v3779, %v3916
    %v5177 = vsel %vm5147, %v3780, %v3918
    %v5180 = vsel %vm5147, %v3781, %v3920
    %v5183 = vsel %vm5147, %v3782, %v3922
    %v5186 = vsel %vm5147, %v3783, %v3924
    %v5189 = vsel %vm5147, %v3784, %v3926
    %v5192 = vsel %vm5147, %v3785, %v3928
    %v5195 = vsel %vm5147, %v3786, %v3930
    %v5198 = vsel %vm5147, %v3787, %v3932
    %v5201 = vsel %vm5147, %v3788, %v3934
    %v5204 = vsel %vm5147, %v3789, %v3936
    %v5207 = vsel %vm5147, %v3790, %v3938
    %v5210 = vsel %vm5147, %v3791, %v3940
    %v5213 = vsel %vm5147, %v3792, %v3942
    %v5216 = vsel %vm5147, %v3793, %v3944
    %v5219 = vsel %vm5147, %v3794, %v3946
    %v5222 = vsel %vm5147, %v3795, %v3948
    %v5225 = vsel %vm5147, %v3796, %v3950
    %v5228 = vsel %vm5147, %v3797, %v3952
    %v5231 = vsel %vm5147, %v3798, %v3954
    %v5234 = vsel %vm5147, %v3799, %v3956
    %v5237 = vsel %vm5147, %v3800, %v3958
    %v5240 = vsel %vm5147, %v3801, %v3960
    %v5243 = vsel %vm5147, %v3802, %v3962
    %vm5244 = vcmask 64512
    %v5246 = vsel %vm5244, %v5150, %v4060
    %v5248 = vsel %vm5244, %v5153, %v4062
    %v5250 = vsel %vm5244, %v5156, %v4064
    %v5252 = vsel %vm5244, %v5159, %v4066
    %v5254 = vsel %vm5244, %v5162, %v4068
    %v5256 = vsel %vm5244, %v5165, %v4070
    %v5258 = vsel %vm5244, %v5168, %v4072
    %v5260 = vsel %vm5244, %v5171, %v4074
    %v5262 = vsel %vm5244, %v5174, %v4076
    %v5264 = vsel %vm5244, %v5177, %v4078
    %v5266 = vsel %vm5244, %v5180, %v4080
    %v5268 = vsel %vm5244, %v5183, %v4082
    %v5270 = vsel %vm5244, %v5186, %v4084
    %v5272 = vsel %vm5244, %v5189, %v4086
    %v5274 = vsel %vm5244, %v5192, %v4088
    %v5276 = vsel %vm5244, %v5195, %v4090
    %v5278 = vsel %vm5244, %v5198, %v4092
    %v5280 = vsel %vm5244, %v5201, %v4094
    %v5282 = vsel %vm5244, %v5204, %v4096
    %v5284 = vsel %vm5244, %v5207, %v4098
    %v5286 = vsel %vm5244, %v5210, %v4100
    %v5288 = vsel %vm5244, %v5213, %v4102
    %v5290 = vsel %vm5244, %v5216, %v4104
    %v5292 = vsel %vm5244, %v5219, %v4106
    %v5294 = vsel %vm5244, %v5222, %v4108
    %v5296 = vsel %vm5244, %v5225, %v4110
    %v5298 = vsel %vm5244, %v5228, %v4112
    %v5300 = vsel %vm5244, %v5231, %v4114
    %v5302 = vsel %vm5244, %v5234, %v4116
    %v5304 = vsel %vm5244, %v5237, %v4118
    %v5306 = vsel %vm5244, %v5240, %v4120
    %v5308 = vsel %vm5244, %v5243, %v4122
    %vm5309 = vcmask 97280
    %v5311 = vsel %vm5309, %v5246, %v4252
    %v5313 = vsel %vm5309, %v5248, %v4254
    %v5315 = vsel %vm5309, %v5250, %v4256
    %v5317 = vsel %vm5309, %v5252, %v4258
    %v5319 = vsel %vm5309, %v5254, %v4260
    %v5321 = vsel %vm5309, %v5256, %v4262
    %v5323 = vsel %vm5309, %v5258, %v4264
    %v5325 = vsel %vm5309, %v5260, %v4266
    %v5327 = vsel %vm5309, %v5262, %v4268
    %v5329 = vsel %vm5309, %v5264, %v4270
    %v5331 = vsel %vm5309, %v5266, %v4272
    %v5333 = vsel %vm5309, %v5268, %v4274
    %v5335 = vsel %vm5309, %v5270, %v4276
    %v5337 = vsel %vm5309, %v5272, %v4278
    %v5339 = vsel %vm5309, %v5274, %v4280
    %v5341 = vsel %vm5309, %v5276, %v4282
    %v5343 = vsel %vm5309, %v5278, %v4284
    %v5345 = vsel %vm5309, %v5280, %v4286
    %v5347 = vsel %vm5309, %v5282, %v4288
    %v5349 = vsel %vm5309, %v5284, %v4290
    %v5351 = vsel %vm5309, %v5286, %v4292
    %v5353 = vsel %vm5309, %v5288, %v4294
    %v5355 = vsel %vm5309, %v5290, %v4296
    %v5357 = vsel %vm5309, %v5292, %v4298
    %v5359 = vsel %vm5309, %v5294, %v4300
    %v5361 = vsel %vm5309, %v5296, %v4302
    %v5363 = vsel %vm5309, %v5298, %v4304
    %v5365 = vsel %vm5309, %v5300, %v4306
    %v5367 = vsel %vm5309, %v5302, %v4308
    %v5369 = vsel %vm5309, %v5304, %v4310
    %v5371 = vsel %vm5309, %v5306, %v4312
    %v5373 = vsel %vm5309, %v5308, %v4314
    %vm5374 = vcmask 130048
    %v5376 = vsel %vm5374, %v5311, %v4412
    %v5378 = vsel %vm5374, %v5313, %v4414
    %v5380 = vsel %vm5374, %v5315, %v4416
    %v5382 = vsel %vm5374, %v5317, %v4418
    %v5384 = vsel %vm5374, %v5319, %v4420
    %v5386 = vsel %vm5374, %v5321, %v4422
    %v5388 = vsel %vm5374, %v5323, %v4424
    %v5390 = vsel %vm5374, %v5325, %v4426
    %v5392 = vsel %vm5374, %v5327, %v4428
    %v5394 = vsel %vm5374, %v5329, %v4430
    %v5396 = vsel %vm5374, %v5331, %v4432
    %v5398 = vsel %vm5374, %v5333, %v4434
    %v5400 = vsel %vm5374, %v5335, %v4436
    %v5402 = vsel %vm5374, %v5337, %v4438
    %v5404 = vsel %vm5374, %v5339, %v4440
    %v5406 = vsel %vm5374, %v5341, %v4442
    %v5408 = vsel %vm5374, %v5343, %v4444
    %v5410 = vsel %vm5374, %v5345, %v4446
    %v5412 = vsel %vm5374, %v5347, %v4448
    %v5414 = vsel %vm5374, %v5349, %v4450
    %v5416 = vsel %vm5374, %v5351, %v4452
    %v5418 = vsel %vm5374, %v5353, %v4454
    %v5420 = vsel %vm5374, %v5355, %v4456
    %v5422 = vsel %vm5374, %v5357, %v4458
    %v5424 = vsel %vm5374, %v5359, %v4460
    %v5426 = vsel %vm5374, %v5361, %v4462
    %v5428 = vsel %vm5374, %v5363, %v4464
    %v5430 = vsel %vm5374, %v5365, %v4466
    %v5432 = vsel %vm5374, %v5367, %v4468
    %v5434 = vsel %vm5374, %v5369, %v4470
    %v5436 = vsel %vm5374, %v5371, %v4472
    %v5438 = vsel %vm5374, %v5373, %v4474
    %vm5439 = vcmask 162816
    %v5441 = vsel %vm5439, %v5376, %v4572
    %v5443 = vsel %vm5439, %v5378, %v4574
    %v5445 = vsel %vm5439, %v5380, %v4576
    %v5447 = vsel %vm5439, %v5382, %v4578
    %v5449 = vsel %vm5439, %v5384, %v4580
    %v5451 = vsel %vm5439, %v5386, %v4582
    %v5453 = vsel %vm5439, %v5388, %v4584
    %v5455 = vsel %vm5439, %v5390, %v4586
    %v5457 = vsel %vm5439, %v5392, %v4588
    %v5459 = vsel %vm5439, %v5394, %v4590
    %v5461 = vsel %vm5439, %v5396, %v4592
    %v5463 = vsel %vm5439, %v5398, %v4594
    %v5465 = vsel %vm5439, %v5400, %v4596
    %v5467 = vsel %vm5439, %v5402, %v4598
    %v5469 = vsel %vm5439, %v5404, %v4600
    %v5471 = vsel %vm5439, %v5406, %v4602
    %v5473 = vsel %vm5439, %v5408, %v4604
    %v5475 = vsel %vm5439, %v5410, %v4606
    %v5477 = vsel %vm5439, %v5412, %v4608
    %v5479 = vsel %vm5439, %v5414, %v4610
    %v5481 = vsel %vm5439, %v5416, %v4612
    %v5483 = vsel %vm5439, %v5418, %v4614
    %v5485 = vsel %vm5439, %v5420, %v4616
    %v5487 = vsel %vm5439, %v5422, %v4618
    %v5489 = vsel %vm5439, %v5424, %v4620
    %v5491 = vsel %vm5439, %v5426, %v4622
    %v5493 = vsel %vm5439, %v5428, %v4624
    %v5495 = vsel %vm5439, %v5430, %v4626
    %v5497 = vsel %vm5439, %v5432, %v4628
    %v5499 = vsel %vm5439, %v5434, %v4630
    %v5501 = vsel %vm5439, %v5436, %v4632
    %v5503 = vsel %vm5439, %v5438, %v4634
    %vm5504 = vcmask 195584
    %v5506 = vsel %vm5504, %v5441, %v4764
    %v5508 = vsel %vm5504, %v5443, %v4766
    %v5510 = vsel %vm5504, %v5445, %v4768
    %v5512 = vsel %vm5504, %v5447, %v4770
    %v5514 = vsel %vm5504, %v5449, %v4772
    %v5516 = vsel %vm5504, %v5451, %v4774
    %v5518 = vsel %vm5504, %v5453, %v4776
    %v5520 = vsel %vm5504, %v5455, %v4778
    %v5522 = vsel %vm5504, %v5457, %v4780
    %v5524 = vsel %vm5504, %v5459, %v4782
    %v5526 = vsel %vm5504, %v5461, %v4784
    %v5528 = vsel %vm5504, %v5463, %v4786
    %v5530 = vsel %vm5504, %v5465, %v4788
    %v5532 = vsel %vm5504, %v5467, %v4790
    %v5534 = vsel %vm5504, %v5469, %v4792
    %v5536 = vsel %vm5504, %v5471, %v4794
    %v5538 = vsel %vm5504, %v5473, %v4796
    %v5540 = vsel %vm5504, %v5475, %v4798
    %v5542 = vsel %vm5504, %v5477, %v4800
    %v5544 = vsel %vm5504, %v5479, %v4802
    %v5546 = vsel %vm5504, %v5481, %v4804
    %v5548 = vsel %vm5504, %v5483, %v4806
    %v5550 = vsel %vm5504, %v5485, %v4808
    %v5552 = vsel %vm5504, %v5487, %v4810
    %v5554 = vsel %vm5504, %v5489, %v4812
    %v5556 = vsel %vm5504, %v5491, %v4814
    %v5558 = vsel %vm5504, %v5493, %v4816
    %v5560 = vsel %vm5504, %v5495, %v4818
    %v5562 = vsel %vm5504, %v5497, %v4820
    %v5564 = vsel %vm5504, %v5499, %v4822
    %v5566 = vsel %vm5504, %v5501, %v4824
    %v5568 = vsel %vm5504, %v5503, %v4826
    %vm5569 = vcmask 228352
    %v5571 = vsel %vm5569, %v5506, %v4924
    %v5573 = vsel %vm5569, %v5508, %v4926
    %v5575 = vsel %vm5569, %v5510, %v4928
    %v5577 = vsel %vm5569, %v5512, %v4930
    %v5579 = vsel %vm5569, %v5514, %v4932
    %v5581 = vsel %vm5569, %v5516, %v4934
    %v5583 = vsel %vm5569, %v5518, %v4936
    %v5585 = vsel %vm5569, %v5520, %v4938
    %v5587 = vsel %vm5569, %v5522, %v4940
    %v5589 = vsel %vm5569, %v5524, %v4942
    %v5591 = vsel %vm5569, %v5526, %v4944
    %v5593 = vsel %vm5569, %v5528, %v4946
    %v5595 = vsel %vm5569, %v5530, %v4948
    %v5597 = vsel %vm5569, %v5532, %v4950
    %v5599 = vsel %vm5569, %v5534, %v4952
    %v5601 = vsel %vm5569, %v5536, %v4954
    %v5603 = vsel %vm5569, %v5538, %v4956
    %v5605 = vsel %vm5569, %v5540, %v4958
    %v5607 = vsel %vm5569, %v5542, %v4960
    %v5609 = vsel %vm5569, %v5544, %v4962
    %v5611 = vsel %vm5569, %v5546, %v4964
    %v5613 = vsel %vm5569, %v5548, %v4966
    %v5615 = vsel %vm5569, %v5550, %v4968
    %v5617 = vsel %vm5569, %v5552, %v4970
    %v5619 = vsel %vm5569, %v5554, %v4972
    %v5621 = vsel %vm5569, %v5556, %v4974
    %v5623 = vsel %vm5569, %v5558, %v4976
    %v5625 = vsel %vm5569, %v5560, %v4978
    %v5627 = vsel %vm5569, %v5562, %v4980
    %v5629 = vsel %vm5569, %v5564, %v4982
    %v5631 = vsel %vm5569, %v5566, %v4984
    %v5633 = vsel %vm5569, %v5568, %v4986
    %vm5634 = vcmask 261120
    %v5636 = vsel %vm5634, %v5571, %v5084
    %v5638 = vsel %vm5634, %v5573, %v5086
    %v5640 = vsel %vm5634, %v5575, %v5088
    %v5642 = vsel %vm5634, %v5577, %v5090
    %v5644 = vsel %vm5634, %v5579, %v5092
    %v5646 = vsel %vm5634, %v5581, %v5094
    %v5648 = vsel %vm5634, %v5583, %v5096
    %v5650 = vsel %vm5634, %v5585, %v5098
    %v5652 = vsel %vm5634, %v5587, %v5100
    %v5654 = vsel %vm5634, %v5589, %v5102
    %v5656 = vsel %vm5634, %v5591, %v5104
    %v5658 = vsel %vm5634, %v5593, %v5106
    %v5660 = vsel %vm5634, %v5595, %v5108
    %v5662 = vsel %vm5634, %v5597, %v5110
    %v5664 = vsel %vm5634, %v5599, %v5112
    %v5666 = vsel %vm5634, %v5601, %v5114
    %v5668 = vsel %vm5634, %v5603, %v5116
    %v5670 = vsel %vm5634, %v5605, %v5118
    %v5672 = vsel %vm5634, %v5607, %v5120
    %v5674 = vsel %vm5634, %v5609, %v5122
    %v5676 = vsel %vm5634, %v5611, %v5124
    %v5678 = vsel %vm5634, %v5613, %v5126
    %v5680 = vsel %vm5634, %v5615, %v5128
    %v5682 = vsel %vm5634, %v5617, %v5130
    %v5684 = vsel %vm5634, %v5619, %v5132
    %v5686 = vsel %vm5634, %v5621, %v5134
    %v5688 = vsel %vm5634, %v5623, %v5136
    %v5690 = vsel %vm5634, %v5625, %v5138
    %v5692 = vsel %vm5634, %v5627, %v5140
    %v5694 = vsel %vm5634, %v5629, %v5142
    %v5696 = vsel %vm5634, %v5631, %v5144
    %v5698 = vsel %vm5634, %v5633, %v5146
    %v5731 = vunpack.c.l.b16 %v5636
    %v5732 = vunpack.c.h.b16 %v5636
    %v5733 = vunpack.c.l.b16 %v5638
    %v5734 = vunpack.c.h.b16 %v5638
    %v5735 = vunpack.c.l.b16 %v5640
    %v5736 = vunpack.c.h.b16 %v5640
    %v5737 = vunpack.c.l.b16 %v5642
    %v5738 = vunpack.c.h.b16 %v5642
    %v5739 = vunpack.c.l.b16 %v5644
    %v5740 = vunpack.c.h.b16 %v5644
    %v5741 = vunpack.c.l.b16 %v5646
    %v5742 = vunpack.c.h.b16 %v5646
    %v5743 = vunpack.c.l.b16 %v5648
    %v5744 = vunpack.c.h.b16 %v5648
    %v5745 = vunpack.c.l.b16 %v5650
    %v5746 = vunpack.c.h.b16 %v5650
    %v5747 = vunpack.c.l.b16 %v5652
    %v5748 = vunpack.c.h.b16 %v5652
    %v5749 = vunpack.c.l.b16 %v5654
    %v5750 = vunpack.c.h.b16 %v5654
    %v5751 = vunpack.c.l.b16 %v5656
    %v5752 = vunpack.c.h.b16 %v5656
    %v5753 = vunpack.c.l.b16 %v5658
    %v5754 = vunpack.c.h.b16 %v5658
    %v5755 = vunpack.c.l.b16 %v5660
    %v5756 = vunpack.c.h.b16 %v5660
    %v5757 = vunpack.c.l.b16 %v5662
    %v5758 = vunpack.c.h.b16 %v5662
    %v5759 = vunpack.c.l.b16 %v5664
    %v5760 = vunpack.c.h.b16 %v5664
    %v5761 = vunpack.c.l.b16 %v5666
    %v5762 = vunpack.c.h.b16 %v5666
    %v5763 = vunpack.c.l.b16 %v5668
    %v5764 = vunpack.c.h.b16 %v5668
    %v5765 = vunpack.c.l.b16 %v5670
    %v5766 = vunpack.c.h.b16 %v5670
    %v5767 = vunpack.c.l.b16 %v5672
    %v5768 = vunpack.c.h.b16 %v5672
    %v5769 = vunpack.c.l.b16 %v5674
    %v5770 = vunpack.c.h.b16 %v5674
    %v5771 = vunpack.c.l.b16 %v5676
    %v5772 = vunpack.c.h.b16 %v5676
    %v5773 = vunpack.c.l.b16 %v5678
    %v5774 = vunpack.c.h.b16 %v5678
    %v5775 = vunpack.c.l.b16 %v5680
    %v5776 = vunpack.c.h.b16 %v5680
    %v5777 = vunpack.c.l.b16 %v5682
    %v5778 = vunpack.c.h.b16 %v5682
    %v5779 = vunpack.c.l.b16 %v5684
    %v5780 = vunpack.c.h.b16 %v5684
    %v5781 = vunpack.c.l.b16 %v5686
    %v5782 = vunpack.c.h.b16 %v5686
    %v5783 = vunpack.c.l.b16 %v5688
    %v5784 = vunpack.c.h.b16 %v5688
    %v5785 = vunpack.c.l.b16 %v5690
    %v5786 = vunpack.c.h.b16 %v5690
    %v5787 = vunpack.c.l.b16 %v5692
    %v5788 = vunpack.c.h.b16 %v5692
    %v5789 = vunpack.c.l.b16 %v5694
    %v5790 = vunpack.c.h.b16 %v5694
    %v5791 = vunpack.c.l.b16 %v5696
    %v5792 = vunpack.c.h.b16 %v5696
    %v5793 = vunpack.c.l.b16 %v5698
    %v5794 = vunpack.c.h.b16 %v5698
    %v5795 = vpack.c.b16 %v5731, %v5731
    %v5796 = vpack.c.b16 %v5732, %v5732
    %v5797 = vpack.c.b16 %v5733, %v5733
    %v5798 = vpack.c.b16 %v5734, %v5734
    %v5799 = vpack.c.b16 %v5735, %v5735
    %v5800 = vpack.c.b16 %v5736, %v5736
    %v5801 = vpack.c.b16 %v5737, %v5737
    %v5802 = vpack.c.b16 %v5738, %v5738
    %v5803 = vpack.c.b16 %v5739, %v5739
    %v5804 = vpack.c.b16 %v5740, %v5740
    %v5805 = vpack.c.b16 %v5741, %v5741
    %v5806 = vpack.c.b16 %v5742, %v5742
    %v5807 = vpack.c.b16 %v5743, %v5743
    %v5808 = vpack.c.b16 %v5744, %v5744
    %v5809 = vpack.c.b16 %v5745, %v5745
    %v5810 = vpack.c.b16 %v5746, %v5746
    %v5811 = vpack.c.b16 %v5747, %v5747
    %v5812 = vpack.c.b16 %v5748, %v5748
    %v5813 = vpack.c.b16 %v5749, %v5749
    %v5814 = vpack.c.b16 %v5750, %v5750
    %v5815 = vpack.c.b16 %v5751, %v5751
    %v5816 = vpack.c.b16 %v5752, %v5752
    %v5817 = vpack.c.b16 %v5753, %v5753
    %v5818 = vpack.c.b16 %v5754, %v5754
    %v5819 = vpack.c.b16 %v5755, %v5755
    %v5820 = vpack.c.b16 %v5756, %v5756
    %v5821 = vpack.c.b16 %v5757, %v5757
    %v5822 = vpack.c.b16 %v5758, %v5758
    %v5823 = vpack.c.b16 %v5759, %v5759
    %v5824 = vpack.c.b16 %v5760, %v5760
    %v5825 = vpack.c.b16 %v5761, %v5761
    %v5826 = vpack.c.b16 %v5762, %v5762
    %v5827 = vpack.c.b16 %v5763, %v5763
    %v5828 = vpack.c.b16 %v5764, %v5764
    %v5829 = vpack.c.b16 %v5765, %v5765
    %v5830 = vpack.c.b16 %v5766, %v5766
    %v5831 = vpack.c.b16 %v5767, %v5767
    %v5832 = vpack.c.b16 %v5768, %v5768
    %v5833 = vpack.c.b16 %v5769, %v5769
    %v5834 = vpack.c.b16 %v5770, %v5770
    %v5835 = vpack.c.b16 %v5771, %v5771
    %v5836 = vpack.c.b16 %v5772, %v5772
    %v5837 = vpack.c.b16 %v5773, %v5773
    %v5838 = vpack.c.b16 %v5774, %v5774
    %v5839 = vpack.c.b16 %v5775, %v5775
    %v5840 = vpack.c.b16 %v5776, %v5776
    %v5841 = vpack.c.b16 %v5777, %v5777
    %v5842 = vpack.c.b16 %v5778, %v5778
    %v5843 = vpack.c.b16 %v5779, %v5779
    %v5844 = vpack.c.b16 %v5780, %v5780
    %v5845 = vpack.c.b16 %v5781, %v5781
    %v5846 = vpack.c.b16 %v5782, %v5782
    %v5847 = vpack.c.b16 %v5783, %v5783
    %v5848 = vpack.c.b16 %v5784, %v5784
    %v5849 = vpack.c.b16 %v5785, %v5785
    %v5850 = vpack.c.b16 %v5786, %v5786
    %v5851 = vpack.c.b16 %v5787, %v5787
    %v5852 = vpack.c.b16 %v5788, %v5788
    %v5853 = vpack.c.b16 %v5789, %v5789
    %v5854 = vpack.c.b16 %v5790, %v5790
    %v5855 = vpack.c.b16 %v5791, %v5791
    %v5856 = vpack.c.b16 %v5792, %v5792
    %v5857 = vpack.c.b16 %v5793, %v5793
    %v5858 = vpack.c.b16 %v5794, %v5794
    %vm5923 = vcmask 289792
    %5924 = vst.msk [vmem:[#allocation2] sm:$0xf] %vm5923, %v5795
    %5925 = vst.msk [vmem:[#allocation2 + $0x4] sm:$0xf] %vm5923, %v5796
    %5926 = vst.msk [vmem:[#allocation2 + $0x8] sm:$0xf] %vm5923, %v5797
    %5927 = vst.msk [vmem:[#allocation2 + $0xc] sm:$0xf] %vm5923, %v5798
    %5928 = vst.msk [vmem:[#allocation2 + $0x10] sm:$0xf] %vm5923, %v5799
    %5929 = vst.msk [vmem:[#allocation2 + $0x14] sm:$0xf] %vm5923, %v5800
    %5930 = vst.msk [vmem:[#allocation2 + $0x18] sm:$0xf] %vm5923, %v5801
    %5931 = vst.msk [vmem:[#allocation2 + $0x1c] sm:$0xf] %vm5923, %v5802
    %5932 = vst.msk [vmem:[#allocation2 + $0x20] sm:$0xf] %vm5923, %v5803
    %5933 = vst.msk [vmem:[#allocation2 + $0x24] sm:$0xf] %vm5923, %v5804
    %5934 = vst.msk [vmem:[#allocation2 + $0x28] sm:$0xf] %vm5923, %v5805
    %5935 = vst.msk [vmem:[#allocation2 + $0x2c] sm:$0xf] %vm5923, %v5806
    %5936 = vst.msk [vmem:[#allocation2 + $0x30] sm:$0xf] %vm5923, %v5807
    %5937 = vst.msk [vmem:[#allocation2 + $0x34] sm:$0xf] %vm5923, %v5808
    %5938 = vst.msk [vmem:[#allocation2 + $0x38] sm:$0xf] %vm5923, %v5809
    %5939 = vst.msk [vmem:[#allocation2 + $0x3c] sm:$0xf] %vm5923, %v5810
    %5940 = vst.msk [vmem:[#allocation2 + $0x40] sm:$0xf] %vm5923, %v5811
    %5941 = vst.msk [vmem:[#allocation2 + $0x44] sm:$0xf] %vm5923, %v5812
    %5942 = vst.msk [vmem:[#allocation2 + $0x48] sm:$0xf] %vm5923, %v5813
    %5943 = vst.msk [vmem:[#allocation2 + $0x4c] sm:$0xf] %vm5923, %v5814
    %5944 = vst.msk [vmem:[#allocation2 + $0x50] sm:$0xf] %vm5923, %v5815
    %5945 = vst.msk [vmem:[#allocation2 + $0x54] sm:$0xf] %vm5923, %v5816
    %5946 = vst.msk [vmem:[#allocation2 + $0x58] sm:$0xf] %vm5923, %v5817
    %5947 = vst.msk [vmem:[#allocation2 + $0x5c] sm:$0xf] %vm5923, %v5818
    %5948 = vst.msk [vmem:[#allocation2 + $0x60] sm:$0xf] %vm5923, %v5819
    %5949 = vst.msk [vmem:[#allocation2 + $0x64] sm:$0xf] %vm5923, %v5820
    %5950 = vst.msk [vmem:[#allocation2 + $0x68] sm:$0xf] %vm5923, %v5821
    %5951 = vst.msk [vmem:[#allocation2 + $0x6c] sm:$0xf] %vm5923, %v5822
    %5952 = vst.msk [vmem:[#allocation2 + $0x70] sm:$0xf] %vm5923, %v5823
    %5953 = vst.msk [vmem:[#allocation2 + $0x74] sm:$0xf] %vm5923, %v5824
    %5954 = vst.msk [vmem:[#allocation2 + $0x78] sm:$0xf] %vm5923, %v5825
    %5955 = vst.msk [vmem:[#allocation2 + $0x7c] sm:$0xf] %vm5923, %v5826
    %5956 = vst.msk [vmem:[#allocation2 + $0x80] sm:$0xf] %vm5923, %v5827
    %5957 = vst.msk [vmem:[#allocation2 + $0x84] sm:$0xf] %vm5923, %v5828
    %5958 = vst.msk [vmem:[#allocation2 + $0x88] sm:$0xf] %vm5923, %v5829
    %5959 = vst.msk [vmem:[#allocation2 + $0x8c] sm:$0xf] %vm5923, %v5830
    %5960 = vst.msk [vmem:[#allocation2 + $0x90] sm:$0xf] %vm5923, %v5831
    %5961 = vst.msk [vmem:[#allocation2 + $0x94] sm:$0xf] %vm5923, %v5832
    %5962 = vst.msk [vmem:[#allocation2 + $0x98] sm:$0xf] %vm5923, %v5833
    %5963 = vst.msk [vmem:[#allocation2 + $0x9c] sm:$0xf] %vm5923, %v5834
    %5964 = vst.msk [vmem:[#allocation2 + $0xa0] sm:$0xf] %vm5923, %v5835
    %5965 = vst.msk [vmem:[#allocation2 + $0xa4] sm:$0xf] %vm5923, %v5836
    %5966 = vst.msk [vmem:[#allocation2 + $0xa8] sm:$0xf] %vm5923, %v5837
    %5967 = vst.msk [vmem:[#allocation2 + $0xac] sm:$0xf] %vm5923, %v5838
    %5968 = vst.msk [vmem:[#allocation2 + $0xb0] sm:$0xf] %vm5923, %v5839
    %5969 = vst.msk [vmem:[#allocation2 + $0xb4] sm:$0xf] %vm5923, %v5840
    %5970 = vst.msk [vmem:[#allocation2 + $0xb8] sm:$0xf] %vm5923, %v5841
    %5971 = vst.msk [vmem:[#allocation2 + $0xbc] sm:$0xf] %vm5923, %v5842
    %5972 = vst.msk [vmem:[#allocation2 + $0xc0] sm:$0xf] %vm5923, %v5843
    %5973 = vst.msk [vmem:[#allocation2 + $0xc4] sm:$0xf] %vm5923, %v5844
    %5974 = vst.msk [vmem:[#allocation2 + $0xc8] sm:$0xf] %vm5923, %v5845
    %5975 = vst.msk [vmem:[#allocation2 + $0xcc] sm:$0xf] %vm5923, %v5846
    %5976 = vst.msk [vmem:[#allocation2 + $0xd0] sm:$0xf] %vm5923, %v5847
    %5977 = vst.msk [vmem:[#allocation2 + $0xd4] sm:$0xf] %vm5923, %v5848
    %5978 = vst.msk [vmem:[#allocation2 + $0xd8] sm:$0xf] %vm5923, %v5849
    %5979 = vst.msk [vmem:[#allocation2 + $0xdc] sm:$0xf] %vm5923, %v5850
    %5980 = vst.msk [vmem:[#allocation2 + $0xe0] sm:$0xf] %vm5923, %v5851
    %5981 = vst.msk [vmem:[#allocation2 + $0xe4] sm:$0xf] %vm5923, %v5852
    %5982 = vst.msk [vmem:[#allocation2 + $0xe8] sm:$0xf] %vm5923, %v5853
    %5983 = vst.msk [vmem:[#allocation2 + $0xec] sm:$0xf] %vm5923, %v5854
    %5984 = vst.msk [vmem:[#allocation2 + $0xf0] sm:$0xf] %vm5923, %v5855
    %5985 = vst.msk [vmem:[#allocation2 + $0xf4] sm:$0xf] %vm5923, %v5856
    %5986 = vst.msk [vmem:[#allocation2 + $0xf8] sm:$0xf] %vm5923, %v5857
    %5987 = vst.msk [vmem:[#allocation2 + $0xfc] sm:$0xf] %vm5923, %v5858
  $region17: #{ntk_conv2d_forward.1} parent=0 // pred_fallthru
    _
  %v5988 = vld [vmem:[#allocation2] sm:$0xf]
  %v5989 = vld [vmem:[#allocation2 + $0x4] sm:$0xf]
  %v5990 = vld [vmem:[#allocation2 + $0x8] sm:$0xf]
  %v5991 = vld [vmem:[#allocation2 + $0xc] sm:$0xf]
  %v5992 = vld [vmem:[#allocation2 + $0x10] sm:$0xf]
  %v5993 = vld [vmem:[#allocation2 + $0x14] sm:$0xf]
  %v5994 = vld [vmem:[#allocation2 + $0x18] sm:$0xf]
  %v5995 = vld [vmem:[#allocation2 + $0x1c] sm:$0xf]
  %v5996 = vld [vmem:[#allocation2 + $0x20] sm:$0xf]
  %v5997 = vld [vmem:[#allocation2 + $0x24] sm:$0xf]
  %v5998 = vld [vmem:[#allocation2 + $0x28] sm:$0xf]
  %v5999 = vld [vmem:[#allocation2 + $0x2c] sm:$0xf]
  %v6000 = vld [vmem:[#allocation2 + $0x30] sm:$0xf]
  %v6001 = vld [vmem:[#allocation2 + $0x34] sm:$0xf]
  %v6002 = vld [vmem:[#allocation2 + $0x38] sm:$0xf]
  %v6003 = vld [vmem:[#allocation2 + $0x3c] sm:$0xf]
  %v6004 = vld [vmem:[#allocation2 + $0x40] sm:$0xf]
  %v6005 = vld [vmem:[#allocation2 + $0x44] sm:$0xf]
  %v6006 = vld [vmem:[#allocation2 + $0x48] sm:$0xf]
  %v6007 = vld [vmem:[#allocation2 + $0x4c] sm:$0xf]
  %v6008 = vld [vmem:[#allocation2 + $0x50] sm:$0xf]
  %v6009 = vld [vmem:[#allocation2 + $0x54] sm:$0xf]
  %v6010 = vld [vmem:[#allocation2 + $0x58] sm:$0xf]
  %v6011 = vld [vmem:[#allocation2 + $0x5c] sm:$0xf]
  %v6012 = vld [vmem:[#allocation2 + $0x60] sm:$0xf]
  %v6013 = vld [vmem:[#allocation2 + $0x64] sm:$0xf]
  %v6014 = vld [vmem:[#allocation2 + $0x68] sm:$0xf]
  %v6015 = vld [vmem:[#allocation2 + $0x6c] sm:$0xf]
  %v6016 = vld [vmem:[#allocation2 + $0x70] sm:$0xf]
  %v6017 = vld [vmem:[#allocation2 + $0x74] sm:$0xf]
  %v6018 = vld [vmem:[#allocation2 + $0x78] sm:$0xf]
  %v6019 = vld [vmem:[#allocation2 + $0x7c] sm:$0xf]
  %v6020 = vld [vmem:[#allocation2 + $0x80] sm:$0xf]
  %v6021 = vld [vmem:[#allocation2 + $0x84] sm:$0xf]
  %v6022 = vld [vmem:[#allocation2 + $0x88] sm:$0xf]
  %v6023 = vld [vmem:[#allocation2 + $0x8c] sm:$0xf]
  %v6024 = vld [vmem:[#allocation2 + $0x90] sm:$0xf]
  %v6025 = vld [vmem:[#allocation2 + $0x94] sm:$0xf]
  %v6026 = vld [vmem:[#allocation2 + $0x98] sm:$0xf]
  %v6027 = vld [vmem:[#allocation2 + $0x9c] sm:$0xf]
  %v6028 = vld [vmem:[#allocation2 + $0xa0] sm:$0xf]
  %v6029 = vld [vmem:[#allocation2 + $0xa4] sm:$0xf]
  %v6030 = vld [vmem:[#allocation2 + $0xa8] sm:$0xf]
  %v6031 = vld [vmem:[#allocation2 + $0xac] sm:$0xf]
  %v6032 = vld [vmem:[#allocation2 + $0xb0] sm:$0xf]
  %v6033 = vld [vmem:[#allocation2 + $0xb4] sm:$0xf]
  %v6034 = vld [vmem:[#allocation2 + $0xb8] sm:$0xf]
  %v6035 = vld [vmem:[#allocation2 + $0xbc] sm:$0xf]
  %v6036 = vld [vmem:[#allocation2 + $0xc0] sm:$0xf]
  %v6037 = vld [vmem:[#allocation2 + $0xc4] sm:$0xf]
  %v6038 = vld [vmem:[#allocation2 + $0xc8] sm:$0xf]
  %v6039 = vld [vmem:[#allocation2 + $0xcc] sm:$0xf]
  %v6040 = vld [vmem:[#allocation2 + $0xd0] sm:$0xf]
  %v6041 = vld [vmem:[#allocation2 + $0xd4] sm:$0xf]
  %v6042 = vld [vmem:[#allocation2 + $0xd8] sm:$0xf]
  %v6043 = vld [vmem:[#allocation2 + $0xdc] sm:$0xf]
  %v6044 = vld [vmem:[#allocation2 + $0xe0] sm:$0xf]
  %v6045 = vld [vmem:[#allocation2 + $0xe4] sm:$0xf]
  %v6046 = vld [vmem:[#allocation2 + $0xe8] sm:$0xf]
  %v6047 = vld [vmem:[#allocation2 + $0xec] sm:$0xf]
  %v6048 = vld [vmem:[#allocation2 + $0xf0] sm:$0xf]
  %v6049 = vld [vmem:[#allocation2 + $0xf4] sm:$0xf]
  %v6050 = vld [vmem:[#allocation2 + $0xf8] sm:$0xf]
  %v6051 = vld [vmem:[#allocation2 + $0xfc] sm:$0xf]
  %v6052 = vld [vmem:[%s1] sm:$0xf]
  %v6053 = vld [vmem:[%s1 + $0x4] sm:$0xf]
  %v6054 = vld [vmem:[%s1 + $0x8] sm:$0xf]
  %v6055 = vld [vmem:[%s1 + $0xc] sm:$0xf]
  %v6056 = vld [vmem:[%s1 + $0x10] sm:$0x3]
  %v6057 = vld [vmem:[%s2] sm:$0x1]
  %v6059 = vperm.slane %v6057, 0
  %v6125 = vunpack.c.l.b16 %v5988
  %v6126 = vunpack.c.l.b16 %v5989
  %v6127 = vunpack.c.l.b16 %v5990
  %v6128 = vunpack.c.l.b16 %v5991
  %v6129 = vunpack.c.l.b16 %v5992
  %v6130 = vunpack.c.l.b16 %v5993
  %v6131 = vunpack.c.l.b16 %v5994
  %v6132 = vunpack.c.l.b16 %v5995
  %v6133 = vunpack.c.l.b16 %v5996
  %v6134 = vunpack.c.l.b16 %v5997
  %v6135 = vunpack.c.l.b16 %v5998
  %v6136 = vunpack.c.l.b16 %v5999
  %v6137 = vunpack.c.l.b16 %v6000
  %v6138 = vunpack.c.l.b16 %v6001
  %v6139 = vunpack.c.l.b16 %v6002
  %v6140 = vunpack.c.l.b16 %v6003
  %v6141 = vunpack.c.l.b16 %v6004
  %v6142 = vunpack.c.l.b16 %v6005
  %v6143 = vunpack.c.l.b16 %v6006
  %v6144 = vunpack.c.l.b16 %v6007
  %v6145 = vunpack.c.l.b16 %v6008
  %v6146 = vunpack.c.l.b16 %v6009
  %v6147 = vunpack.c.l.b16 %v6010
  %v6148 = vunpack.c.l.b16 %v6011
  %v6149 = vunpack.c.l.b16 %v6012
  %v6150 = vunpack.c.l.b16 %v6013
  %v6151 = vunpack.c.l.b16 %v6014
  %v6152 = vunpack.c.l.b16 %v6015
  %v6153 = vunpack.c.l.b16 %v6016
  %v6154 = vunpack.c.l.b16 %v6017
  %v6155 = vunpack.c.l.b16 %v6018
  %v6156 = vunpack.c.l.b16 %v6019
  %v6157 = vunpack.c.l.b16 %v6020
  %v6158 = vunpack.c.l.b16 %v6021
  %v6159 = vunpack.c.l.b16 %v6022
  %v6160 = vunpack.c.l.b16 %v6023
  %v6161 = vunpack.c.l.b16 %v6024
  %v6162 = vunpack.c.l.b16 %v6025
  %v6163 = vunpack.c.l.b16 %v6026
  %v6164 = vunpack.c.l.b16 %v6027
  %v6165 = vunpack.c.l.b16 %v6028
  %v6166 = vunpack.c.l.b16 %v6029
  %v6167 = vunpack.c.l.b16 %v6030
  %v6168 = vunpack.c.l.b16 %v6031
  %v6169 = vunpack.c.l.b16 %v6032
  %v6170 = vunpack.c.l.b16 %v6033
  %v6171 = vunpack.c.l.b16 %v6034
  %v6172 = vunpack.c.l.b16 %v6035
  %v6173 = vunpack.c.l.b16 %v6036
  %v6174 = vunpack.c.l.b16 %v6037
  %v6175 = vunpack.c.l.b16 %v6038
  %v6176 = vunpack.c.l.b16 %v6039
  %v6177 = vunpack.c.l.b16 %v6040
  %v6178 = vunpack.c.l.b16 %v6041
  %v6179 = vunpack.c.l.b16 %v6042
  %v6180 = vunpack.c.l.b16 %v6043
  %v6181 = vunpack.c.l.b16 %v6044
  %v6182 = vunpack.c.l.b16 %v6045
  %v6183 = vunpack.c.l.b16 %v6046
  %v6184 = vunpack.c.l.b16 %v6047
  %v6185 = vunpack.c.l.b16 %v6048
  %v6186 = vunpack.c.l.b16 %v6049
  %v6187 = vunpack.c.l.b16 %v6050
  %v6188 = vunpack.c.l.b16 %v6051
  %v6189 = vpack.c.b16 %v6126, %v6125
  %v6190 = vpack.c.b16 %v6128, %v6127
  %v6191 = vpack.c.b16 %v6130, %v6129
  %v6192 = vpack.c.b16 %v6132, %v6131
  %v6193 = vpack.c.b16 %v6134, %v6133
  %v6194 = vpack.c.b16 %v6136, %v6135
  %v6195 = vpack.c.b16 %v6138, %v6137
  %v6196 = vpack.c.b16 %v6140, %v6139
  %v6197 = vpack.c.b16 %v6142, %v6141
  %v6198 = vpack.c.b16 %v6144, %v6143
  %v6199 = vpack.c.b16 %v6146, %v6145
  %v6200 = vpack.c.b16 %v6148, %v6147
  %v6201 = vpack.c.b16 %v6150, %v6149
  %v6202 = vpack.c.b16 %v6152, %v6151
  %v6203 = vpack.c.b16 %v6154, %v6153
  %v6204 = vpack.c.b16 %v6156, %v6155
  %v6205 = vpack.c.b16 %v6158, %v6157
  %v6206 = vpack.c.b16 %v6160, %v6159
  %v6207 = vpack.c.b16 %v6162, %v6161
  %v6208 = vpack.c.b16 %v6164, %v6163
  %v6209 = vpack.c.b16 %v6166, %v6165
  %v6210 = vpack.c.b16 %v6168, %v6167
  %v6211 = vpack.c.b16 %v6170, %v6169
  %v6212 = vpack.c.b16 %v6172, %v6171
  %v6213 = vpack.c.b16 %v6174, %v6173
  %v6214 = vpack.c.b16 %v6176, %v6175
  %v6215 = vpack.c.b16 %v6178, %v6177
  %v6216 = vpack.c.b16 %v6180, %v6179
  %v6217 = vpack.c.b16 %v6182, %v6181
  %v6218 = vpack.c.b16 %v6184, %v6183
  %v6219 = vpack.c.b16 %v6186, %v6185
  %v6220 = vpack.c.b16 %v6188, %v6187
  %v6226 = vunpack.c.l.b16 %v6052
  %v6227 = vunpack.c.l.b16 %v6053
  %v6228 = vunpack.c.l.b16 %v6054
  %v6229 = vunpack.c.l.b16 %v6055
  %v6230 = vunpack.c.l.b16 %v6056
  %v6231 = vpack.c.b16 %v6227, %v6226
  %v6232 = vpack.c.b16 %v6229, %v6228
  %v6233 = vpack.c.b16 %v6230, %v6230
  %vm6236 = vcmask 293888
  %v6238 = vsel %vm6236, %v6189, 0
  %v6241 = vsel %vm6236, %v6190, 0
  %v6244 = vsel %vm6236, %v6191, 0
  %v6247 = vsel %vm6236, %v6192, 0
  %v6250 = vsel %vm6236, %v6193, 0
  %v6253 = vsel %vm6236, %v6194, 0
  %v6256 = vsel %vm6236, %v6195, 0
  %v6259 = vsel %vm6236, %v6196, 0
  %v6262 = vsel %vm6236, %v6197, 0
  %v6265 = vsel %vm6236, %v6198, 0
  %v6268 = vsel %vm6236, %v6199, 0
  %v6271 = vsel %vm6236, %v6200, 0
  %v6274 = vsel %vm6236, %v6201, 0
  %v6277 = vsel %vm6236, %v6202, 0
  %v6280 = vsel %vm6236, %v6203, 0
  %v6283 = vsel %vm6236, %v6204, 0
  %v6286 = vsel %vm6236, %v6205, 0
  %v6289 = vsel %vm6236, %v6206, 0
  %v6292 = vsel %vm6236, %v6207, 0
  %v6295 = vsel %vm6236, %v6208, 0
  %v6298 = vsel %vm6236, %v6209, 0
  %v6301 = vsel %vm6236, %v6210, 0
  %v6304 = vsel %vm6236, %v6211, 0
  %v6307 = vsel %vm6236, %v6212, 0
  %v6310 = vsel %vm6236, %v6213, 0
  %v6313 = vsel %vm6236, %v6214, 0
  %v6316 = vsel %vm6236, %v6215, 0
  %v6319 = vsel %vm6236, %v6216, 0
  %v6322 = vsel %vm6236, %v6217, 0
  %v6325 = vsel %vm6236, %v6218, 0
  %v6328 = vsel %vm6236, %v6219, 0
  %v6331 = vsel %vm6236, %v6220, 0
  %vm6333 = vcmask 1041408
  %v6335 = vsel %vm6333, %v6233, 0
  %6337 = vmatpush.bf16.msra.mxu0 0
  %6338 = vmatpush.bf16.msra.mxu0 0
  %6339 = vmatpush.bf16.msra.mxu0 0
  %6340 = vmatpush.bf16.msra.mxu0 0
  %6341 = vmatpush.bf16.msra.mxu0 0
  %6342 = vmatpush.bf16.msra.mxu0 %v6335
  %6343 = vmatpush.bf16.msra.mxu0 %v6232
  %6344 = vmatpush.bf16.msra.mxu0 %v6231
  %6345 = vmatmul.bf16.gmra.mxu0 %v6238
  %v6346 = vpop.f32.mrf.mxu0
  %v6347 = vadd.f32 %v6059, %v6346
  %v6348 = vpop.f32.mrf.mxu0
  %v6349 = vadd.f32 %v6059, %v6348
  %6350 = vmatmul.bf16.gmra.mxu0 %v6241
  %v6351 = vpop.f32.mrf.mxu0
  %v6352 = vadd.f32 %v6059, %v6351
  %v6353 = vpop.f32.mrf.mxu0
  %v6354 = vadd.f32 %v6059, %v6353
  %6355 = vmatmul.bf16.gmra.mxu0 %v6244
  %v6356 = vpop.f32.mrf.mxu0
  %v6357 = vadd.f32 %v6059, %v6356
  %v6358 = vpop.f32.mrf.mxu0
  %v6359 = vadd.f32 %v6059, %v6358
  %6360 = vmatmul.bf16.gmra.mxu0 %v6247
  %v6361 = vpop.f32.mrf.mxu0
  %v6362 = vadd.f32 %v6059, %v6361
  %v6363 = vpop.f32.mrf.mxu0
  %v6364 = vadd.f32 %v6059, %v6363
  %6365 = vmatmul.bf16.gmra.mxu0 %v6250
  %v6366 = vpop.f32.mrf.mxu0
  %v6367 = vadd.f32 %v6059, %v6366
  %v6368 = vpop.f32.mrf.mxu0
  %v6369 = vadd.f32 %v6059, %v6368
  %6370 = vmatmul.bf16.gmra.mxu0 %v6253
  %v6371 = vpop.f32.mrf.mxu0
  %v6372 = vadd.f32 %v6059, %v6371
  %v6373 = vpop.f32.mrf.mxu0
  %v6374 = vadd.f32 %v6059, %v6373
  %6375 = vmatmul.bf16.gmra.mxu0 %v6256
  %v6376 = vpop.f32.mrf.mxu0
  %v6377 = vadd.f32 %v6059, %v6376
  %v6378 = vpop.f32.mrf.mxu0
  %v6379 = vadd.f32 %v6059, %v6378
  %6380 = vmatmul.bf16.gmra.mxu0 %v6259
  %v6381 = vpop.f32.mrf.mxu0
  %v6382 = vadd.f32 %v6059, %v6381
  %v6383 = vpop.f32.mrf.mxu0
  %v6384 = vadd.f32 %v6059, %v6383
  %6385 = vmatmul.bf16.gmra.mxu0 %v6262
  %v6386 = vpop.f32.mrf.mxu0
  %v6387 = vadd.f32 %v6059, %v6386
  %v6388 = vpop.f32.mrf.mxu0
  %v6389 = vadd.f32 %v6059, %v6388
  %6390 = vmatmul.bf16.gmra.mxu0 %v6265
  %v6391 = vpop.f32.mrf.mxu0
  %v6392 = vadd.f32 %v6059, %v6391
  %v6393 = vpop.f32.mrf.mxu0
  %v6394 = vadd.f32 %v6059, %v6393
  %6395 = vmatmul.bf16.gmra.mxu0 %v6268
  %v6396 = vpop.f32.mrf.mxu0
  %v6397 = vadd.f32 %v6059, %v6396
  %v6398 = vpop.f32.mrf.mxu0
  %v6399 = vadd.f32 %v6059, %v6398
  %6400 = vmatmul.bf16.gmra.mxu0 %v6271
  %v6401 = vpop.f32.mrf.mxu0
  %v6402 = vadd.f32 %v6059, %v6401
  %v6403 = vpop.f32.mrf.mxu0
  %v6404 = vadd.f32 %v6059, %v6403
  %6405 = vmatmul.bf16.gmra.mxu0 %v6274
  %v6406 = vpop.f32.mrf.mxu0
  %v6407 = vadd.f32 %v6059, %v6406
  %v6408 = vpop.f32.mrf.mxu0
  %v6409 = vadd.f32 %v6059, %v6408
  %6410 = vmatmul.bf16.gmra.mxu0 %v6277
  %v6411 = vpop.f32.mrf.mxu0
  %v6412 = vadd.f32 %v6059, %v6411
  %v6413 = vpop.f32.mrf.mxu0
  %v6414 = vadd.f32 %v6059, %v6413
  %6415 = vmatmul.bf16.gmra.mxu0 %v6280
  %v6416 = vpop.f32.mrf.mxu0
  %v6417 = vadd.f32 %v6059, %v6416
  %v6418 = vpop.f32.mrf.mxu0
  %v6419 = vadd.f32 %v6059, %v6418
  %6420 = vmatmul.bf16.gmra.mxu0 %v6283
  %v6421 = vpop.f32.mrf.mxu0
  %v6422 = vadd.f32 %v6059, %v6421
  %v6423 = vpop.f32.mrf.mxu0
  %v6424 = vadd.f32 %v6059, %v6423
  %6425 = vmatmul.bf16.gmra.mxu0 %v6286
  %v6426 = vpop.f32.mrf.mxu0
  %v6427 = vadd.f32 %v6059, %v6426
  %v6428 = vpop.f32.mrf.mxu0
  %v6429 = vadd.f32 %v6059, %v6428
  %6430 = vmatmul.bf16.gmra.mxu0 %v6289
  %v6431 = vpop.f32.mrf.mxu0
  %v6432 = vadd.f32 %v6059, %v6431
  %v6433 = vpop.f32.mrf.mxu0
  %v6434 = vadd.f32 %v6059, %v6433
  %6435 = vmatmul.bf16.gmra.mxu0 %v6292
  %v6436 = vpop.f32.mrf.mxu0
  %v6437 = vadd.f32 %v6059, %v6436
  %v6438 = vpop.f32.mrf.mxu0
  %v6439 = vadd.f32 %v6059, %v6438
  %6440 = vmatmul.bf16.gmra.mxu0 %v6295
  %v6441 = vpop.f32.mrf.mxu0
  %v6442 = vadd.f32 %v6059, %v6441
  %v6443 = vpop.f32.mrf.mxu0
  %v6444 = vadd.f32 %v6059, %v6443
  %6445 = vmatmul.bf16.gmra.mxu0 %v6298
  %v6446 = vpop.f32.mrf.mxu0
  %v6447 = vadd.f32 %v6059, %v6446
  %v6448 = vpop.f32.mrf.mxu0
  %v6449 = vadd.f32 %v6059, %v6448
  %6450 = vmatmul.bf16.gmra.mxu0 %v6301
  %v6451 = vpop.f32.mrf.mxu0
  %v6452 = vadd.f32 %v6059, %v6451
  %v6453 = vpop.f32.mrf.mxu0
  %v6454 = vadd.f32 %v6059, %v6453
  %6455 = vmatmul.bf16.gmra.mxu0 %v6304
  %v6456 = vpop.f32.mrf.mxu0
  %v6457 = vadd.f32 %v6059, %v6456
  %v6458 = vpop.f32.mrf.mxu0
  %v6459 = vadd.f32 %v6059, %v6458
  %6460 = vmatmul.bf16.gmra.mxu0 %v6307
  %v6461 = vpop.f32.mrf.mxu0
  %v6462 = vadd.f32 %v6059, %v6461
  %v6463 = vpop.f32.mrf.mxu0
  %v6464 = vadd.f32 %v6059, %v6463
  %6465 = vmatmul.bf16.gmra.mxu0 %v6310
  %v6466 = vpop.f32.mrf.mxu0
  %v6467 = vadd.f32 %v6059, %v6466
  %v6468 = vpop.f32.mrf.mxu0
  %v6469 = vadd.f32 %v6059, %v6468
  %6470 = vmatmul.bf16.gmra.mxu0 %v6313
  %v6471 = vpop.f32.mrf.mxu0
  %v6472 = vadd.f32 %v6059, %v6471
  %v6473 = vpop.f32.mrf.mxu0
  %v6474 = vadd.f32 %v6059, %v6473
  %6475 = vmatmul.bf16.gmra.mxu0 %v6316
  %v6476 = vpop.f32.mrf.mxu0
  %v6477 = vadd.f32 %v6059, %v6476
  %v6478 = vpop.f32.mrf.mxu0
  %v6479 = vadd.f32 %v6059, %v6478
  %6480 = vmatmul.bf16.gmra.mxu0 %v6319
  %v6481 = vpop.f32.mrf.mxu0
  %v6482 = vadd.f32 %v6059, %v6481
  %v6483 = vpop.f32.mrf.mxu0
  %v6484 = vadd.f32 %v6059, %v6483
  %6485 = vmatmul.bf16.gmra.mxu0 %v6322
  %v6486 = vpop.f32.mrf.mxu0
  %v6487 = vadd.f32 %v6059, %v6486
  %v6488 = vpop.f32.mrf.mxu0
  %v6489 = vadd.f32 %v6059, %v6488
  %6490 = vmatmul.bf16.gmra.mxu0 %v6325
  %v6491 = vpop.f32.mrf.mxu0
  %v6492 = vadd.f32 %v6059, %v6491
  %v6493 = vpop.f32.mrf.mxu0
  %v6494 = vadd.f32 %v6059, %v6493
  %6495 = vmatmul.bf16.gmra.mxu0 %v6328
  %v6496 = vpop.f32.mrf.mxu0
  %v6497 = vadd.f32 %v6059, %v6496
  %v6498 = vpop.f32.mrf.mxu0
  %v6499 = vadd.f32 %v6059, %v6498
  %6500 = vmatmul.bf16.gmra.mxu0 %v6331
  %v6501 = vpop.f32.mrf.mxu0
  %v6502 = vadd.f32 %v6059, %v6501
  %v6503 = vpop.f32.mrf.mxu0
  %v6504 = vadd.f32 %v6059, %v6503
  %6505 = vdwg.mxu0
  %6506 = vst [vmem:[%s3] sm:$0xff] %v6347
  %6507 = vst [vmem:[%s3 + $0x8] sm:$0xff] %v6349
  %6508 = vst [vmem:[%s3 + $0x10] sm:$0xff] %v6352
  %6509 = vst [vmem:[%s3 + $0x18] sm:$0xff] %v6354
  %6510 = vst [vmem:[%s3 + $0x20] sm:$0xff] %v6357
  %6511 = vst [vmem:[%s3 + $0x28] sm:$0xff] %v6359
  %6512 = vst [vmem:[%s3 + $0x30] sm:$0xff] %v6362
  %6513 = vst [vmem:[%s3 + $0x38] sm:$0xff] %v6364
  %6514 = vst [vmem:[%s3 + $0x40] sm:$0xff] %v6367
  %6515 = vst [vmem:[%s3 + $0x48] sm:$0xff] %v6369
  %6516 = vst [vmem:[%s3 + $0x50] sm:$0xff] %v6372
  %6517 = vst [vmem:[%s3 + $0x58] sm:$0xff] %v6374
  %6518 = vst [vmem:[%s3 + $0x60] sm:$0xff] %v6377
  %6519 = vst [vmem:[%s3 + $0x68] sm:$0xff] %v6379
  %6520 = vst [vmem:[%s3 + $0x70] sm:$0xff] %v6382
  %6521 = vst [vmem:[%s3 + $0x78] sm:$0xff] %v6384
  %6522 = vst [vmem:[%s3 + $0x80] sm:$0xff] %v6387
  %6523 = vst [vmem:[%s3 + $0x88] sm:$0xff] %v6389
  %6524 = vst [vmem:[%s3 + $0x90] sm:$0xff] %v6392
  %6525 = vst [vmem:[%s3 + $0x98] sm:$0xff] %v6394
  %6526 = vst [vmem:[%s3 + $0xa0] sm:$0xff] %v6397
  %6527 = vst [vmem:[%s3 + $0xa8] sm:$0xff] %v6399
  %6528 = vst [vmem:[%s3 + $0xb0] sm:$0xff] %v6402
  %6529 = vst [vmem:[%s3 + $0xb8] sm:$0xff] %v6404
  %6530 = vst [vmem:[%s3 + $0xc0] sm:$0xff] %v6407
  %6531 = vst [vmem:[%s3 + $0xc8] sm:$0xff] %v6409
  %6532 = vst [vmem:[%s3 + $0xd0] sm:$0xff] %v6412
  %6533 = vst [vmem:[%s3 + $0xd8] sm:$0xff] %v6414
  %6534 = vst [vmem:[%s3 + $0xe0] sm:$0xff] %v6417
  %6535 = vst [vmem:[%s3 + $0xe8] sm:$0xff] %v6419
  %6536 = vst [vmem:[%s3 + $0xf0] sm:$0xff] %v6422
  %6537 = vst [vmem:[%s3 + $0xf8] sm:$0xff] %v6424
  %6538 = vst [vmem:[%s3 + $0x100] sm:$0xff] %v6427
  %6539 = vst [vmem:[%s3 + $0x108] sm:$0xff] %v6429
  %6540 = vst [vmem:[%s3 + $0x110] sm:$0xff] %v6432
  %6541 = vst [vmem:[%s3 + $0x118] sm:$0xff] %v6434
  %6542 = vst [vmem:[%s3 + $0x120] sm:$0xff] %v6437
  %6543 = vst [vmem:[%s3 + $0x128] sm:$0xff] %v6439
  %6544 = vst [vmem:[%s3 + $0x130] sm:$0xff] %v6442
  %6545 = vst [vmem:[%s3 + $0x138] sm:$0xff] %v6444
  %6546 = vst [vmem:[%s3 + $0x140] sm:$0xff] %v6447
  %6547 = vst [vmem:[%s3 + $0x148] sm:$0xff] %v6449
  %6548 = vst [vmem:[%s3 + $0x150] sm:$0xff] %v6452
  %6549 = vst [vmem:[%s3 + $0x158] sm:$0xff] %v6454
  %6550 = vst [vmem:[%s3 + $0x160] sm:$0xff] %v6457
  %6551 = vst [vmem:[%s3 + $0x168] sm:$0xff] %v6459
  %6552 = vst [vmem:[%s3 + $0x170] sm:$0xff] %v6462
  %6553 = vst [vmem:[%s3 + $0x178] sm:$0xff] %v6464
  %6554 = vst [vmem:[%s3 + $0x180] sm:$0xff] %v6467
  %6555 = vst [vmem:[%s3 + $0x188] sm:$0xff] %v6469
  %6556 = vst [vmem:[%s3 + $0x190] sm:$0xff] %v6472
  %6557 = vst [vmem:[%s3 + $0x198] sm:$0xff] %v6474
  %6558 = vst [vmem:[%s3 + $0x1a0] sm:$0xff] %v6477
  %6559 = vst [vmem:[%s3 + $0x1a8] sm:$0xff] %v6479
  %6560 = vst [vmem:[%s3 + $0x1b0] sm:$0xff] %v6482
  %6561 = vst [vmem:[%s3 + $0x1b8] sm:$0xff] %v6484
  %6562 = vst [vmem:[%s3 + $0x1c0] sm:$0xff] %v6487
  %6563 = vst [vmem:[%s3 + $0x1c8] sm:$0xff] %v6489
  %6564 = vst [vmem:[%s3 + $0x1d0] sm:$0xff] %v6492
  %6565 = vst [vmem:[%s3 + $0x1d8] sm:$0xff] %v6494
  %6566 = vst [vmem:[%s3 + $0x1e0] sm:$0xff] %v6497
  %6567 = vst [vmem:[%s3 + $0x1e8] sm:$0xff] %v6499
  %6568 = vst [vmem:[%s3 + $0x1f0] sm:$0xff] %v6502
  %6569 = vst [vmem:[%s3 + $0x1f8] sm:$0xff] %v6504
  // Predicated region
  $region18: #{ntk_conv2d_forward.1} parent=0 // pred_check
    _
  $region19: #{ntk_conv2d_forward.1} parent=0 // pred_check_branch
    %6571 = sbr.rel (0) target = $region21
  $region20: #{ntk_conv2d_forward.1} parent=0 // pred_region
    _
  $region21: #{ntk_conv2d_forward.1} parent=0 // pred_fallthru
    _
  // Predicated region
  $region22: #{ntk_conv2d_forward.1} parent=0 // pred_check
    _
  $region23: #{ntk_conv2d_forward.1} parent=0 // pred_check_branch
    %6573 = sbr.rel (0) target = $region25
  $region24: #{ntk_conv2d_forward.1} parent=0 // pred_region
    _
  $region25: #{ntk_conv2d_forward.1} parent=0 // pred_fallthru
    _

</llo_original>
